<compile_context>
chip_gen: v6e
topology: v6e:2x2x1
jax: 0.10.0
libtpu: 0.0.40
codegen_flags: <defaults>
</compile_context>

<pallas_src>
import functools

import jax
import jax.numpy as jnp
from jax import lax
from jax.experimental import pallas as pl
from jax.experimental.pallas import tpu as pltpu

K = 7      # conv kernel size
PAD = 3    # conv spatial padding ("same")


def _round_up(v, m):
    return (v + m - 1) // m * m


def _chip_config():
    """Returns (num_tensorcores, per-step x-block byte budget, scoped-VMEM cap)."""
    kind = ""
    try:
        kind = jax.devices()[0].device_kind.lower()
    except Exception:
        pass
    if "v5 lite" in kind or "v5lite" in kind or "v5e" in kind:
        # 1 TC, 16 MiB default scoped VMEM, lowest HBM BW -> small steps.
        return 1, 2 << 20, 24 << 20
    if "v6" in kind:
        # 1 TC, 128 MiB VMEM: fat steps to sit near the ~1.4 TB/s roofline.
        return 1, 8 << 20, 48 << 20
    if "v7" in kind:
        # 2 TCs, 64 MiB VMEM per TC: modest tiles, keep both cores fed.
        return 2, 8 << 20, 40 << 20
    # Unknown chip / interpret mode: conservative defaults.
    return 1, 4 << 20, 32 << 20


def _pick_batch_tile(B, per_batch_bytes, budget, num_cores):
    """Fold batch elements into one grid step (fat DMA steps, amortizes the
    ~0.35us/step overhead).  Only insist on >= num_cores grid steps when the
    chip actually has more than one TensorCore (v7x)."""
    best = 1
    for cand in range(1, B + 1):
        if B % cand:
            continue
        if cand * per_batch_bytes > budget:
            continue
        if num_cores > 1 and B >= num_cores and (B // cand) < num_cores:
            continue
        best = cand
    return best


def spatial_attention_kernel(w_ref, b_ref, x_ref, o_ref, pad_ref, *,
                             W, C_CHUNK, BT_PAD):
    # w_ref:   SMEM (2*K*K,) f32 conv weight, flattened [in_c, kh, kw]
    # b_ref:   SMEM (1,)     f32 conv bias
    # x_ref:   VMEM (BT, C, H*W) input block (BT folded batch elements)
    # o_ref:   VMEM (BT, C, H*W) output block
    # pad_ref: VMEM (2*BT_PAD, LPAD + H*W + RPAD) f32 scratch
    #          rows [0, BT_PAD)        : padded flat max-pool maps
    #          rows [BT_PAD, 2*BT_PAD) : padded flat avg-pool maps
    BT, C, HW = x_ref.shape
    RPAD = PAD * W + PAD            # max |flat tap offset| of the 7x7 window
    LPAD = _round_up(RPAD, 128)     # lane-aligned interior start

    # Zero only the pad stripes (the interior is fully rewritten every step).
    # Done every step rather than @pl.when(pid==0) so that on megacore chips
    # each core's private scratch is initialized; it is two tiny stores.
    pad_ref[pl.ds(0, 2 * BT_PAD), pl.ds(0, LPAD)] = (
        jnp.zeros((2 * BT_PAD, LPAD), jnp.float32))
    pad_ref[pl.ds(0, 2 * BT_PAD), pl.ds(LPAD + HW, RPAD)] = (
        jnp.zeros((2 * BT_PAD, RPAD), jnp.float32))

    inv_c = jnp.float32(1.0 / C)
    n_full = C // C_CHUNK
    rem = C - n_full * C_CHUNK

    # ---- channel max/mean pooling, sublane-chunked (C_CHUNK, HW) slabs ----
    for bi in range(BT):            # static unroll over folded batch elements
        if n_full > 0:
            acc_max = x_ref[bi, pl.ds(0, C_CHUNK), :].astype(jnp.float32)
            acc_sum = acc_max
            for j in range(1, n_full):
                xc = x_ref[bi, pl.ds(j * C_CHUNK, C_CHUNK), :].astype(jnp.float32)
                acc_max = jnp.maximum(acc_max, xc)
                acc_sum = acc_sum + xc
            max_p = jnp.max(acc_max, axis=0, keepdims=True)   # one xlane reduce
            sum_p = jnp.sum(acc_sum, axis=0, keepdims=True)
            if rem:
                xr = x_ref[bi, pl.ds(n_full * C_CHUNK, rem), :].astype(jnp.float32)
                max_p = jnp.maximum(max_p, jnp.max(xr, axis=0, keepdims=True))
                sum_p = sum_p + jnp.sum(xr, axis=0, keepdims=True)
        else:
            xr = x_ref[bi, pl.ds(0, rem), :].astype(jnp.float32)
            max_p = jnp.max(xr, axis=0, keepdims=True)
            sum_p = jnp.sum(xr, axis=0, keepdims=True)

        # Write the two pooled rows into the zero-padded scratch interior.
        pad_ref[pl.ds(bi, 1), pl.ds(LPAD, HW)] = max_p
        pad_ref[pl.ds(BT_PAD + bi, 1), pl.ds(LPAD, HW)] = sum_p * inv_c

    # ---- 7x7 "same" conv (2 in-ch -> 1 out-ch), batched over all BT rows --
    # Tap (kh, kw) of channel ci reads the padded flat rows shifted by
    # d = (kh-3)*W + (kw-3).  Taps that cross a spatial-row boundary are
    # zeroed by the per-kw mask (hoisted out of the kh loop: the mask depends
    # only on kw and the column); taps above/below the image land in the zero
    # pad stripes of the scratch.
    wpos = lax.broadcasted_iota(jnp.int32, (BT_PAD, HW), 1) % W
    w_masks = [(wpos + (kw - PAD) >= 0) & (wpos + (kw - PAD) < W)
               for kw in range(K)]

    acc_ci = []
    for ci in range(2):
        row0 = ci * BT_PAD
        acc = None
        for kw in range(K):
            acc_kw = None                       # independent short dep chain
            for kh in range(K):
                d = (kh - PAD) * W + (kw - PAD)
                shifted = pad_ref[pl.ds(row0, BT_PAD), pl.ds(LPAD + d, HW)]
                wv = w_ref[ci * K * K + kh * K + kw]        # SMEM scalar
                term = wv * shifted
                acc_kw = term if acc_kw is None else acc_kw + term
            masked = jnp.where(w_masks[kw], acc_kw, 0.0)    # 1 select per (ci,kw)
            acc = masked if acc is None else acc + masked
        acc_ci.append(acc)

    # (BT_PAD, HW) f32; rows >= BT are dead sublanes, never read below.
    s_att = jax.nn.sigmoid(acc_ci[0] + acc_ci[1] + b_ref[0])

    # ---- rescale: o[c] = x[c] * s_att, sublane-chunked, f32 multiply ------
    bc_h = min(C_CHUNK, C)
    for bi in range(BT):
        # One broadcast per batch element, hoisted out of the channel loop
        # (broadcast_in_dim is not CSE'd).
        s_b = jnp.broadcast_to(s_att[bi:bi + 1, :], (bc_h, HW))
        c0 = 0
        while c0 < C:
            cs = min(C_CHUNK, C - c0)
            xc = x_ref[bi, pl.ds(c0, cs), :].astype(jnp.float32)
            o_ref[bi, pl.ds(c0, cs), :] = (xc * s_b[:cs, :]).astype(o_ref.dtype)
            c0 += cs


def spatial_attention(x, w, b):
    """x: (B, C, H, W); w: (1, 2, 7, 7) conv weight; b: (1,) conv bias."""
    B, C, H, W = x.shape
    HW = H * W

    # Contiguous merge of the spatial dims: no copy, and the big in-kernel
    # reads/writes become lane-dense when H*W is a multiple of 128 (16x16
    # here).  For non-multiple-of-128 maps the block still covers the full HW
    # dim (correct), just with masked lane accesses.
    x_flat = x.reshape(B, C, HW)
    w_flat = jnp.asarray(w, jnp.float32).reshape(-1)     # (2*K*K,)
    b_flat = jnp.asarray(b, jnp.float32).reshape(-1)     # (1,)

    num_cores, step_budget, vmem_cap = _chip_config()
    per_batch_bytes = C * HW * x.dtype.itemsize
    bt = _pick_batch_tile(B, per_batch_bytes, step_budget, num_cores)
    bt_pad = _round_up(bt, 8)

    rpad = PAD * W + PAD
    lpad = _round_up(rpad, 128)
    ltot = lpad + HW + rpad

    # Scoped-VMEM sizing: (in + out) blocks, double-buffered, plus scratch.
    block_bytes = bt * C * HW * x.dtype.itemsize
    scratch_bytes = 2 * bt_pad * _round_up(ltot, 128) * 4
    needed = 4 * block_bytes + scratch_bytes + (1 << 20)
    if needed > vmem_cap:
        # TODO(synk): add a channel-tiled path (grid over C with a pooled-map
        # accumulator in scratch + a second rescale pass) for very large
        # C*H*W slabs instead of failing here.
        raise ValueError(
            f"per-step VMEM footprint ({needed} B) exceeds budget ({vmem_cap} B)")
    vmem_limit = int(min(vmem_cap, max(needed, 32 << 20)))

    sub_pack = max(1, 4 // x.dtype.itemsize)   # sublane packing factor
    c_chunk = 8 * sub_pack                     # 8 for f32, 16 for bf16

    kernel = functools.partial(spatial_attention_kernel, W=W,
                               C_CHUNK=c_chunk, BT_PAD=bt_pad)

    out_flat = pl.pallas_call(
        kernel,
        out_shape=jax.ShapeDtypeStruct((B, C, HW), x.dtype),
        grid=(B // bt,),
        in_specs=[
            pl.BlockSpec(memory_space=pltpu.MemorySpace.SMEM),   # conv weight
            pl.BlockSpec(memory_space=pltpu.MemorySpace.SMEM),   # conv bias
            pl.BlockSpec((bt, C, HW), lambda i: (i, 0, 0)),      # x (unpadded)
        ],
        out_specs=pl.BlockSpec((bt, C, HW), lambda i: (i, 0, 0)),
        scratch_shapes=[pltpu.VMEM((2 * bt_pad, ltot), jnp.float32)],
        compiler_params=pltpu.CompilerParams(
            dimension_semantics=("parallel",),
            vmem_limit_bytes=vmem_limit),
    )(w_flat, b_flat, x_flat)
    return out_flat.reshape(B, C, H, W)


def reference_forward(x, w, b):
    """Pure-JAX reference matching the PyTorch module."""
    max_pool = jnp.max(x, axis=1, keepdims=True)
    avg_pool = jnp.mean(x, axis=1, keepdims=True)
    cat = jnp.concatenate([max_pool, avg_pool], axis=1)
    conv = jax.lax.conv_general_dilated(
        cat, w, window_strides=(1, 1), padding=[(PAD, PAD), (PAD, PAD)],
        dimension_numbers=("NCHW", "OIHW", "NCHW"))
    s_att = jax.nn.sigmoid(conv + b.reshape(1, -1, 1, 1))
    return x * s_att


if __name__ == "__main__":
    key = jax.random.PRNGKey(0)
    kx, kw, kb = jax.random.split(key, 3)

    B, C, H, W = 2, 4, 16, 16
    x = jax.random.normal(kx, (B, C, H, W), dtype=jnp.float32)

    # deterministic synthetic conv parameters: Conv2d(2, 1, 7, padding=3)
    fan_in = 2 * K * K
    bound = 1.0 / (fan_in ** 0.5)
    conv_w = jax.random.uniform(kw, (1, 2, K, K), jnp.float32, -bound, bound)
    conv_b = jax.random.uniform(kb, (1,), jnp.float32, -bound, bound)

    out = jax.block_until_ready(spatial_attention(x, conv_w, conv_b))

    ref = reference_forward(x, conv_w, conv_b)
    assert out.shape == (B, C, H, W)
    assert jnp.allclose(out, ref, atol=1e-5, rtol=1e-5), "mismatch vs reference"

    print("KERNEL_OK")
</pallas_src>

<mosaic_0001>
module attributes {stable_mosaic.version = 11 : i64} {
  func.func @spatial_attention_kernel(%arg0: i32, %arg1: memref<98xf32, #tpu.memory_space<smem>>, %arg2: memref<1xf32, #tpu.memory_space<smem>>, %arg3: memref<2x4x256xf32, #tpu.memory_space<vmem>>, %arg4: memref<2x4x256xf32, #tpu.memory_space<vmem>>, %arg5: memref<16x435xf32, #tpu.memory_space<vmem>>) attributes {dimension_semantics = [#tpu.dimension_semantics<parallel>], iteration_bounds = array<i64: 1>, scalar_prefetch = 0 : i64, scratch_operands = 1 : i64, tpu.core_type = #tpu.core_type<tc>, window_params = [{transform_indices = @transform_0, window_bounds = array<i64: 98>}, {transform_indices = @transform_1, window_bounds = array<i64: 1>}, {transform_indices = @transform_2, window_bounds = array<i64: 2, 4, 256>}, {transform_indices = @transform_3, window_bounds = array<i64: 2, 4, 256>}]} {
    %cst = arith.constant 0.000000e+00 : f32
    %0 = vector.broadcast %cst : f32 to vector<16x128xf32>
    %c0 = arith.constant 0 : index
    %c0_0 = arith.constant 0 : index
    %1 = vector.load %arg5[%c0, %c0_0] : memref<16x435xf32, #tpu.memory_space<vmem>>, vector<16x128xf32>
    tpu.vector_store %arg5[%c0, %c0_0], %0 {strides = array<i32>} : memref<16x435xf32, #tpu.memory_space<vmem>>, vector<16x128xf32>,
    %cst_1 = arith.constant 0.000000e+00 : f32
    %2 = vector.broadcast %cst_1 : f32 to vector<16x51xf32>
    %c0_2 = arith.constant 0 : index
    %c384 = arith.constant 384 : index
    %3 = vector.load %arg5[%c0_2, %c384] : memref<16x435xf32, #tpu.memory_space<vmem>>, vector<16x51xf32>
    tpu.vector_store %arg5[%c0_2, %c384], %2 {strides = array<i32>} : memref<16x435xf32, #tpu.memory_space<vmem>>, vector<16x51xf32>,
    %c0_3 = arith.constant 0 : index
    %c0_4 = arith.constant 0 : index
    %c0_5 = arith.constant 0 : index
    %4 = vector.load %arg3[%c0_3, %c0_4, %c0_5] : memref<2x4x256xf32, #tpu.memory_space<vmem>>, vector<1x4x256xf32>
    %5 = vector.shape_cast %4 : vector<1x4x256xf32> to vector<4x256xf32>
    %cst_6 = arith.constant dense<0xFF800000> : vector<256xf32>
    %6 = vector.multi_reduction <maximumf>, %5, %cst_6 [0] : vector<4x256xf32> to vector<256xf32>
    %7 = vector.shape_cast %6 : vector<256xf32> to vector<1x256xf32>
    %cst_7 = arith.constant dense<0.000000e+00> : vector<256xf32>
    %8 = vector.multi_reduction <add>, %5, %cst_7 [0] : vector<4x256xf32> to vector<256xf32>
    %9 = vector.shape_cast %8 : vector<256xf32> to vector<1x256xf32>
    %c0_8 = arith.constant 0 : index
    %c128 = arith.constant 128 : index
    %10 = vector.load %arg5[%c0_8, %c128] : memref<16x435xf32, #tpu.memory_space<vmem>>, vector<1x256xf32>
    tpu.vector_store %arg5[%c0_8, %c128], %7 {strides = array<i32>} : memref<16x435xf32, #tpu.memory_space<vmem>>, vector<1x256xf32>,
    %cst_9 = arith.constant 2.500000e-01 : f32
    %11 = vector.broadcast %cst_9 : f32 to vector<1x256xf32>
    %12 = arith.mulf %9, %11 : vector<1x256xf32>
    %c8 = arith.constant 8 : index
    %c128_10 = arith.constant 128 : index
    %13 = vector.load %arg5[%c8, %c128_10] : memref<16x435xf32, #tpu.memory_space<vmem>>, vector<1x256xf32>
    tpu.vector_store %arg5[%c8, %c128_10], %12 {strides = array<i32>} : memref<16x435xf32, #tpu.memory_space<vmem>>, vector<1x256xf32>,
    %c1 = arith.constant 1 : index
    %c0_11 = arith.constant 0 : index
    %c0_12 = arith.constant 0 : index
    %14 = vector.load %arg3[%c1, %c0_11, %c0_12] : memref<2x4x256xf32, #tpu.memory_space<vmem>>, vector<1x4x256xf32>
    %15 = vector.shape_cast %14 : vector<1x4x256xf32> to vector<4x256xf32>
    %cst_13 = arith.constant dense<0xFF800000> : vector<256xf32>
    %16 = vector.multi_reduction <maximumf>, %15, %cst_13 [0] : vector<4x256xf32> to vector<256xf32>
    %17 = vector.shape_cast %16 : vector<256xf32> to vector<1x256xf32>
    %cst_14 = arith.constant dense<0.000000e+00> : vector<256xf32>
    %18 = vector.multi_reduction <add>, %15, %cst_14 [0] : vector<4x256xf32> to vector<256xf32>
    %19 = vector.shape_cast %18 : vector<256xf32> to vector<1x256xf32>
    %c1_15 = arith.constant 1 : index
    %c128_16 = arith.constant 128 : index
    %20 = vector.load %arg5[%c1_15, %c128_16] : memref<16x435xf32, #tpu.memory_space<vmem>>, vector<1x256xf32>
    tpu.vector_store %arg5[%c1_15, %c128_16], %17 {strides = array<i32>} : memref<16x435xf32, #tpu.memory_space<vmem>>, vector<1x256xf32>,
    %cst_17 = arith.constant 2.500000e-01 : f32
    %21 = vector.broadcast %cst_17 : f32 to vector<1x256xf32>
    %22 = arith.mulf %19, %21 : vector<1x256xf32>
    %c9 = arith.constant 9 : index
    %c128_18 = arith.constant 128 : index
    %23 = vector.load %arg5[%c9, %c128_18] : memref<16x435xf32, #tpu.memory_space<vmem>>, vector<1x256xf32>
    tpu.vector_store %arg5[%c9, %c128_18], %22 {strides = array<i32>} : memref<16x435xf32, #tpu.memory_space<vmem>>, vector<1x256xf32>,
    %24 = tpu.iota {dimensions = array<i32: 1>} : vector<8x256xi32>
    %c16_i32 = arith.constant 16 : i32
    %c0_i32 = arith.constant 0 : i32
    %25 = arith.cmpi eq, %c16_i32, %c0_i32 : i32
    %c1_i32 = arith.constant 1 : i32
    %26 = arith.select %25, %c1_i32, %c16_i32 : i32
    %27 = vector.broadcast %26 : i32 to vector<8x256xi32>
    %28 = arith.remsi %24, %27 : vector<8x256xi32>
    %c0_i32_19 = arith.constant 0 : i32
    %29 = vector.broadcast %c0_i32_19 : i32 to vector<8x256xi32>
    %30 = arith.cmpi ne, %28, %29 : vector<8x256xi32>
    %c0_i32_20 = arith.constant 0 : i32
    %31 = vector.broadcast %c0_i32_20 : i32 to vector<8x256xi32>
    %32 = arith.cmpi slt, %28, %31 : vector<8x256xi32>
    %c0_i32_21 = arith.constant 0 : i32
    %33 = arith.cmpi slt, %26, %c0_i32_21 : i32
    %34 = vector.broadcast %33 : i1 to vector<8x256xi1>
    %35 = vector.broadcast %34 : vector<8x256xi1> to vector<8x256xi1>
    %36 = arith.xori %32, %35 : vector<8x256xi1>
    %37 = arith.andi %36, %30 : vector<8x256xi1>
    %38 = vector.broadcast %26 : i32 to vector<8x256xi32>
    %39 = arith.addi %28, %38 : vector<8x256xi32>
    %40 = arith.select %37, %39, %28 : vector<8x256xi1>, vector<8x256xi32>
    %c-3_i32 = arith.constant -3 : i32
    %41 = vector.broadcast %c-3_i32 : i32 to vector<8x256xi32>
    %42 = arith.addi %40, %41 : vector<8x256xi32>
    %c0_i32_22 = arith.constant 0 : i32
    %43 = vector.broadcast %c0_i32_22 : i32 to vector<8x256xi32>
    %44 = arith.cmpi sge, %42, %43 : vector<8x256xi32>
    %c-3_i32_23 = arith.constant -3 : i32
    %45 = vector.broadcast %c-3_i32_23 : i32 to vector<8x256xi32>
    %46 = arith.addi %40, %45 : vector<8x256xi32>
    %c16_i32_24 = arith.constant 16 : i32
    %47 = vector.broadcast %c16_i32_24 : i32 to vector<8x256xi32>
    %48 = arith.cmpi slt, %46, %47 : vector<8x256xi32>
    %49 = arith.andi %44, %48 : vector<8x256xi1>
    %c-2_i32 = arith.constant -2 : i32
    %50 = vector.broadcast %c-2_i32 : i32 to vector<8x256xi32>
    %51 = arith.addi %40, %50 : vector<8x256xi32>
    %c0_i32_25 = arith.constant 0 : i32
    %52 = vector.broadcast %c0_i32_25 : i32 to vector<8x256xi32>
    %53 = arith.cmpi sge, %51, %52 : vector<8x256xi32>
    %c-2_i32_26 = arith.constant -2 : i32
    %54 = vector.broadcast %c-2_i32_26 : i32 to vector<8x256xi32>
    %55 = arith.addi %40, %54 : vector<8x256xi32>
    %c16_i32_27 = arith.constant 16 : i32
    %56 = vector.broadcast %c16_i32_27 : i32 to vector<8x256xi32>
    %57 = arith.cmpi slt, %55, %56 : vector<8x256xi32>
    %58 = arith.andi %53, %57 : vector<8x256xi1>
    %c-1_i32 = arith.constant -1 : i32
    %59 = vector.broadcast %c-1_i32 : i32 to vector<8x256xi32>
    %60 = arith.addi %40, %59 : vector<8x256xi32>
    %c0_i32_28 = arith.constant 0 : i32
    %61 = vector.broadcast %c0_i32_28 : i32 to vector<8x256xi32>
    %62 = arith.cmpi sge, %60, %61 : vector<8x256xi32>
    %c-1_i32_29 = arith.constant -1 : i32
    %63 = vector.broadcast %c-1_i32_29 : i32 to vector<8x256xi32>
    %64 = arith.addi %40, %63 : vector<8x256xi32>
    %c16_i32_30 = arith.constant 16 : i32
    %65 = vector.broadcast %c16_i32_30 : i32 to vector<8x256xi32>
    %66 = arith.cmpi slt, %64, %65 : vector<8x256xi32>
    %67 = arith.andi %62, %66 : vector<8x256xi1>
    %c0_i32_31 = arith.constant 0 : i32
    %68 = vector.broadcast %c0_i32_31 : i32 to vector<8x256xi32>
    %69 = arith.addi %40, %68 : vector<8x256xi32>
    %c0_i32_32 = arith.constant 0 : i32
    %70 = vector.broadcast %c0_i32_32 : i32 to vector<8x256xi32>
    %71 = arith.cmpi sge, %69, %70 : vector<8x256xi32>
    %c0_i32_33 = arith.constant 0 : i32
    %72 = vector.broadcast %c0_i32_33 : i32 to vector<8x256xi32>
    %73 = arith.addi %40, %72 : vector<8x256xi32>
    %c16_i32_34 = arith.constant 16 : i32
    %74 = vector.broadcast %c16_i32_34 : i32 to vector<8x256xi32>
    %75 = arith.cmpi slt, %73, %74 : vector<8x256xi32>
    %76 = arith.andi %71, %75 : vector<8x256xi1>
    %c1_i32_35 = arith.constant 1 : i32
    %77 = vector.broadcast %c1_i32_35 : i32 to vector<8x256xi32>
    %78 = arith.addi %40, %77 : vector<8x256xi32>
    %c0_i32_36 = arith.constant 0 : i32
    %79 = vector.broadcast %c0_i32_36 : i32 to vector<8x256xi32>
    %80 = arith.cmpi sge, %78, %79 : vector<8x256xi32>
    %c1_i32_37 = arith.constant 1 : i32
    %81 = vector.broadcast %c1_i32_37 : i32 to vector<8x256xi32>
    %82 = arith.addi %40, %81 : vector<8x256xi32>
    %c16_i32_38 = arith.constant 16 : i32
    %83 = vector.broadcast %c16_i32_38 : i32 to vector<8x256xi32>
    %84 = arith.cmpi slt, %82, %83 : vector<8x256xi32>
    %85 = arith.andi %80, %84 : vector<8x256xi1>
    %c2_i32 = arith.constant 2 : i32
    %86 = vector.broadcast %c2_i32 : i32 to vector<8x256xi32>
    %87 = arith.addi %40, %86 : vector<8x256xi32>
    %c0_i32_39 = arith.constant 0 : i32
    %88 = vector.broadcast %c0_i32_39 : i32 to vector<8x256xi32>
    %89 = arith.cmpi sge, %87, %88 : vector<8x256xi32>
    %c2_i32_40 = arith.constant 2 : i32
    %90 = vector.broadcast %c2_i32_40 : i32 to vector<8x256xi32>
    %91 = arith.addi %40, %90 : vector<8x256xi32>
    %c16_i32_41 = arith.constant 16 : i32
    %92 = vector.broadcast %c16_i32_41 : i32 to vector<8x256xi32>
    %93 = arith.cmpi slt, %91, %92 : vector<8x256xi32>
    %94 = arith.andi %89, %93 : vector<8x256xi1>
    %c3_i32 = arith.constant 3 : i32
    %95 = vector.broadcast %c3_i32 : i32 to vector<8x256xi32>
    %96 = arith.addi %40, %95 : vector<8x256xi32>
    %c0_i32_42 = arith.constant 0 : i32
    %97 = vector.broadcast %c0_i32_42 : i32 to vector<8x256xi32>
    %98 = arith.cmpi sge, %96, %97 : vector<8x256xi32>
    %c3_i32_43 = arith.constant 3 : i32
    %99 = vector.broadcast %c3_i32_43 : i32 to vector<8x256xi32>
    %100 = arith.addi %40, %99 : vector<8x256xi32>
    %c16_i32_44 = arith.constant 16 : i32
    %101 = vector.broadcast %c16_i32_44 : i32 to vector<8x256xi32>
    %102 = arith.cmpi slt, %100, %101 : vector<8x256xi32>
    %103 = arith.andi %98, %102 : vector<8x256xi1>
    %c0_45 = arith.constant 0 : index
    %c77 = arith.constant 77 : index
    %104 = vector.load %arg5[%c0_45, %c77] : memref<16x435xf32, #tpu.memory_space<vmem>>, vector<8x256xf32>
    %c0_46 = arith.constant 0 : index
    %105 = memref.load %arg1[%c0_46] : memref<98xf32, #tpu.memory_space<smem>>
    %106 = vector.broadcast %105 : f32 to vector<8x256xf32>
    %107 = arith.mulf %106, %104 : vector<8x256xf32>
    %c0_47 = arith.constant 0 : index
    %c93 = arith.constant 93 : index
    %108 = vector.load %arg5[%c0_47, %c93] : memref<16x435xf32, #tpu.memory_space<vmem>>, vector<8x256xf32>
    %c7 = arith.constant 7 : index
    %109 = memref.load %arg1[%c7] : memref<98xf32, #tpu.memory_space<smem>>
    %110 = vector.broadcast %109 : f32 to vector<8x256xf32>
    %111 = arith.mulf %110, %108 : vector<8x256xf32>
    %112 = arith.addf %107, %111 : vector<8x256xf32>
    %c0_48 = arith.constant 0 : index
    %c109 = arith.constant 109 : index
    %113 = vector.load %arg5[%c0_48, %c109] : memref<16x435xf32, #tpu.memory_space<vmem>>, vector<8x256xf32>
    %c14 = arith.constant 14 : index
    %114 = memref.load %arg1[%c14] : memref<98xf32, #tpu.memory_space<smem>>
    %115 = vector.broadcast %114 : f32 to vector<8x256xf32>
    %116 = arith.mulf %115, %113 : vector<8x256xf32>
    %117 = arith.addf %112, %116 : vector<8x256xf32>
    %c0_49 = arith.constant 0 : index
    %c125 = arith.constant 125 : index
    %118 = vector.load %arg5[%c0_49, %c125] : memref<16x435xf32, #tpu.memory_space<vmem>>, vector<8x256xf32>
    %c21 = arith.constant 21 : index
    %119 = memref.load %arg1[%c21] : memref<98xf32, #tpu.memory_space<smem>>
    %120 = vector.broadcast %119 : f32 to vector<8x256xf32>
    %121 = arith.mulf %120, %118 : vector<8x256xf32>
    %122 = arith.addf %117, %121 : vector<8x256xf32>
    %c0_50 = arith.constant 0 : index
    %c141 = arith.constant 141 : index
    %123 = vector.load %arg5[%c0_50, %c141] : memref<16x435xf32, #tpu.memory_space<vmem>>, vector<8x256xf32>
    %c28 = arith.constant 28 : index
    %124 = memref.load %arg1[%c28] : memref<98xf32, #tpu.memory_space<smem>>
    %125 = vector.broadcast %124 : f32 to vector<8x256xf32>
    %126 = arith.mulf %125, %123 : vector<8x256xf32>
    %127 = arith.addf %122, %126 : vector<8x256xf32>
    %c0_51 = arith.constant 0 : index
    %c157 = arith.constant 157 : index
    %128 = vector.load %arg5[%c0_51, %c157] : memref<16x435xf32, #tpu.memory_space<vmem>>, vector<8x256xf32>
    %c35 = arith.constant 35 : index
    %129 = memref.load %arg1[%c35] : memref<98xf32, #tpu.memory_space<smem>>
    %130 = vector.broadcast %129 : f32 to vector<8x256xf32>
    %131 = arith.mulf %130, %128 : vector<8x256xf32>
    %132 = arith.addf %127, %131 : vector<8x256xf32>
    %c0_52 = arith.constant 0 : index
    %c173 = arith.constant 173 : index
    %133 = vector.load %arg5[%c0_52, %c173] : memref<16x435xf32, #tpu.memory_space<vmem>>, vector<8x256xf32>
    %c42 = arith.constant 42 : index
    %134 = memref.load %arg1[%c42] : memref<98xf32, #tpu.memory_space<smem>>
    %135 = vector.broadcast %134 : f32 to vector<8x256xf32>
    %136 = arith.mulf %135, %133 : vector<8x256xf32>
    %137 = arith.addf %132, %136 : vector<8x256xf32>
    %cst_53 = arith.constant 0.000000e+00 : f32
    %138 = vector.broadcast %cst_53 : f32 to vector<8x256xf32>
    %139 = arith.select %49, %137, %138 : vector<8x256xi1>, vector<8x256xf32>
    %c0_54 = arith.constant 0 : index
    %c78 = arith.constant 78 : index
    %140 = vector.load %arg5[%c0_54, %c78] : memref<16x435xf32, #tpu.memory_space<vmem>>, vector<8x256xf32>
    %c1_55 = arith.constant 1 : index
    %141 = memref.load %arg1[%c1_55] : memref<98xf32, #tpu.memory_space<smem>>
    %142 = vector.broadcast %141 : f32 to vector<8x256xf32>
    %143 = arith.mulf %142, %140 : vector<8x256xf32>
    %c0_56 = arith.constant 0 : index
    %c94 = arith.constant 94 : index
    %144 = vector.load %arg5[%c0_56, %c94] : memref<16x435xf32, #tpu.memory_space<vmem>>, vector<8x256xf32>
    %c8_57 = arith.constant 8 : index
    %145 = memref.load %arg1[%c8_57] : memref<98xf32, #tpu.memory_space<smem>>
    %146 = vector.broadcast %145 : f32 to vector<8x256xf32>
    %147 = arith.mulf %146, %144 : vector<8x256xf32>
    %148 = arith.addf %143, %147 : vector<8x256xf32>
    %c0_58 = arith.constant 0 : index
    %c110 = arith.constant 110 : index
    %149 = vector.load %arg5[%c0_58, %c110] : memref<16x435xf32, #tpu.memory_space<vmem>>, vector<8x256xf32>
    %c15 = arith.constant 15 : index
    %150 = memref.load %arg1[%c15] : memref<98xf32, #tpu.memory_space<smem>>
    %151 = vector.broadcast %150 : f32 to vector<8x256xf32>
    %152 = arith.mulf %151, %149 : vector<8x256xf32>
    %153 = arith.addf %148, %152 : vector<8x256xf32>
    %c0_59 = arith.constant 0 : index
    %c126 = arith.constant 126 : index
    %154 = vector.load %arg5[%c0_59, %c126] : memref<16x435xf32, #tpu.memory_space<vmem>>, vector<8x256xf32>
    %c22 = arith.constant 22 : index
    %155 = memref.load %arg1[%c22] : memref<98xf32, #tpu.memory_space<smem>>
    %156 = vector.broadcast %155 : f32 to vector<8x256xf32>
    %157 = arith.mulf %156, %154 : vector<8x256xf32>
    %158 = arith.addf %153, %157 : vector<8x256xf32>
    %c0_60 = arith.constant 0 : index
    %c142 = arith.constant 142 : index
    %159 = vector.load %arg5[%c0_60, %c142] : memref<16x435xf32, #tpu.memory_space<vmem>>, vector<8x256xf32>
    %c29 = arith.constant 29 : index
    %160 = memref.load %arg1[%c29] : memref<98xf32, #tpu.memory_space<smem>>
    %161 = vector.broadcast %160 : f32 to vector<8x256xf32>
    %162 = arith.mulf %161, %159 : vector<8x256xf32>
    %163 = arith.addf %158, %162 : vector<8x256xf32>
    %c0_61 = arith.constant 0 : index
    %c158 = arith.constant 158 : index
    %164 = vector.load %arg5[%c0_61, %c158] : memref<16x435xf32, #tpu.memory_space<vmem>>, vector<8x256xf32>
    %c36 = arith.constant 36 : index
    %165 = memref.load %arg1[%c36] : memref<98xf32, #tpu.memory_space<smem>>
    %166 = vector.broadcast %165 : f32 to vector<8x256xf32>
    %167 = arith.mulf %166, %164 : vector<8x256xf32>
    %168 = arith.addf %163, %167 : vector<8x256xf32>
    %c0_62 = arith.constant 0 : index
    %c174 = arith.constant 174 : index
    %169 = vector.load %arg5[%c0_62, %c174] : memref<16x435xf32, #tpu.memory_space<vmem>>, vector<8x256xf32>
    %c43 = arith.constant 43 : index
    %170 = memref.load %arg1[%c43] : memref<98xf32, #tpu.memory_space<smem>>
    %171 = vector.broadcast %170 : f32 to vector<8x256xf32>
    %172 = arith.mulf %171, %169 : vector<8x256xf32>
    %173 = arith.addf %168, %172 : vector<8x256xf32>
    %cst_63 = arith.constant 0.000000e+00 : f32
    %174 = vector.broadcast %cst_63 : f32 to vector<8x256xf32>
    %175 = arith.select %58, %173, %174 : vector<8x256xi1>, vector<8x256xf32>
    %176 = arith.addf %139, %175 : vector<8x256xf32>
    %c0_64 = arith.constant 0 : index
    %c79 = arith.constant 79 : index
    %177 = vector.load %arg5[%c0_64, %c79] : memref<16x435xf32, #tpu.memory_space<vmem>>, vector<8x256xf32>
    %c2 = arith.constant 2 : index
    %178 = memref.load %arg1[%c2] : memref<98xf32, #tpu.memory_space<smem>>
    %179 = vector.broadcast %178 : f32 to vector<8x256xf32>
    %180 = arith.mulf %179, %177 : vector<8x256xf32>
    %c0_65 = arith.constant 0 : index
    %c95 = arith.constant 95 : index
    %181 = vector.load %arg5[%c0_65, %c95] : memref<16x435xf32, #tpu.memory_space<vmem>>, vector<8x256xf32>
    %c9_66 = arith.constant 9 : index
    %182 = memref.load %arg1[%c9_66] : memref<98xf32, #tpu.memory_space<smem>>
    %183 = vector.broadcast %182 : f32 to vector<8x256xf32>
    %184 = arith.mulf %183, %181 : vector<8x256xf32>
    %185 = arith.addf %180, %184 : vector<8x256xf32>
    %c0_67 = arith.constant 0 : index
    %c111 = arith.constant 111 : index
    %186 = vector.load %arg5[%c0_67, %c111] : memref<16x435xf32, #tpu.memory_space<vmem>>, vector<8x256xf32>
    %c16 = arith.constant 16 : index
    %187 = memref.load %arg1[%c16] : memref<98xf32, #tpu.memory_space<smem>>
    %188 = vector.broadcast %187 : f32 to vector<8x256xf32>
    %189 = arith.mulf %188, %186 : vector<8x256xf32>
    %190 = arith.addf %185, %189 : vector<8x256xf32>
    %c0_68 = arith.constant 0 : index
    %c127 = arith.constant 127 : index
    %191 = vector.load %arg5[%c0_68, %c127] : memref<16x435xf32, #tpu.memory_space<vmem>>, vector<8x256xf32>
    %c23 = arith.constant 23 : index
    %192 = memref.load %arg1[%c23] : memref<98xf32, #tpu.memory_space<smem>>
    %193 = vector.broadcast %192 : f32 to vector<8x256xf32>
    %194 = arith.mulf %193, %191 : vector<8x256xf32>
    %195 = arith.addf %190, %194 : vector<8x256xf32>
    %c0_69 = arith.constant 0 : index
    %c143 = arith.constant 143 : index
    %196 = vector.load %arg5[%c0_69, %c143] : memref<16x435xf32, #tpu.memory_space<vmem>>, vector<8x256xf32>
    %c30 = arith.constant 30 : index
    %197 = memref.load %arg1[%c30] : memref<98xf32, #tpu.memory_space<smem>>
    %198 = vector.broadcast %197 : f32 to vector<8x256xf32>
    %199 = arith.mulf %198, %196 : vector<8x256xf32>
    %200 = arith.addf %195, %199 : vector<8x256xf32>
    %c0_70 = arith.constant 0 : index
    %c159 = arith.constant 159 : index
    %201 = vector.load %arg5[%c0_70, %c159] : memref<16x435xf32, #tpu.memory_space<vmem>>, vector<8x256xf32>
    %c37 = arith.constant 37 : index
    %202 = memref.load %arg1[%c37] : memref<98xf32, #tpu.memory_space<smem>>
    %203 = vector.broadcast %202 : f32 to vector<8x256xf32>
    %204 = arith.mulf %203, %201 : vector<8x256xf32>
    %205 = arith.addf %200, %204 : vector<8x256xf32>
    %c0_71 = arith.constant 0 : index
    %c175 = arith.constant 175 : index
    %206 = vector.load %arg5[%c0_71, %c175] : memref<16x435xf32, #tpu.memory_space<vmem>>, vector<8x256xf32>
    %c44 = arith.constant 44 : index
    %207 = memref.load %arg1[%c44] : memref<98xf32, #tpu.memory_space<smem>>
    %208 = vector.broadcast %207 : f32 to vector<8x256xf32>
    %209 = arith.mulf %208, %206 : vector<8x256xf32>
    %210 = arith.addf %205, %209 : vector<8x256xf32>
    %cst_72 = arith.constant 0.000000e+00 : f32
    %211 = vector.broadcast %cst_72 : f32 to vector<8x256xf32>
    %212 = arith.select %67, %210, %211 : vector<8x256xi1>, vector<8x256xf32>
    %213 = arith.addf %176, %212 : vector<8x256xf32>
    %c0_73 = arith.constant 0 : index
    %c80 = arith.constant 80 : index
    %214 = vector.load %arg5[%c0_73, %c80] : memref<16x435xf32, #tpu.memory_space<vmem>>, vector<8x256xf32>
    %c3 = arith.constant 3 : index
    %215 = memref.load %arg1[%c3] : memref<98xf32, #tpu.memory_space<smem>>
    %216 = vector.broadcast %215 : f32 to vector<8x256xf32>
    %217 = arith.mulf %216, %214 : vector<8x256xf32>
    %c0_74 = arith.constant 0 : index
    %c96 = arith.constant 96 : index
    %218 = vector.load %arg5[%c0_74, %c96] : memref<16x435xf32, #tpu.memory_space<vmem>>, vector<8x256xf32>
    %c10 = arith.constant 10 : index
    %219 = memref.load %arg1[%c10] : memref<98xf32, #tpu.memory_space<smem>>
    %220 = vector.broadcast %219 : f32 to vector<8x256xf32>
    %221 = arith.mulf %220, %218 : vector<8x256xf32>
    %222 = arith.addf %217, %221 : vector<8x256xf32>
    %c0_75 = arith.constant 0 : index
    %c112 = arith.constant 112 : index
    %223 = vector.load %arg5[%c0_75, %c112] : memref<16x435xf32, #tpu.memory_space<vmem>>, vector<8x256xf32>
    %c17 = arith.constant 17 : index
    %224 = memref.load %arg1[%c17] : memref<98xf32, #tpu.memory_space<smem>>
    %225 = vector.broadcast %224 : f32 to vector<8x256xf32>
    %226 = arith.mulf %225, %223 : vector<8x256xf32>
    %227 = arith.addf %222, %226 : vector<8x256xf32>
    %c0_76 = arith.constant 0 : index
    %c128_77 = arith.constant 128 : index
    %228 = vector.load %arg5[%c0_76, %c128_77] : memref<16x435xf32, #tpu.memory_space<vmem>>, vector<8x256xf32>
    %c24 = arith.constant 24 : index
    %229 = memref.load %arg1[%c24] : memref<98xf32, #tpu.memory_space<smem>>
    %230 = vector.broadcast %229 : f32 to vector<8x256xf32>
    %231 = arith.mulf %230, %228 : vector<8x256xf32>
    %232 = arith.addf %227, %231 : vector<8x256xf32>
    %c0_78 = arith.constant 0 : index
    %c144 = arith.constant 144 : index
    %233 = vector.load %arg5[%c0_78, %c144] : memref<16x435xf32, #tpu.memory_space<vmem>>, vector<8x256xf32>
    %c31 = arith.constant 31 : index
    %234 = memref.load %arg1[%c31] : memref<98xf32, #tpu.memory_space<smem>>
    %235 = vector.broadcast %234 : f32 to vector<8x256xf32>
    %236 = arith.mulf %235, %233 : vector<8x256xf32>
    %237 = arith.addf %232, %236 : vector<8x256xf32>
    %c0_79 = arith.constant 0 : index
    %c160 = arith.constant 160 : index
    %238 = vector.load %arg5[%c0_79, %c160] : memref<16x435xf32, #tpu.memory_space<vmem>>, vector<8x256xf32>
    %c38 = arith.constant 38 : index
    %239 = memref.load %arg1[%c38] : memref<98xf32, #tpu.memory_space<smem>>
    %240 = vector.broadcast %239 : f32 to vector<8x256xf32>
    %241 = arith.mulf %240, %238 : vector<8x256xf32>
    %242 = arith.addf %237, %241 : vector<8x256xf32>
    %c0_80 = arith.constant 0 : index
    %c176 = arith.constant 176 : index
    %243 = vector.load %arg5[%c0_80, %c176] : memref<16x435xf32, #tpu.memory_space<vmem>>, vector<8x256xf32>
    %c45 = arith.constant 45 : index
    %244 = memref.load %arg1[%c45] : memref<98xf32, #tpu.memory_space<smem>>
    %245 = vector.broadcast %244 : f32 to vector<8x256xf32>
    %246 = arith.mulf %245, %243 : vector<8x256xf32>
    %247 = arith.addf %242, %246 : vector<8x256xf32>
    %cst_81 = arith.constant 0.000000e+00 : f32
    %248 = vector.broadcast %cst_81 : f32 to vector<8x256xf32>
    %249 = arith.select %76, %247, %248 : vector<8x256xi1>, vector<8x256xf32>
    %250 = arith.addf %213, %249 : vector<8x256xf32>
    %c0_82 = arith.constant 0 : index
    %c81 = arith.constant 81 : index
    %251 = vector.load %arg5[%c0_82, %c81] : memref<16x435xf32, #tpu.memory_space<vmem>>, vector<8x256xf32>
    %c4 = arith.constant 4 : index
    %252 = memref.load %arg1[%c4] : memref<98xf32, #tpu.memory_space<smem>>
    %253 = vector.broadcast %252 : f32 to vector<8x256xf32>
    %254 = arith.mulf %253, %251 : vector<8x256xf32>
    %c0_83 = arith.constant 0 : index
    %c97 = arith.constant 97 : index
    %255 = vector.load %arg5[%c0_83, %c97] : memref<16x435xf32, #tpu.memory_space<vmem>>, vector<8x256xf32>
    %c11 = arith.constant 11 : index
    %256 = memref.load %arg1[%c11] : memref<98xf32, #tpu.memory_space<smem>>
    %257 = vector.broadcast %256 : f32 to vector<8x256xf32>
    %258 = arith.mulf %257, %255 : vector<8x256xf32>
    %259 = arith.addf %254, %258 : vector<8x256xf32>
    %c0_84 = arith.constant 0 : index
    %c113 = arith.constant 113 : index
    %260 = vector.load %arg5[%c0_84, %c113] : memref<16x435xf32, #tpu.memory_space<vmem>>, vector<8x256xf32>
    %c18 = arith.constant 18 : index
    %261 = memref.load %arg1[%c18] : memref<98xf32, #tpu.memory_space<smem>>
    %262 = vector.broadcast %261 : f32 to vector<8x256xf32>
    %263 = arith.mulf %262, %260 : vector<8x256xf32>
    %264 = arith.addf %259, %263 : vector<8x256xf32>
    %c0_85 = arith.constant 0 : index
    %c129 = arith.constant 129 : index
    %265 = vector.load %arg5[%c0_85, %c129] : memref<16x435xf32, #tpu.memory_space<vmem>>, vector<8x256xf32>
    %c25 = arith.constant 25 : index
    %266 = memref.load %arg1[%c25] : memref<98xf32, #tpu.memory_space<smem>>
    %267 = vector.broadcast %266 : f32 to vector<8x256xf32>
    %268 = arith.mulf %267, %265 : vector<8x256xf32>
    %269 = arith.addf %264, %268 : vector<8x256xf32>
    %c0_86 = arith.constant 0 : index
    %c145 = arith.constant 145 : index
    %270 = vector.load %arg5[%c0_86, %c145] : memref<16x435xf32, #tpu.memory_space<vmem>>, vector<8x256xf32>
    %c32 = arith.constant 32 : index
    %271 = memref.load %arg1[%c32] : memref<98xf32, #tpu.memory_space<smem>>
    %272 = vector.broadcast %271 : f32 to vector<8x256xf32>
    %273 = arith.mulf %272, %270 : vector<8x256xf32>
    %274 = arith.addf %269, %273 : vector<8x256xf32>
    %c0_87 = arith.constant 0 : index
    %c161 = arith.constant 161 : index
    %275 = vector.load %arg5[%c0_87, %c161] : memref<16x435xf32, #tpu.memory_space<vmem>>, vector<8x256xf32>
    %c39 = arith.constant 39 : index
    %276 = memref.load %arg1[%c39] : memref<98xf32, #tpu.memory_space<smem>>
    %277 = vector.broadcast %276 : f32 to vector<8x256xf32>
    %278 = arith.mulf %277, %275 : vector<8x256xf32>
    %279 = arith.addf %274, %278 : vector<8x256xf32>
    %c0_88 = arith.constant 0 : index
    %c177 = arith.constant 177 : index
    %280 = vector.load %arg5[%c0_88, %c177] : memref<16x435xf32, #tpu.memory_space<vmem>>, vector<8x256xf32>
    %c46 = arith.constant 46 : index
    %281 = memref.load %arg1[%c46] : memref<98xf32, #tpu.memory_space<smem>>
    %282 = vector.broadcast %281 : f32 to vector<8x256xf32>
    %283 = arith.mulf %282, %280 : vector<8x256xf32>
    %284 = arith.addf %279, %283 : vector<8x256xf32>
    %cst_89 = arith.constant 0.000000e+00 : f32
    %285 = vector.broadcast %cst_89 : f32 to vector<8x256xf32>
    %286 = arith.select %85, %284, %285 : vector<8x256xi1>, vector<8x256xf32>
    %287 = arith.addf %250, %286 : vector<8x256xf32>
    %c0_90 = arith.constant 0 : index
    %c82 = arith.constant 82 : index
    %288 = vector.load %arg5[%c0_90, %c82] : memref<16x435xf32, #tpu.memory_space<vmem>>, vector<8x256xf32>
    %c5 = arith.constant 5 : index
    %289 = memref.load %arg1[%c5] : memref<98xf32, #tpu.memory_space<smem>>
    %290 = vector.broadcast %289 : f32 to vector<8x256xf32>
    %291 = arith.mulf %290, %288 : vector<8x256xf32>
    %c0_91 = arith.constant 0 : index
    %c98 = arith.constant 98 : index
    %292 = vector.load %arg5[%c0_91, %c98] : memref<16x435xf32, #tpu.memory_space<vmem>>, vector<8x256xf32>
    %c12 = arith.constant 12 : index
    %293 = memref.load %arg1[%c12] : memref<98xf32, #tpu.memory_space<smem>>
    %294 = vector.broadcast %293 : f32 to vector<8x256xf32>
    %295 = arith.mulf %294, %292 : vector<8x256xf32>
    %296 = arith.addf %291, %295 : vector<8x256xf32>
    %c0_92 = arith.constant 0 : index
    %c114 = arith.constant 114 : index
    %297 = vector.load %arg5[%c0_92, %c114] : memref<16x435xf32, #tpu.memory_space<vmem>>, vector<8x256xf32>
    %c19 = arith.constant 19 : index
    %298 = memref.load %arg1[%c19] : memref<98xf32, #tpu.memory_space<smem>>
    %299 = vector.broadcast %298 : f32 to vector<8x256xf32>
    %300 = arith.mulf %299, %297 : vector<8x256xf32>
    %301 = arith.addf %296, %300 : vector<8x256xf32>
    %c0_93 = arith.constant 0 : index
    %c130 = arith.constant 130 : index
    %302 = vector.load %arg5[%c0_93, %c130] : memref<16x435xf32, #tpu.memory_space<vmem>>, vector<8x256xf32>
    %c26 = arith.constant 26 : index
    %303 = memref.load %arg1[%c26] : memref<98xf32, #tpu.memory_space<smem>>
    %304 = vector.broadcast %303 : f32 to vector<8x256xf32>
    %305 = arith.mulf %304, %302 : vector<8x256xf32>
    %306 = arith.addf %301, %305 : vector<8x256xf32>
    %c0_94 = arith.constant 0 : index
    %c146 = arith.constant 146 : index
    %307 = vector.load %arg5[%c0_94, %c146] : memref<16x435xf32, #tpu.memory_space<vmem>>, vector<8x256xf32>
    %c33 = arith.constant 33 : index
    %308 = memref.load %arg1[%c33] : memref<98xf32, #tpu.memory_space<smem>>
    %309 = vector.broadcast %308 : f32 to vector<8x256xf32>
    %310 = arith.mulf %309, %307 : vector<8x256xf32>
    %311 = arith.addf %306, %310 : vector<8x256xf32>
    %c0_95 = arith.constant 0 : index
    %c162 = arith.constant 162 : index
    %312 = vector.load %arg5[%c0_95, %c162] : memref<16x435xf32, #tpu.memory_space<vmem>>, vector<8x256xf32>
    %c40 = arith.constant 40 : index
    %313 = memref.load %arg1[%c40] : memref<98xf32, #tpu.memory_space<smem>>
    %314 = vector.broadcast %313 : f32 to vector<8x256xf32>
    %315 = arith.mulf %314, %312 : vector<8x256xf32>
    %316 = arith.addf %311, %315 : vector<8x256xf32>
    %c0_96 = arith.constant 0 : index
    %c178 = arith.constant 178 : index
    %317 = vector.load %arg5[%c0_96, %c178] : memref<16x435xf32, #tpu.memory_space<vmem>>, vector<8x256xf32>
    %c47 = arith.constant 47 : index
    %318 = memref.load %arg1[%c47] : memref<98xf32, #tpu.memory_space<smem>>
    %319 = vector.broadcast %318 : f32 to vector<8x256xf32>
    %320 = arith.mulf %319, %317 : vector<8x256xf32>
    %321 = arith.addf %316, %320 : vector<8x256xf32>
    %cst_97 = arith.constant 0.000000e+00 : f32
    %322 = vector.broadcast %cst_97 : f32 to vector<8x256xf32>
    %323 = arith.select %94, %321, %322 : vector<8x256xi1>, vector<8x256xf32>
    %324 = arith.addf %287, %323 : vector<8x256xf32>
    %c0_98 = arith.constant 0 : index
    %c83 = arith.constant 83 : index
    %325 = vector.load %arg5[%c0_98, %c83] : memref<16x435xf32, #tpu.memory_space<vmem>>, vector<8x256xf32>
    %c6 = arith.constant 6 : index
    %326 = memref.load %arg1[%c6] : memref<98xf32, #tpu.memory_space<smem>>
    %327 = vector.broadcast %326 : f32 to vector<8x256xf32>
    %328 = arith.mulf %327, %325 : vector<8x256xf32>
    %c0_99 = arith.constant 0 : index
    %c99 = arith.constant 99 : index
    %329 = vector.load %arg5[%c0_99, %c99] : memref<16x435xf32, #tpu.memory_space<vmem>>, vector<8x256xf32>
    %c13 = arith.constant 13 : index
    %330 = memref.load %arg1[%c13] : memref<98xf32, #tpu.memory_space<smem>>
    %331 = vector.broadcast %330 : f32 to vector<8x256xf32>
    %332 = arith.mulf %331, %329 : vector<8x256xf32>
    %333 = arith.addf %328, %332 : vector<8x256xf32>
    %c0_100 = arith.constant 0 : index
    %c115 = arith.constant 115 : index
    %334 = vector.load %arg5[%c0_100, %c115] : memref<16x435xf32, #tpu.memory_space<vmem>>, vector<8x256xf32>
    %c20 = arith.constant 20 : index
    %335 = memref.load %arg1[%c20] : memref<98xf32, #tpu.memory_space<smem>>
    %336 = vector.broadcast %335 : f32 to vector<8x256xf32>
    %337 = arith.mulf %336, %334 : vector<8x256xf32>
    %338 = arith.addf %333, %337 : vector<8x256xf32>
    %c0_101 = arith.constant 0 : index
    %c131 = arith.constant 131 : index
    %339 = vector.load %arg5[%c0_101, %c131] : memref<16x435xf32, #tpu.memory_space<vmem>>, vector<8x256xf32>
    %c27 = arith.constant 27 : index
    %340 = memref.load %arg1[%c27] : memref<98xf32, #tpu.memory_space<smem>>
    %341 = vector.broadcast %340 : f32 to vector<8x256xf32>
    %342 = arith.mulf %341, %339 : vector<8x256xf32>
    %343 = arith.addf %338, %342 : vector<8x256xf32>
    %c0_102 = arith.constant 0 : index
    %c147 = arith.constant 147 : index
    %344 = vector.load %arg5[%c0_102, %c147] : memref<16x435xf32, #tpu.memory_space<vmem>>, vector<8x256xf32>
    %c34 = arith.constant 34 : index
    %345 = memref.load %arg1[%c34] : memref<98xf32, #tpu.memory_space<smem>>
    %346 = vector.broadcast %345 : f32 to vector<8x256xf32>
    %347 = arith.mulf %346, %344 : vector<8x256xf32>
    %348 = arith.addf %343, %347 : vector<8x256xf32>
    %c0_103 = arith.constant 0 : index
    %c163 = arith.constant 163 : index
    %349 = vector.load %arg5[%c0_103, %c163] : memref<16x435xf32, #tpu.memory_space<vmem>>, vector<8x256xf32>
    %c41 = arith.constant 41 : index
    %350 = memref.load %arg1[%c41] : memref<98xf32, #tpu.memory_space<smem>>
    %351 = vector.broadcast %350 : f32 to vector<8x256xf32>
    %352 = arith.mulf %351, %349 : vector<8x256xf32>
    %353 = arith.addf %348, %352 : vector<8x256xf32>
    %c0_104 = arith.constant 0 : index
    %c179 = arith.constant 179 : index
    %354 = vector.load %arg5[%c0_104, %c179] : memref<16x435xf32, #tpu.memory_space<vmem>>, vector<8x256xf32>
    %c48 = arith.constant 48 : index
    %355 = memref.load %arg1[%c48] : memref<98xf32, #tpu.memory_space<smem>>
    %356 = vector.broadcast %355 : f32 to vector<8x256xf32>
    %357 = arith.mulf %356, %354 : vector<8x256xf32>
    %358 = arith.addf %353, %357 : vector<8x256xf32>
    %cst_105 = arith.constant 0.000000e+00 : f32
    %359 = vector.broadcast %cst_105 : f32 to vector<8x256xf32>
    %360 = arith.select %103, %358, %359 : vector<8x256xi1>, vector<8x256xf32>
    %361 = arith.addf %324, %360 : vector<8x256xf32>
    %c8_106 = arith.constant 8 : index
    %c77_107 = arith.constant 77 : index
    %362 = vector.load %arg5[%c8_106, %c77_107] : memref<16x435xf32, #tpu.memory_space<vmem>>, vector<8x256xf32>
    %c49 = arith.constant 49 : index
    %363 = memref.load %arg1[%c49] : memref<98xf32, #tpu.memory_space<smem>>
    %364 = vector.broadcast %363 : f32 to vector<8x256xf32>
    %365 = arith.mulf %364, %362 : vector<8x256xf32>
    %c8_108 = arith.constant 8 : index
    %c93_109 = arith.constant 93 : index
    %366 = vector.load %arg5[%c8_108, %c93_109] : memref<16x435xf32, #tpu.memory_space<vmem>>, vector<8x256xf32>
    %c56 = arith.constant 56 : index
    %367 = memref.load %arg1[%c56] : memref<98xf32, #tpu.memory_space<smem>>
    %368 = vector.broadcast %367 : f32 to vector<8x256xf32>
    %369 = arith.mulf %368, %366 : vector<8x256xf32>
    %370 = arith.addf %365, %369 : vector<8x256xf32>
    %c8_110 = arith.constant 8 : index
    %c109_111 = arith.constant 109 : index
    %371 = vector.load %arg5[%c8_110, %c109_111] : memref<16x435xf32, #tpu.memory_space<vmem>>, vector<8x256xf32>
    %c63 = arith.constant 63 : index
    %372 = memref.load %arg1[%c63] : memref<98xf32, #tpu.memory_space<smem>>
    %373 = vector.broadcast %372 : f32 to vector<8x256xf32>
    %374 = arith.mulf %373, %371 : vector<8x256xf32>
    %375 = arith.addf %370, %374 : vector<8x256xf32>
    %c8_112 = arith.constant 8 : index
    %c125_113 = arith.constant 125 : index
    %376 = vector.load %arg5[%c8_112, %c125_113] : memref<16x435xf32, #tpu.memory_space<vmem>>, vector<8x256xf32>
    %c70 = arith.constant 70 : index
    %377 = memref.load %arg1[%c70] : memref<98xf32, #tpu.memory_space<smem>>
    %378 = vector.broadcast %377 : f32 to vector<8x256xf32>
    %379 = arith.mulf %378, %376 : vector<8x256xf32>
    %380 = arith.addf %375, %379 : vector<8x256xf32>
    %c8_114 = arith.constant 8 : index
    %c141_115 = arith.constant 141 : index
    %381 = vector.load %arg5[%c8_114, %c141_115] : memref<16x435xf32, #tpu.memory_space<vmem>>, vector<8x256xf32>
    %c77_116 = arith.constant 77 : index
    %382 = memref.load %arg1[%c77_116] : memref<98xf32, #tpu.memory_space<smem>>
    %383 = vector.broadcast %382 : f32 to vector<8x256xf32>
    %384 = arith.mulf %383, %381 : vector<8x256xf32>
    %385 = arith.addf %380, %384 : vector<8x256xf32>
    %c8_117 = arith.constant 8 : index
    %c157_118 = arith.constant 157 : index
    %386 = vector.load %arg5[%c8_117, %c157_118] : memref<16x435xf32, #tpu.memory_space<vmem>>, vector<8x256xf32>
    %c84 = arith.constant 84 : index
    %387 = memref.load %arg1[%c84] : memref<98xf32, #tpu.memory_space<smem>>
    %388 = vector.broadcast %387 : f32 to vector<8x256xf32>
    %389 = arith.mulf %388, %386 : vector<8x256xf32>
    %390 = arith.addf %385, %389 : vector<8x256xf32>
    %c8_119 = arith.constant 8 : index
    %c173_120 = arith.constant 173 : index
    %391 = vector.load %arg5[%c8_119, %c173_120] : memref<16x435xf32, #tpu.memory_space<vmem>>, vector<8x256xf32>
    %c91 = arith.constant 91 : index
    %392 = memref.load %arg1[%c91] : memref<98xf32, #tpu.memory_space<smem>>
    %393 = vector.broadcast %392 : f32 to vector<8x256xf32>
    %394 = arith.mulf %393, %391 : vector<8x256xf32>
    %395 = arith.addf %390, %394 : vector<8x256xf32>
    %cst_121 = arith.constant 0.000000e+00 : f32
    %396 = vector.broadcast %cst_121 : f32 to vector<8x256xf32>
    %397 = arith.select %49, %395, %396 : vector<8x256xi1>, vector<8x256xf32>
    %c8_122 = arith.constant 8 : index
    %c78_123 = arith.constant 78 : index
    %398 = vector.load %arg5[%c8_122, %c78_123] : memref<16x435xf32, #tpu.memory_space<vmem>>, vector<8x256xf32>
    %c50 = arith.constant 50 : index
    %399 = memref.load %arg1[%c50] : memref<98xf32, #tpu.memory_space<smem>>
    %400 = vector.broadcast %399 : f32 to vector<8x256xf32>
    %401 = arith.mulf %400, %398 : vector<8x256xf32>
    %c8_124 = arith.constant 8 : index
    %c94_125 = arith.constant 94 : index
    %402 = vector.load %arg5[%c8_124, %c94_125] : memref<16x435xf32, #tpu.memory_space<vmem>>, vector<8x256xf32>
    %c57 = arith.constant 57 : index
    %403 = memref.load %arg1[%c57] : memref<98xf32, #tpu.memory_space<smem>>
    %404 = vector.broadcast %403 : f32 to vector<8x256xf32>
    %405 = arith.mulf %404, %402 : vector<8x256xf32>
    %406 = arith.addf %401, %405 : vector<8x256xf32>
    %c8_126 = arith.constant 8 : index
    %c110_127 = arith.constant 110 : index
    %407 = vector.load %arg5[%c8_126, %c110_127] : memref<16x435xf32, #tpu.memory_space<vmem>>, vector<8x256xf32>
    %c64 = arith.constant 64 : index
    %408 = memref.load %arg1[%c64] : memref<98xf32, #tpu.memory_space<smem>>
    %409 = vector.broadcast %408 : f32 to vector<8x256xf32>
    %410 = arith.mulf %409, %407 : vector<8x256xf32>
    %411 = arith.addf %406, %410 : vector<8x256xf32>
    %c8_128 = arith.constant 8 : index
    %c126_129 = arith.constant 126 : index
    %412 = vector.load %arg5[%c8_128, %c126_129] : memref<16x435xf32, #tpu.memory_space<vmem>>, vector<8x256xf32>
    %c71 = arith.constant 71 : index
    %413 = memref.load %arg1[%c71] : memref<98xf32, #tpu.memory_space<smem>>
    %414 = vector.broadcast %413 : f32 to vector<8x256xf32>
    %415 = arith.mulf %414, %412 : vector<8x256xf32>
    %416 = arith.addf %411, %415 : vector<8x256xf32>
    %c8_130 = arith.constant 8 : index
    %c142_131 = arith.constant 142 : index
    %417 = vector.load %arg5[%c8_130, %c142_131] : memref<16x435xf32, #tpu.memory_space<vmem>>, vector<8x256xf32>
    %c78_132 = arith.constant 78 : index
    %418 = memref.load %arg1[%c78_132] : memref<98xf32, #tpu.memory_space<smem>>
    %419 = vector.broadcast %418 : f32 to vector<8x256xf32>
    %420 = arith.mulf %419, %417 : vector<8x256xf32>
    %421 = arith.addf %416, %420 : vector<8x256xf32>
    %c8_133 = arith.constant 8 : index
    %c158_134 = arith.constant 158 : index
    %422 = vector.load %arg5[%c8_133, %c158_134] : memref<16x435xf32, #tpu.memory_space<vmem>>, vector<8x256xf32>
    %c85 = arith.constant 85 : index
    %423 = memref.load %arg1[%c85] : memref<98xf32, #tpu.memory_space<smem>>
    %424 = vector.broadcast %423 : f32 to vector<8x256xf32>
    %425 = arith.mulf %424, %422 : vector<8x256xf32>
    %426 = arith.addf %421, %425 : vector<8x256xf32>
    %c8_135 = arith.constant 8 : index
    %c174_136 = arith.constant 174 : index
    %427 = vector.load %arg5[%c8_135, %c174_136] : memref<16x435xf32, #tpu.memory_space<vmem>>, vector<8x256xf32>
    %c92 = arith.constant 92 : index
    %428 = memref.load %arg1[%c92] : memref<98xf32, #tpu.memory_space<smem>>
    %429 = vector.broadcast %428 : f32 to vector<8x256xf32>
    %430 = arith.mulf %429, %427 : vector<8x256xf32>
    %431 = arith.addf %426, %430 : vector<8x256xf32>
    %cst_137 = arith.constant 0.000000e+00 : f32
    %432 = vector.broadcast %cst_137 : f32 to vector<8x256xf32>
    %433 = arith.select %58, %431, %432 : vector<8x256xi1>, vector<8x256xf32>
    %434 = arith.addf %397, %433 : vector<8x256xf32>
    %c8_138 = arith.constant 8 : index
    %c79_139 = arith.constant 79 : index
    %435 = vector.load %arg5[%c8_138, %c79_139] : memref<16x435xf32, #tpu.memory_space<vmem>>, vector<8x256xf32>
    %c51 = arith.constant 51 : index
    %436 = memref.load %arg1[%c51] : memref<98xf32, #tpu.memory_space<smem>>
    %437 = vector.broadcast %436 : f32 to vector<8x256xf32>
    %438 = arith.mulf %437, %435 : vector<8x256xf32>
    %c8_140 = arith.constant 8 : index
    %c95_141 = arith.constant 95 : index
    %439 = vector.load %arg5[%c8_140, %c95_141] : memref<16x435xf32, #tpu.memory_space<vmem>>, vector<8x256xf32>
    %c58 = arith.constant 58 : index
    %440 = memref.load %arg1[%c58] : memref<98xf32, #tpu.memory_space<smem>>
    %441 = vector.broadcast %440 : f32 to vector<8x256xf32>
    %442 = arith.mulf %441, %439 : vector<8x256xf32>
    %443 = arith.addf %438, %442 : vector<8x256xf32>
    %c8_142 = arith.constant 8 : index
    %c111_143 = arith.constant 111 : index
    %444 = vector.load %arg5[%c8_142, %c111_143] : memref<16x435xf32, #tpu.memory_space<vmem>>, vector<8x256xf32>
    %c65 = arith.constant 65 : index
    %445 = memref.load %arg1[%c65] : memref<98xf32, #tpu.memory_space<smem>>
    %446 = vector.broadcast %445 : f32 to vector<8x256xf32>
    %447 = arith.mulf %446, %444 : vector<8x256xf32>
    %448 = arith.addf %443, %447 : vector<8x256xf32>
    %c8_144 = arith.constant 8 : index
    %c127_145 = arith.constant 127 : index
    %449 = vector.load %arg5[%c8_144, %c127_145] : memref<16x435xf32, #tpu.memory_space<vmem>>, vector<8x256xf32>
    %c72 = arith.constant 72 : index
    %450 = memref.load %arg1[%c72] : memref<98xf32, #tpu.memory_space<smem>>
    %451 = vector.broadcast %450 : f32 to vector<8x256xf32>
    %452 = arith.mulf %451, %449 : vector<8x256xf32>
    %453 = arith.addf %448, %452 : vector<8x256xf32>
    %c8_146 = arith.constant 8 : index
    %c143_147 = arith.constant 143 : index
    %454 = vector.load %arg5[%c8_146, %c143_147] : memref<16x435xf32, #tpu.memory_space<vmem>>, vector<8x256xf32>
    %c79_148 = arith.constant 79 : index
    %455 = memref.load %arg1[%c79_148] : memref<98xf32, #tpu.memory_space<smem>>
    %456 = vector.broadcast %455 : f32 to vector<8x256xf32>
    %457 = arith.mulf %456, %454 : vector<8x256xf32>
    %458 = arith.addf %453, %457 : vector<8x256xf32>
    %c8_149 = arith.constant 8 : index
    %c159_150 = arith.constant 159 : index
    %459 = vector.load %arg5[%c8_149, %c159_150] : memref<16x435xf32, #tpu.memory_space<vmem>>, vector<8x256xf32>
    %c86 = arith.constant 86 : index
    %460 = memref.load %arg1[%c86] : memref<98xf32, #tpu.memory_space<smem>>
    %461 = vector.broadcast %460 : f32 to vector<8x256xf32>
    %462 = arith.mulf %461, %459 : vector<8x256xf32>
    %463 = arith.addf %458, %462 : vector<8x256xf32>
    %c8_151 = arith.constant 8 : index
    %c175_152 = arith.constant 175 : index
    %464 = vector.load %arg5[%c8_151, %c175_152] : memref<16x435xf32, #tpu.memory_space<vmem>>, vector<8x256xf32>
    %c93_153 = arith.constant 93 : index
    %465 = memref.load %arg1[%c93_153] : memref<98xf32, #tpu.memory_space<smem>>
    %466 = vector.broadcast %465 : f32 to vector<8x256xf32>
    %467 = arith.mulf %466, %464 : vector<8x256xf32>
    %468 = arith.addf %463, %467 : vector<8x256xf32>
    %cst_154 = arith.constant 0.000000e+00 : f32
    %469 = vector.broadcast %cst_154 : f32 to vector<8x256xf32>
    %470 = arith.select %67, %468, %469 : vector<8x256xi1>, vector<8x256xf32>
    %471 = arith.addf %434, %470 : vector<8x256xf32>
    %c8_155 = arith.constant 8 : index
    %c80_156 = arith.constant 80 : index
    %472 = vector.load %arg5[%c8_155, %c80_156] : memref<16x435xf32, #tpu.memory_space<vmem>>, vector<8x256xf32>
    %c52 = arith.constant 52 : index
    %473 = memref.load %arg1[%c52] : memref<98xf32, #tpu.memory_space<smem>>
    %474 = vector.broadcast %473 : f32 to vector<8x256xf32>
    %475 = arith.mulf %474, %472 : vector<8x256xf32>
    %c8_157 = arith.constant 8 : index
    %c96_158 = arith.constant 96 : index
    %476 = vector.load %arg5[%c8_157, %c96_158] : memref<16x435xf32, #tpu.memory_space<vmem>>, vector<8x256xf32>
    %c59 = arith.constant 59 : index
    %477 = memref.load %arg1[%c59] : memref<98xf32, #tpu.memory_space<smem>>
    %478 = vector.broadcast %477 : f32 to vector<8x256xf32>
    %479 = arith.mulf %478, %476 : vector<8x256xf32>
    %480 = arith.addf %475, %479 : vector<8x256xf32>
    %c8_159 = arith.constant 8 : index
    %c112_160 = arith.constant 112 : index
    %481 = vector.load %arg5[%c8_159, %c112_160] : memref<16x435xf32, #tpu.memory_space<vmem>>, vector<8x256xf32>
    %c66 = arith.constant 66 : index
    %482 = memref.load %arg1[%c66] : memref<98xf32, #tpu.memory_space<smem>>
    %483 = vector.broadcast %482 : f32 to vector<8x256xf32>
    %484 = arith.mulf %483, %481 : vector<8x256xf32>
    %485 = arith.addf %480, %484 : vector<8x256xf32>
    %c8_161 = arith.constant 8 : index
    %c128_162 = arith.constant 128 : index
    %486 = vector.load %arg5[%c8_161, %c128_162] : memref<16x435xf32, #tpu.memory_space<vmem>>, vector<8x256xf32>
    %c73 = arith.constant 73 : index
    %487 = memref.load %arg1[%c73] : memref<98xf32, #tpu.memory_space<smem>>
    %488 = vector.broadcast %487 : f32 to vector<8x256xf32>
    %489 = arith.mulf %488, %486 : vector<8x256xf32>
    %490 = arith.addf %485, %489 : vector<8x256xf32>
    %c8_163 = arith.constant 8 : index
    %c144_164 = arith.constant 144 : index
    %491 = vector.load %arg5[%c8_163, %c144_164] : memref<16x435xf32, #tpu.memory_space<vmem>>, vector<8x256xf32>
    %c80_165 = arith.constant 80 : index
    %492 = memref.load %arg1[%c80_165] : memref<98xf32, #tpu.memory_space<smem>>
    %493 = vector.broadcast %492 : f32 to vector<8x256xf32>
    %494 = arith.mulf %493, %491 : vector<8x256xf32>
    %495 = arith.addf %490, %494 : vector<8x256xf32>
    %c8_166 = arith.constant 8 : index
    %c160_167 = arith.constant 160 : index
    %496 = vector.load %arg5[%c8_166, %c160_167] : memref<16x435xf32, #tpu.memory_space<vmem>>, vector<8x256xf32>
    %c87 = arith.constant 87 : index
    %497 = memref.load %arg1[%c87] : memref<98xf32, #tpu.memory_space<smem>>
    %498 = vector.broadcast %497 : f32 to vector<8x256xf32>
    %499 = arith.mulf %498, %496 : vector<8x256xf32>
    %500 = arith.addf %495, %499 : vector<8x256xf32>
    %c8_168 = arith.constant 8 : index
    %c176_169 = arith.constant 176 : index
    %501 = vector.load %arg5[%c8_168, %c176_169] : memref<16x435xf32, #tpu.memory_space<vmem>>, vector<8x256xf32>
    %c94_170 = arith.constant 94 : index
    %502 = memref.load %arg1[%c94_170] : memref<98xf32, #tpu.memory_space<smem>>
    %503 = vector.broadcast %502 : f32 to vector<8x256xf32>
    %504 = arith.mulf %503, %501 : vector<8x256xf32>
    %505 = arith.addf %500, %504 : vector<8x256xf32>
    %cst_171 = arith.constant 0.000000e+00 : f32
    %506 = vector.broadcast %cst_171 : f32 to vector<8x256xf32>
    %507 = arith.select %76, %505, %506 : vector<8x256xi1>, vector<8x256xf32>
    %508 = arith.addf %471, %507 : vector<8x256xf32>
    %c8_172 = arith.constant 8 : index
    %c81_173 = arith.constant 81 : index
    %509 = vector.load %arg5[%c8_172, %c81_173] : memref<16x435xf32, #tpu.memory_space<vmem>>, vector<8x256xf32>
    %c53 = arith.constant 53 : index
    %510 = memref.load %arg1[%c53] : memref<98xf32, #tpu.memory_space<smem>>
    %511 = vector.broadcast %510 : f32 to vector<8x256xf32>
    %512 = arith.mulf %511, %509 : vector<8x256xf32>
    %c8_174 = arith.constant 8 : index
    %c97_175 = arith.constant 97 : index
    %513 = vector.load %arg5[%c8_174, %c97_175] : memref<16x435xf32, #tpu.memory_space<vmem>>, vector<8x256xf32>
    %c60 = arith.constant 60 : index
    %514 = memref.load %arg1[%c60] : memref<98xf32, #tpu.memory_space<smem>>
    %515 = vector.broadcast %514 : f32 to vector<8x256xf32>
    %516 = arith.mulf %515, %513 : vector<8x256xf32>
    %517 = arith.addf %512, %516 : vector<8x256xf32>
    %c8_176 = arith.constant 8 : index
    %c113_177 = arith.constant 113 : index
    %518 = vector.load %arg5[%c8_176, %c113_177] : memref<16x435xf32, #tpu.memory_space<vmem>>, vector<8x256xf32>
    %c67 = arith.constant 67 : index
    %519 = memref.load %arg1[%c67] : memref<98xf32, #tpu.memory_space<smem>>
    %520 = vector.broadcast %519 : f32 to vector<8x256xf32>
    %521 = arith.mulf %520, %518 : vector<8x256xf32>
    %522 = arith.addf %517, %521 : vector<8x256xf32>
    %c8_178 = arith.constant 8 : index
    %c129_179 = arith.constant 129 : index
    %523 = vector.load %arg5[%c8_178, %c129_179] : memref<16x435xf32, #tpu.memory_space<vmem>>, vector<8x256xf32>
    %c74 = arith.constant 74 : index
    %524 = memref.load %arg1[%c74] : memref<98xf32, #tpu.memory_space<smem>>
    %525 = vector.broadcast %524 : f32 to vector<8x256xf32>
    %526 = arith.mulf %525, %523 : vector<8x256xf32>
    %527 = arith.addf %522, %526 : vector<8x256xf32>
    %c8_180 = arith.constant 8 : index
    %c145_181 = arith.constant 145 : index
    %528 = vector.load %arg5[%c8_180, %c145_181] : memref<16x435xf32, #tpu.memory_space<vmem>>, vector<8x256xf32>
    %c81_182 = arith.constant 81 : index
    %529 = memref.load %arg1[%c81_182] : memref<98xf32, #tpu.memory_space<smem>>
    %530 = vector.broadcast %529 : f32 to vector<8x256xf32>
    %531 = arith.mulf %530, %528 : vector<8x256xf32>
    %532 = arith.addf %527, %531 : vector<8x256xf32>
    %c8_183 = arith.constant 8 : index
    %c161_184 = arith.constant 161 : index
    %533 = vector.load %arg5[%c8_183, %c161_184] : memref<16x435xf32, #tpu.memory_space<vmem>>, vector<8x256xf32>
    %c88 = arith.constant 88 : index
    %534 = memref.load %arg1[%c88] : memref<98xf32, #tpu.memory_space<smem>>
    %535 = vector.broadcast %534 : f32 to vector<8x256xf32>
    %536 = arith.mulf %535, %533 : vector<8x256xf32>
    %537 = arith.addf %532, %536 : vector<8x256xf32>
    %c8_185 = arith.constant 8 : index
    %c177_186 = arith.constant 177 : index
    %538 = vector.load %arg5[%c8_185, %c177_186] : memref<16x435xf32, #tpu.memory_space<vmem>>, vector<8x256xf32>
    %c95_187 = arith.constant 95 : index
    %539 = memref.load %arg1[%c95_187] : memref<98xf32, #tpu.memory_space<smem>>
    %540 = vector.broadcast %539 : f32 to vector<8x256xf32>
    %541 = arith.mulf %540, %538 : vector<8x256xf32>
    %542 = arith.addf %537, %541 : vector<8x256xf32>
    %cst_188 = arith.constant 0.000000e+00 : f32
    %543 = vector.broadcast %cst_188 : f32 to vector<8x256xf32>
    %544 = arith.select %85, %542, %543 : vector<8x256xi1>, vector<8x256xf32>
    %545 = arith.addf %508, %544 : vector<8x256xf32>
    %c8_189 = arith.constant 8 : index
    %c82_190 = arith.constant 82 : index
    %546 = vector.load %arg5[%c8_189, %c82_190] : memref<16x435xf32, #tpu.memory_space<vmem>>, vector<8x256xf32>
    %c54 = arith.constant 54 : index
    %547 = memref.load %arg1[%c54] : memref<98xf32, #tpu.memory_space<smem>>
    %548 = vector.broadcast %547 : f32 to vector<8x256xf32>
    %549 = arith.mulf %548, %546 : vector<8x256xf32>
    %c8_191 = arith.constant 8 : index
    %c98_192 = arith.constant 98 : index
    %550 = vector.load %arg5[%c8_191, %c98_192] : memref<16x435xf32, #tpu.memory_space<vmem>>, vector<8x256xf32>
    %c61 = arith.constant 61 : index
    %551 = memref.load %arg1[%c61] : memref<98xf32, #tpu.memory_space<smem>>
    %552 = vector.broadcast %551 : f32 to vector<8x256xf32>
    %553 = arith.mulf %552, %550 : vector<8x256xf32>
    %554 = arith.addf %549, %553 : vector<8x256xf32>
    %c8_193 = arith.constant 8 : index
    %c114_194 = arith.constant 114 : index
    %555 = vector.load %arg5[%c8_193, %c114_194] : memref<16x435xf32, #tpu.memory_space<vmem>>, vector<8x256xf32>
    %c68 = arith.constant 68 : index
    %556 = memref.load %arg1[%c68] : memref<98xf32, #tpu.memory_space<smem>>
    %557 = vector.broadcast %556 : f32 to vector<8x256xf32>
    %558 = arith.mulf %557, %555 : vector<8x256xf32>
    %559 = arith.addf %554, %558 : vector<8x256xf32>
    %c8_195 = arith.constant 8 : index
    %c130_196 = arith.constant 130 : index
    %560 = vector.load %arg5[%c8_195, %c130_196] : memref<16x435xf32, #tpu.memory_space<vmem>>, vector<8x256xf32>
    %c75 = arith.constant 75 : index
    %561 = memref.load %arg1[%c75] : memref<98xf32, #tpu.memory_space<smem>>
    %562 = vector.broadcast %561 : f32 to vector<8x256xf32>
    %563 = arith.mulf %562, %560 : vector<8x256xf32>
    %564 = arith.addf %559, %563 : vector<8x256xf32>
    %c8_197 = arith.constant 8 : index
    %c146_198 = arith.constant 146 : index
    %565 = vector.load %arg5[%c8_197, %c146_198] : memref<16x435xf32, #tpu.memory_space<vmem>>, vector<8x256xf32>
    %c82_199 = arith.constant 82 : index
    %566 = memref.load %arg1[%c82_199] : memref<98xf32, #tpu.memory_space<smem>>
    %567 = vector.broadcast %566 : f32 to vector<8x256xf32>
    %568 = arith.mulf %567, %565 : vector<8x256xf32>
    %569 = arith.addf %564, %568 : vector<8x256xf32>
    %c8_200 = arith.constant 8 : index
    %c162_201 = arith.constant 162 : index
    %570 = vector.load %arg5[%c8_200, %c162_201] : memref<16x435xf32, #tpu.memory_space<vmem>>, vector<8x256xf32>
    %c89 = arith.constant 89 : index
    %571 = memref.load %arg1[%c89] : memref<98xf32, #tpu.memory_space<smem>>
    %572 = vector.broadcast %571 : f32 to vector<8x256xf32>
    %573 = arith.mulf %572, %570 : vector<8x256xf32>
    %574 = arith.addf %569, %573 : vector<8x256xf32>
    %c8_202 = arith.constant 8 : index
    %c178_203 = arith.constant 178 : index
    %575 = vector.load %arg5[%c8_202, %c178_203] : memref<16x435xf32, #tpu.memory_space<vmem>>, vector<8x256xf32>
    %c96_204 = arith.constant 96 : index
    %576 = memref.load %arg1[%c96_204] : memref<98xf32, #tpu.memory_space<smem>>
    %577 = vector.broadcast %576 : f32 to vector<8x256xf32>
    %578 = arith.mulf %577, %575 : vector<8x256xf32>
    %579 = arith.addf %574, %578 : vector<8x256xf32>
    %cst_205 = arith.constant 0.000000e+00 : f32
    %580 = vector.broadcast %cst_205 : f32 to vector<8x256xf32>
    %581 = arith.select %94, %579, %580 : vector<8x256xi1>, vector<8x256xf32>
    %582 = arith.addf %545, %581 : vector<8x256xf32>
    %c8_206 = arith.constant 8 : index
    %c83_207 = arith.constant 83 : index
    %583 = vector.load %arg5[%c8_206, %c83_207] : memref<16x435xf32, #tpu.memory_space<vmem>>, vector<8x256xf32>
    %c55 = arith.constant 55 : index
    %584 = memref.load %arg1[%c55] : memref<98xf32, #tpu.memory_space<smem>>
    %585 = vector.broadcast %584 : f32 to vector<8x256xf32>
    %586 = arith.mulf %585, %583 : vector<8x256xf32>
    %c8_208 = arith.constant 8 : index
    %c99_209 = arith.constant 99 : index
    %587 = vector.load %arg5[%c8_208, %c99_209] : memref<16x435xf32, #tpu.memory_space<vmem>>, vector<8x256xf32>
    %c62 = arith.constant 62 : index
    %588 = memref.load %arg1[%c62] : memref<98xf32, #tpu.memory_space<smem>>
    %589 = vector.broadcast %588 : f32 to vector<8x256xf32>
    %590 = arith.mulf %589, %587 : vector<8x256xf32>
    %591 = arith.addf %586, %590 : vector<8x256xf32>
    %c8_210 = arith.constant 8 : index
    %c115_211 = arith.constant 115 : index
    %592 = vector.load %arg5[%c8_210, %c115_211] : memref<16x435xf32, #tpu.memory_space<vmem>>, vector<8x256xf32>
    %c69 = arith.constant 69 : index
    %593 = memref.load %arg1[%c69] : memref<98xf32, #tpu.memory_space<smem>>
    %594 = vector.broadcast %593 : f32 to vector<8x256xf32>
    %595 = arith.mulf %594, %592 : vector<8x256xf32>
    %596 = arith.addf %591, %595 : vector<8x256xf32>
    %c8_212 = arith.constant 8 : index
    %c131_213 = arith.constant 131 : index
    %597 = vector.load %arg5[%c8_212, %c131_213] : memref<16x435xf32, #tpu.memory_space<vmem>>, vector<8x256xf32>
    %c76 = arith.constant 76 : index
    %598 = memref.load %arg1[%c76] : memref<98xf32, #tpu.memory_space<smem>>
    %599 = vector.broadcast %598 : f32 to vector<8x256xf32>
    %600 = arith.mulf %599, %597 : vector<8x256xf32>
    %601 = arith.addf %596, %600 : vector<8x256xf32>
    %c8_214 = arith.constant 8 : index
    %c147_215 = arith.constant 147 : index
    %602 = vector.load %arg5[%c8_214, %c147_215] : memref<16x435xf32, #tpu.memory_space<vmem>>, vector<8x256xf32>
    %c83_216 = arith.constant 83 : index
    %603 = memref.load %arg1[%c83_216] : memref<98xf32, #tpu.memory_space<smem>>
    %604 = vector.broadcast %603 : f32 to vector<8x256xf32>
    %605 = arith.mulf %604, %602 : vector<8x256xf32>
    %606 = arith.addf %601, %605 : vector<8x256xf32>
    %c8_217 = arith.constant 8 : index
    %c163_218 = arith.constant 163 : index
    %607 = vector.load %arg5[%c8_217, %c163_218] : memref<16x435xf32, #tpu.memory_space<vmem>>, vector<8x256xf32>
    %c90 = arith.constant 90 : index
    %608 = memref.load %arg1[%c90] : memref<98xf32, #tpu.memory_space<smem>>
    %609 = vector.broadcast %608 : f32 to vector<8x256xf32>
    %610 = arith.mulf %609, %607 : vector<8x256xf32>
    %611 = arith.addf %606, %610 : vector<8x256xf32>
    %c8_219 = arith.constant 8 : index
    %c179_220 = arith.constant 179 : index
    %612 = vector.load %arg5[%c8_219, %c179_220] : memref<16x435xf32, #tpu.memory_space<vmem>>, vector<8x256xf32>
    %c97_221 = arith.constant 97 : index
    %613 = memref.load %arg1[%c97_221] : memref<98xf32, #tpu.memory_space<smem>>
    %614 = vector.broadcast %613 : f32 to vector<8x256xf32>
    %615 = arith.mulf %614, %612 : vector<8x256xf32>
    %616 = arith.addf %611, %615 : vector<8x256xf32>
    %cst_222 = arith.constant 0.000000e+00 : f32
    %617 = vector.broadcast %cst_222 : f32 to vector<8x256xf32>
    %618 = arith.select %103, %616, %617 : vector<8x256xi1>, vector<8x256xf32>
    %619 = arith.addf %582, %618 : vector<8x256xf32>
    %620 = arith.addf %361, %619 : vector<8x256xf32>
    %c0_223 = arith.constant 0 : index
    %621 = memref.load %arg2[%c0_223] : memref<1xf32, #tpu.memory_space<smem>>
    %622 = vector.broadcast %621 : f32 to vector<8x256xf32>
    %623 = arith.addf %620, %622 : vector<8x256xf32>
    %624 = arith.negf %623 : vector<8x256xf32>
    %625 = math.exp %624 : vector<8x256xf32>
    %cst_224 = arith.constant 1.000000e+00 : f32
    %626 = vector.broadcast %cst_224 : f32 to vector<8x256xf32>
    %627 = arith.addf %626, %625 : vector<8x256xf32>
    %628 = arith.divf %626, %627 : vector<8x256xf32>
    %629 = vector.extract_strided_slice %628 {offsets = [0, 0], sizes = [1, 256], strides = [1, 1]} : vector<8x256xf32> to vector<1x256xf32>
    %630 = vector.shape_cast %629 : vector<1x256xf32> to vector<1x256xf32>
    %631 = vector.broadcast %630 : vector<1x256xf32> to vector<4x256xf32>
    %c0_225 = arith.constant 0 : index
    %c0_226 = arith.constant 0 : index
    %c0_227 = arith.constant 0 : index
    %632 = vector.load %arg3[%c0_225, %c0_226, %c0_227] : memref<2x4x256xf32, #tpu.memory_space<vmem>>, vector<1x4x256xf32>
    %633 = vector.shape_cast %632 : vector<1x4x256xf32> to vector<4x256xf32>
    %634 = arith.mulf %633, %631 : vector<4x256xf32>
    %c0_228 = arith.constant 0 : index
    %c0_229 = arith.constant 0 : index
    %c0_230 = arith.constant 0 : index
    %635 = vector.load %arg4[%c0_228, %c0_229, %c0_230] : memref<2x4x256xf32, #tpu.memory_space<vmem>>, vector<1x4x256xf32>
    %636 = vector.shape_cast %635 : vector<1x4x256xf32> to vector<4x256xf32>
    %637 = vector.shape_cast %634 : vector<4x256xf32> to vector<1x4x256xf32>
    tpu.vector_store %arg4[%c0_228, %c0_229, %c0_230], %637 {strides = array<i32>} : memref<2x4x256xf32, #tpu.memory_space<vmem>>, vector<1x4x256xf32>,
    %638 = vector.extract_strided_slice %628 {offsets = [1, 0], sizes = [1, 256], strides = [1, 1]} : vector<8x256xf32> to vector<1x256xf32>
    %639 = vector.shape_cast %638 : vector<1x256xf32> to vector<1x256xf32>
    %640 = vector.broadcast %639 : vector<1x256xf32> to vector<4x256xf32>
    %c1_231 = arith.constant 1 : index
    %c0_232 = arith.constant 0 : index
    %c0_233 = arith.constant 0 : index
    %641 = vector.load %arg3[%c1_231, %c0_232, %c0_233] : memref<2x4x256xf32, #tpu.memory_space<vmem>>, vector<1x4x256xf32>
    %642 = vector.shape_cast %641 : vector<1x4x256xf32> to vector<4x256xf32>
    %643 = arith.mulf %642, %640 : vector<4x256xf32>
    %c1_234 = arith.constant 1 : index
    %c0_235 = arith.constant 0 : index
    %c0_236 = arith.constant 0 : index
    %644 = vector.load %arg4[%c1_234, %c0_235, %c0_236] : memref<2x4x256xf32, #tpu.memory_space<vmem>>, vector<1x4x256xf32>
    %645 = vector.shape_cast %644 : vector<1x4x256xf32> to vector<4x256xf32>
    %646 = vector.shape_cast %643 : vector<4x256xf32> to vector<1x4x256xf32>
    tpu.vector_store %arg4[%c1_234, %c0_235, %c0_236], %646 {strides = array<i32>} : memref<2x4x256xf32, #tpu.memory_space<vmem>>, vector<1x4x256xf32>,
    return
  }
  func.func @transform_0(%arg0: i32) -> i32 {
    %c0_i32 = arith.constant 0 : i32
    %c0_i32_0 = arith.constant 0 : i32
    return %c0_i32 : i32
  }
  func.func @transform_1(%arg0: i32) -> i32 {
    %c0_i32 = arith.constant 0 : i32
    %c0_i32_0 = arith.constant 0 : i32
    return %c0_i32 : i32
  }
  func.func @transform_2(%arg0: i32) -> (i32, i32, i32) {
    %c0_i32 = arith.constant 0 : i32
    %c0_i32_0 = arith.constant 0 : i32
    %c0_i32_1 = arith.constant 0 : i32
    return %arg0, %c0_i32, %c0_i32_0 : i32, i32, i32
  }
  func.func @transform_3(%arg0: i32) -> (i32, i32, i32) {
    %c0_i32 = arith.constant 0 : i32
    %c0_i32_0 = arith.constant 0 : i32
    %c0_i32_1 = arith.constant 0 : i32
    return %arg0, %c0_i32, %c0_i32_0 : i32, i32, i32
  }
}

</mosaic_0001>

<llo_original>
// kernel: tpu_custom_call.1
$region0: #{tpu_custom_call.1}
  #allocation0 [shape = 'u32[]', space=smem, size = 0x4, offset = 0x4, fixed_abs, tag = 'smem constant byte address 0x4 - core index']
  #allocation1 [shape = 'u32[144,128]{1,0:T(1,128)}', space=vmem, size = 0x12000, scoped, tag = 'internal scratch']
  #allocation2 [shape = 'f32[16,435]{1,0:T(8,128)}', space=vmem, size = 0x8000, scoped, tag = 'scratch operand']
  #allocation3 [shape = 'f32[1]{0:T(128)S(6)}', space=smem, size = 0x200, scoped, tag = 'scoped memory for tpu_custom_call.1']
  %s0 = inlined_call_operand.vmem [shape: f32[98], index: 0, kind: input, shape index: {}]
  %s1 = inlined_call_operand.<no memory space> [shape: f32[1], index: 1, kind: input, shape index: {}]
  %s2 = inlined_call_operand.hbm [shape: f32[2,4,256], index: 2, kind: input, shape index: {}]
  %s3 = inlined_call_operand.hbm [shape: f32[2,4,256], index: 3, kind: output, shape index: {}]
  %s4 = sld [smem:[#allocation0]]
  $region30: #{tpu_custom_call.1} parent=0
    _
  %s6 = ssub.s32 1, %s4
  %s7 = scalar_select 0, %s6, %s4
  %8 = sst [smem:[#allocation3]] %s1
  $region1: #{tpu_custom_call.1} parent=0
    #allocation4 [shape = 'u8[512]{0}', space=smem, size = 0x200, scoped, tag = 'input window, operand 0, single buffered']
    #allocation5 [shape = 's32[1]{0}', space=sflag, size = 0x4, scoped, tag = 'scoped memory for tpu_custom_call.1']
    #allocation6 [shape = 's32[1]{0}', space=sflag, size = 0x4, scoped, tag = 'scoped memory for tpu_custom_call.1']
    #allocation7 [shape = 's32[1]{0}', space=sflag, size = 0x4, scoped, tag = 'scoped memory for tpu_custom_call.1']
    #allocation8 [shape = 'u8[8192]{0}', space=vmem, size = 0x2000, scoped, tag = 'input window, operand 2, single buffered']
    #allocation9 [shape = 'u8[8192]{0}', space=vmem, size = 0x2000, scoped, tag = 'output window, operand 0, single buffered']
    %9 = vsyncpa [#allocation7], 0
    %10 = vsyncpa [#allocation5], 0
    %11 = vsyncpa [#allocation6], 0
    // Predicated region
    $region2: #{tpu_custom_call.1} parent=1 // pred_check
      _
    $region3: #{tpu_custom_call.1} parent=1 // pred_check_branch
      %13 = sbr.rel (0) target = $region5
    $region4: #{tpu_custom_call.1} parent=1 // pred_region
      %s15 = ssub.s32 16, 16
      %16 = vsyncadd [#allocation7], %s15
      %s18 = sshll.u32 %s0, 4
      %s19 = int_to_ptr.vmem [resolvable:$true] %s18
      %21 = dma.vmem_to_smem %s19, 16, [#allocation4], [#allocation7]
    $region5: #{tpu_custom_call.1} parent=1 // pred_fallthru
      _
    // Predicated region
    $region6: #{tpu_custom_call.1} parent=1 // pred_check
      _
    $region7: #{tpu_custom_call.1} parent=1 // pred_check_branch
      %23 = sbr.rel (0) target = $region9
    $region8: #{tpu_custom_call.1} parent=1 // pred_region
      _
    $region9: #{tpu_custom_call.1} parent=1 // pred_fallthru
      _
    // Predicated region
    $region10: #{tpu_custom_call.1} parent=1 // pred_check
      _
    $region11: #{tpu_custom_call.1} parent=1 // pred_check_branch
      %25 = sbr.rel (0) target = $region13
    $region12: #{tpu_custom_call.1} parent=1 // pred_region
      %s27 = ssub.s32 256, 256
      %28 = vsyncadd [#allocation5], %s27
      %s29 = sshll.u32 [#allocation8], 4
      %s30 = int_to_ptr.vmem [resolvable:$true] %s29
      %35 = dma.hbm_to_vmem [thread:$0]  %s2, 256, %s30, [#allocation5], 128, 128, 8
    $region13: #{tpu_custom_call.1} parent=1 // pred_fallthru
      _
    // Predicated region
    $region14: #{tpu_custom_call.1} parent=1 // pred_check
      _
    $region15: #{tpu_custom_call.1} parent=1 // pred_check_branch
      %37 = sbr.rel (0) target = $region17
    $region16: #{tpu_custom_call.1} parent=1 // pred_region
      %38 = dma.done [#allocation7], 16
    $region17: #{tpu_custom_call.1} parent=1 // pred_fallthru
      _
    // Predicated region
    $region18: #{tpu_custom_call.1} parent=1 // pred_check
      _
    $region19: #{tpu_custom_call.1} parent=1 // pred_check_branch
      %40 = sbr.rel (0) target = $region21
    $region20: #{tpu_custom_call.1} parent=1 // pred_region
      %41 = dma.done [#allocation5], 256
    $region21: #{tpu_custom_call.1} parent=1 // pred_fallthru
      _
    %42 = sfence
    %43 = vst [vmem:[#allocation2] sm:$0xff] 0.0
    %44 = vst [vmem:[#allocation2 + $0x20] sm:$0xff] 0.0
    %vm45 = vcmask 416768
    %46 = vst.msk [vmem:[#allocation2 + $0x18] sm:$0xff] %vm45, 0.0
    %47 = vst.msk [vmem:[#allocation2 + $0x38] sm:$0xff] %vm45, 0.0
    %v48 = vld [vmem:[#allocation8] sm:$0xff]
    %v50 = vcombine.high %v48, %v48
    %vm52 = vcmask 1043456
    %v53 = vsel %vm52, %v48, -inf
    %v54 = vrot.slane %v53, 4
    %v55 = vmax.f32 %v53, %v54
    %v56 = vrot.slane %v55, 2
    %v57 = vmax.f32 %v55, %v56
    %v58 = vrot.slane %v57, 1
    %v59 = vmax.f32 %v57, %v58
    %v60 = vsel %vm52, %v50, -inf
    %v61 = vrot.slane %v60, 4
    %v62 = vmax.f32 %v60, %v61
    %v63 = vrot.slane %v62, 2
    %v64 = vmax.f32 %v62, %v63
    %v65 = vrot.slane %v64, 1
    %v66 = vmax.f32 %v64, %v65
    %v67 = vsel %vm52, %v48, 0.0
    %v68 = vrot.slane %v67, 4
    %v69 = vadd.f32 %v67, %v68
    %v70 = vrot.slane %v69, 2
    %v71 = vadd.f32 %v69, %v70
    %v72 = vrot.slane %v71, 1
    %v73 = vadd.f32 %v71, %v72
    %v74 = vsel %vm52, %v50, 0.0
    %v75 = vrot.slane %v74, 4
    %v76 = vadd.f32 %v74, %v75
    %v77 = vrot.slane %v76, 2
    %v78 = vadd.f32 %v76, %v77
    %v79 = vrot.slane %v78, 1
    %v80 = vadd.f32 %v78, %v79
    %v83 = vcombine.low %v59, %v66
    %v85 = vunpack.c.l.s4 1966171168
    %v86 = vunpack.c.0.s8 %v85
    %v87 = vlaneseq
    %v88 = vshrl.u32 %v87, 7
    %v89 = vsub.s32 %v86, %v88
    %v90 = vrot.slane %v83, %v89
    %v92 = vunpack.c.l.s4 1966171168
    %v93 = vunpack.c.0.s8 %v92
    %v94 = vlaneseq
    %v95 = vshrl.u32 %v94, 7
    %v96 = vsub.s32 %v93, %v95
    %v97 = vrot.slane %v90, %v96
    %v99 = vlaneseq
    %vm100 = vcmp.ge.s32.totalorder %v99, 0
    %vm101 = vcmp.lt.s32.totalorder %v99, 256
    %vm102 = vmand %vm100, %vm101
    %s103 = scalar_lea.vmem [#allocation2], 8
    %104 = vst.msk [vmem:[%s103] ss:$8 sm:$0x3] %vm102, %v97
    %105 = vst.msk [vmem:[%s103] ss:$8 sm:$0x0] %vm102, %v97
    %v106 = vmul.f32 %v73, 0.25
    %v107 = vmul.f32 %v80, 0.25
    %v110 = vcombine.low %v106, %v107
    %v112 = vunpack.c.l.s4 1966171168
    %v113 = vunpack.c.0.s8 %v112
    %v114 = vlaneseq
    %v115 = vshrl.u32 %v114, 7
    %v116 = vsub.s32 %v113, %v115
    %v117 = vrot.slane %v110, %v116
    %v119 = vunpack.c.l.s4 1966171168
    %v120 = vunpack.c.0.s8 %v119
    %v121 = vlaneseq
    %v122 = vshrl.u32 %v121, 7
    %v123 = vsub.s32 %v120, %v122
    %v124 = vrot.slane %v117, %v123
    %s126 = scalar_lea.vmem [#allocation2], 40
    %127 = vst.msk [vmem:[%s126] ss:$8 sm:$0x3] %vm102, %v124
    %128 = vst.msk [vmem:[%s126] ss:$8 sm:$0x0] %vm102, %v124
    %s129 = scalar_lea.vmem [#allocation8], 8
    %v130 = vld [vmem:[%s129] sm:$0xff]
    %v132 = vcombine.high %v130, %v130
    %v134 = vsel %vm52, %v130, -inf
    %v135 = vrot.slane %v134, 4
    %v136 = vmax.f32 %v134, %v135
    %v137 = vrot.slane %v136, 2
    %v138 = vmax.f32 %v136, %v137
    %v139 = vrot.slane %v138, 1
    %v140 = vmax.f32 %v138, %v139
    %v141 = vsel %vm52, %v132, -inf
    %v142 = vrot.slane %v141, 4
    %v143 = vmax.f32 %v141, %v142
    %v144 = vrot.slane %v143, 2
    %v145 = vmax.f32 %v143, %v144
    %v146 = vrot.slane %v145, 1
    %v147 = vmax.f32 %v145, %v146
    %v148 = vsel %vm52, %v130, 0.0
    %v149 = vrot.slane %v148, 4
    %v150 = vadd.f32 %v148, %v149
    %v151 = vrot.slane %v150, 2
    %v152 = vadd.f32 %v150, %v151
    %v153 = vrot.slane %v152, 1
    %v154 = vadd.f32 %v152, %v153
    %v155 = vsel %vm52, %v132, 0.0
    %v156 = vrot.slane %v155, 4
    %v157 = vadd.f32 %v155, %v156
    %v158 = vrot.slane %v157, 2
    %v159 = vadd.f32 %v157, %v158
    %v160 = vrot.slane %v159, 1
    %v161 = vadd.f32 %v159, %v160
    %v164 = vcombine.low %v140, %v147
    %v166 = vunpack.c.l.s4 1966171168
    %v167 = vunpack.c.0.s8 %v166
    %v168 = vlaneseq
    %v169 = vshrl.u32 %v168, 7
    %v170 = vsub.s32 %v167, %v169
    %v171 = vrot.slane %v164, %v170
    %v173 = vunpack.c.l.s4 1966171168
    %v174 = vunpack.c.0.s8 %v173
    %v175 = vlaneseq
    %v176 = vshrl.u32 %v175, 7
    %v177 = vsub.s32 %v174, %v176
    %v178 = vrot.slane %v171, %v177
    %s180 = scalar_lea.vmem [#allocation2], 9
    %181 = vst.msk [vmem:[%s180] ss:$8 sm:$0x3] %vm102, %v178
    %182 = vst.msk [vmem:[%s180] ss:$8 sm:$0x0] %vm102, %v178
    %v183 = vmul.f32 %v154, 0.25
    %v184 = vmul.f32 %v161, 0.25
    %v187 = vcombine.low %v183, %v184
    %v189 = vunpack.c.l.s4 1966171168
    %v190 = vunpack.c.0.s8 %v189
    %v191 = vlaneseq
    %v192 = vshrl.u32 %v191, 7
    %v193 = vsub.s32 %v190, %v192
    %v194 = vrot.slane %v187, %v193
    %v196 = vunpack.c.l.s4 1966171168
    %v197 = vunpack.c.0.s8 %v196
    %v198 = vlaneseq
    %v199 = vshrl.u32 %v198, 7
    %v200 = vsub.s32 %v197, %v199
    %v201 = vrot.slane %v194, %v200
    %s203 = scalar_lea.vmem [#allocation2], 41
    %204 = vst.msk [vmem:[%s203] ss:$8 sm:$0x3] %vm102, %v201
    %205 = vst.msk [vmem:[%s203] ss:$8 sm:$0x0] %vm102, %v201
    %v206 = vlaneseq
    %v207 = vand.u32 %v206, 127
    %v208 = vadd.s32 %v207, 128
    %vm209 = vcmp.lt.s32.totalorder %v207, 0
    %v210 = vsub.s32 0, %v207
    %v211 = vsel %vm209, %v210, %v207
    %v212 = vshrl.u32 %v211, 4
    %v213 = vand.u32 %v211, 15
    %v214 = vsub.s32 0, %v213
    %v215 = vsel %vm209, %v214, %v213
    %vm216 = vcmp.lt.s32.totalorder %v208, 0
    %v217 = vsub.s32 0, %v208
    %v218 = vsel %vm216, %v217, %v208
    %v219 = vshrl.u32 %v218, 4
    %v220 = vand.u32 %v218, 15
    %v221 = vsub.s32 0, %v220
    %v222 = vsel %vm216, %v221, %v220
    %vm223 = vcmp.ne.s32.totalorder %v215, 0
    %vm224 = vcmp.ne.s32.totalorder %v222, 0
    %vm225 = vcmp.lt.s32.totalorder %v215, 0
    %vm226 = vcmp.lt.s32.totalorder %v222, 0
    %vm227 = vmand %vm225, %vm223
    %vm228 = vmand %vm226, %vm224
    %v229 = vadd.s32 %v215, 16
    %v230 = vadd.s32 %v222, 16
    %v231 = vsel %vm227, %v229, %v215
    %v232 = vsel %vm228, %v230, %v222
    %v233 = vadd.s32 %v231, 4294967293
    %v234 = vadd.s32 %v232, 4294967293
    %vm235 = vcmp.ge.s32.totalorder %v233, 0
    %vm236 = vcmp.ge.s32.totalorder %v234, 0
    %vm237 = vcmp.lt.s32.totalorder %v233, 16
    %vm238 = vcmp.lt.s32.totalorder %v234, 16
    %vm239 = vmand %vm235, %vm237
    %vm240 = vmand %vm236, %vm238
    %v241 = vadd.s32 %v231, 4294967294
    %v242 = vadd.s32 %v232, 4294967294
    %vm243 = vcmp.ge.s32.totalorder %v241, 0
    %vm244 = vcmp.ge.s32.totalorder %v242, 0
    %vm245 = vcmp.lt.s32.totalorder %v241, 16
    %vm246 = vcmp.lt.s32.totalorder %v242, 16
    %vm247 = vmand %vm243, %vm245
    %vm248 = vmand %vm244, %vm246
    %v249 = vadd.s32 %v231, 4294967295
    %v250 = vadd.s32 %v232, 4294967295
    %vm251 = vcmp.ge.s32.totalorder %v249, 0
    %vm252 = vcmp.ge.s32.totalorder %v250, 0
    %vm253 = vcmp.lt.s32.totalorder %v249, 16
    %vm254 = vcmp.lt.s32.totalorder %v250, 16
    %vm255 = vmand %vm251, %vm253
    %vm256 = vmand %vm252, %vm254
    %vm257 = vcmp.ge.s32.totalorder %v231, 0
    %vm258 = vcmp.ge.s32.totalorder %v232, 0
    %vm259 = vcmp.lt.s32.totalorder %v231, 16
    %vm260 = vcmp.lt.s32.totalorder %v232, 16
    %vm261 = vmand %vm257, %vm259
    %vm262 = vmand %vm258, %vm260
    %v263 = vadd.s32 %v231, 1
    %v264 = vadd.s32 %v232, 1
    %vm265 = vcmp.ge.s32.totalorder %v263, 0
    %vm266 = vcmp.ge.s32.totalorder %v264, 0
    %vm267 = vcmp.lt.s32.totalorder %v263, 16
    %vm268 = vcmp.lt.s32.totalorder %v264, 16
    %vm269 = vmand %vm265, %vm267
    %vm270 = vmand %vm266, %vm268
    %v271 = vadd.s32 %v231, 2
    %v272 = vadd.s32 %v232, 2
    %vm273 = vcmp.ge.s32.totalorder %v271, 0
    %vm274 = vcmp.ge.s32.totalorder %v272, 0
    %vm275 = vcmp.lt.s32.totalorder %v271, 16
    %vm276 = vcmp.lt.s32.totalorder %v272, 16
    %vm277 = vmand %vm273, %vm275
    %vm278 = vmand %vm274, %vm276
    %v279 = vadd.s32 %v231, 3
    %v280 = vadd.s32 %v232, 3
    %vm281 = vcmp.ge.s32.totalorder %v279, 0
    %vm282 = vcmp.ge.s32.totalorder %v280, 0
    %vm283 = vcmp.lt.s32.totalorder %v279, 16
    %vm284 = vcmp.lt.s32.totalorder %v280, 16
    %vm285 = vmand %vm281, %vm283
    %vm286 = vmand %vm282, %vm284
    %v287 = vld [vmem:[#allocation2] sm:$0xff]
    %v288 = vld [vmem:[#allocation2 + $0x8] sm:$0xff]
    %v289 = vld [vmem:[#allocation2 + $0x10] sm:$0xff]
    %s290 = sld [smem:[#allocation4]]
    %v291 = vstv %s290
    %v292 = vmul.f32 %v291, %v287
    %v293 = vmul.f32 %v291, %v288
    %v294 = vmul.f32 %v291, %v289
    %s295 = sld [smem:[#allocation4 + $0x7]]
    %v296 = vstv %s295
    %v297 = vmul.f32 %v296, %v287
    %v298 = vmul.f32 %v296, %v288
    %v299 = vmul.f32 %v296, %v289
    %303 = vrot.lane.b32.xlu0 %v297, 112
    %v304 = vpop.permute.xlu0 %303
    %305 = vrot.lane.b32.xlu0 %v298, 112
    %v306 = vpop.permute.xlu0 %305
    %307 = vrot.lane.b32.xlu0 %v299, 112
    %v308 = vpop.permute.xlu0 %307
    %vm309 = vcmask 916480
    %v310 = vsel %vm309, %v304, %v306
    %v311 = vsel %vm309, %v306, %v308
    %v315 = vadd.f32 %v292, %v310
    %v316 = vadd.f32 %v293, %v311
    %v317 = vadd.f32 %v294, %v308
    %s318 = sld [smem:[#allocation4 + $0xe]]
    %v319 = vstv %s318
    %v320 = vmul.f32 %v319, %v287
    %v321 = vmul.f32 %v319, %v288
    %v322 = vmul.f32 %v319, %v289
    %326 = vrot.lane.b32.xlu0 %v320, 96
    %v327 = vpop.permute.xlu0 %326
    %328 = vrot.lane.b32.xlu0 %v321, 96
    %v329 = vpop.permute.xlu0 %328
    %330 = vrot.lane.b32.xlu0 %v322, 96
    %v331 = vpop.permute.xlu0 %330
    %vm332 = vcmask 785408
    %v333 = vsel %vm332, %v327, %v329
    %v334 = vsel %vm332, %v329, %v331
    %v338 = vadd.f32 %v315, %v333
    %v339 = vadd.f32 %v316, %v334
    %v340 = vadd.f32 %v317, %v331
    %s341 = sld [smem:[#allocation4 + $0x15]]
    %v342 = vstv %s341
    %v343 = vmul.f32 %v342, %v287
    %v344 = vmul.f32 %v342, %v288
    %v345 = vmul.f32 %v342, %v289
    %349 = vrot.lane.b32.xlu0 %v343, 80
    %v350 = vpop.permute.xlu0 %349
    %351 = vrot.lane.b32.xlu0 %v344, 80
    %v352 = vpop.permute.xlu0 %351
    %353 = vrot.lane.b32.xlu0 %v345, 80
    %v354 = vpop.permute.xlu0 %353
    %vm355 = vcmask 654336
    %v356 = vsel %vm355, %v350, %v352
    %v357 = vsel %vm355, %v352, %v354
    %v361 = vadd.f32 %v338, %v356
    %v362 = vadd.f32 %v339, %v357
    %v363 = vadd.f32 %v340, %v354
    %v364 = vld [vmem:[#allocation2 + $0x8] sm:$0xff]
    %v365 = vld [vmem:[#allocation2 + $0x10] sm:$0xff]
    %v366 = vld [vmem:[#allocation2 + $0x18] sm:$0xff]
    %s367 = sld [smem:[#allocation4 + $0x1c]]
    %v368 = vstv %s367
    %v369 = vmul.f32 %v368, %v364
    %v370 = vmul.f32 %v368, %v365
    %v371 = vmul.f32 %v368, %v366
    %375 = vrot.lane.b32.xlu0 %v369, 64
    %v376 = vpop.permute.xlu0 %375
    %377 = vrot.lane.b32.xlu0 %v370, 64
    %v378 = vpop.permute.xlu0 %377
    %379 = vrot.lane.b32.xlu0 %v371, 64
    %v380 = vpop.permute.xlu0 %379
    %vm381 = vcmask 523264
    %v382 = vsel %vm381, %v376, %v378
    %v383 = vsel %vm381, %v378, %v380
    %v387 = vadd.f32 %v361, %v376
    %v388 = vadd.f32 %v362, %v382
    %v389 = vadd.f32 %v363, %v383
    %s390 = sld [smem:[#allocation4 + $0x23]]
    %v391 = vstv %s390
    %v392 = vmul.f32 %v391, %v364
    %v393 = vmul.f32 %v391, %v365
    %v394 = vmul.f32 %v391, %v366
    %398 = vrot.lane.b32.xlu0 %v392, 48
    %v399 = vpop.permute.xlu0 %398
    %400 = vrot.lane.b32.xlu0 %v393, 48
    %v401 = vpop.permute.xlu0 %400
    %402 = vrot.lane.b32.xlu0 %v394, 48
    %v403 = vpop.permute.xlu0 %402
    %vm404 = vcmask 392192
    %v405 = vsel %vm404, %v399, %v401
    %v406 = vsel %vm404, %v401, %v403
    %v410 = vadd.f32 %v387, %v399
    %v411 = vadd.f32 %v388, %v405
    %v412 = vadd.f32 %v389, %v406
    %s413 = sld [smem:[#allocation4 + $0x2a]]
    %v414 = vstv %s413
    %v415 = vmul.f32 %v414, %v364
    %v416 = vmul.f32 %v414, %v365
    %v417 = vmul.f32 %v414, %v366
    %421 = vrot.lane.b32.xlu0 %v415, 32
    %v422 = vpop.permute.xlu0 %421
    %423 = vrot.lane.b32.xlu0 %v416, 32
    %v424 = vpop.permute.xlu0 %423
    %425 = vrot.lane.b32.xlu0 %v417, 32
    %v426 = vpop.permute.xlu0 %425
    %vm427 = vcmask 261120
    %v428 = vsel %vm427, %v422, %v424
    %v429 = vsel %vm427, %v424, %v426
    %v433 = vadd.f32 %v410, %v422
    %v434 = vadd.f32 %v411, %v428
    %v435 = vadd.f32 %v412, %v429
    %439 = vrot.lane.b32.xlu0 %v433, 51
    %v440 = vpop.permute.xlu0 %439
    %441 = vrot.lane.b32.xlu0 %v434, 51
    %v442 = vpop.permute.xlu0 %441
    %443 = vrot.lane.b32.xlu0 %v435, 51
    %v444 = vpop.permute.xlu0 %443
    %v445 = vsel %vm45, %v440, %v442
    %v446 = vsel %vm45, %v442, %v444
    %v449 = vsel %vm239, %v445, 0.0
    %v450 = vsel %vm240, %v446, 0.0
    %s451 = sld [smem:[#allocation4 + $0x1]]
    %v452 = vstv %s451
    %v453 = vmul.f32 %v452, %v287
    %v454 = vmul.f32 %v452, %v288
    %v455 = vmul.f32 %v452, %v289
    %s456 = sld [smem:[#allocation4 + $0x8]]
    %v457 = vstv %s456
    %v458 = vmul.f32 %v457, %v287
    %v459 = vmul.f32 %v457, %v288
    %v460 = vmul.f32 %v457, %v289
    %464 = vrot.lane.b32.xlu0 %v458, 112
    %v465 = vpop.permute.xlu0 %464
    %466 = vrot.lane.b32.xlu0 %v459, 112
    %v467 = vpop.permute.xlu0 %466
    %468 = vrot.lane.b32.xlu0 %v460, 112
    %v469 = vpop.permute.xlu0 %468
    %v470 = vsel %vm309, %v465, %v467
    %v471 = vsel %vm309, %v467, %v469
    %v475 = vadd.f32 %v453, %v470
    %v476 = vadd.f32 %v454, %v471
    %v477 = vadd.f32 %v455, %v469
    %s478 = sld [smem:[#allocation4 + $0xf]]
    %v479 = vstv %s478
    %v480 = vmul.f32 %v479, %v287
    %v481 = vmul.f32 %v479, %v288
    %v482 = vmul.f32 %v479, %v289
    %486 = vrot.lane.b32.xlu0 %v480, 96
    %v487 = vpop.permute.xlu0 %486
    %488 = vrot.lane.b32.xlu0 %v481, 96
    %v489 = vpop.permute.xlu0 %488
    %490 = vrot.lane.b32.xlu0 %v482, 96
    %v491 = vpop.permute.xlu0 %490
    %v492 = vsel %vm332, %v487, %v489
    %v493 = vsel %vm332, %v489, %v491
    %v497 = vadd.f32 %v475, %v492
    %v498 = vadd.f32 %v476, %v493
    %v499 = vadd.f32 %v477, %v491
    %s500 = sld [smem:[#allocation4 + $0x16]]
    %v501 = vstv %s500
    %v502 = vmul.f32 %v501, %v287
    %v503 = vmul.f32 %v501, %v288
    %v504 = vmul.f32 %v501, %v289
    %508 = vrot.lane.b32.xlu0 %v502, 80
    %v509 = vpop.permute.xlu0 %508
    %510 = vrot.lane.b32.xlu0 %v503, 80
    %v511 = vpop.permute.xlu0 %510
    %512 = vrot.lane.b32.xlu0 %v504, 80
    %v513 = vpop.permute.xlu0 %512
    %v514 = vsel %vm355, %v509, %v511
    %v515 = vsel %vm355, %v511, %v513
    %v519 = vadd.f32 %v497, %v514
    %v520 = vadd.f32 %v498, %v515
    %v521 = vadd.f32 %v499, %v513
    %s522 = sld [smem:[#allocation4 + $0x1d]]
    %v523 = vstv %s522
    %v524 = vmul.f32 %v523, %v364
    %v525 = vmul.f32 %v523, %v365
    %v526 = vmul.f32 %v523, %v366
    %530 = vrot.lane.b32.xlu0 %v524, 64
    %v531 = vpop.permute.xlu0 %530
    %532 = vrot.lane.b32.xlu0 %v525, 64
    %v533 = vpop.permute.xlu0 %532
    %534 = vrot.lane.b32.xlu0 %v526, 64
    %v535 = vpop.permute.xlu0 %534
    %v536 = vsel %vm381, %v531, %v533
    %v537 = vsel %vm381, %v533, %v535
    %v541 = vadd.f32 %v519, %v531
    %v542 = vadd.f32 %v520, %v536
    %v543 = vadd.f32 %v521, %v537
    %s544 = sld [smem:[#allocation4 + $0x24]]
    %v545 = vstv %s544
    %v546 = vmul.f32 %v545, %v364
    %v547 = vmul.f32 %v545, %v365
    %v548 = vmul.f32 %v545, %v366
    %552 = vrot.lane.b32.xlu0 %v546, 48
    %v553 = vpop.permute.xlu0 %552
    %554 = vrot.lane.b32.xlu0 %v547, 48
    %v555 = vpop.permute.xlu0 %554
    %556 = vrot.lane.b32.xlu0 %v548, 48
    %v557 = vpop.permute.xlu0 %556
    %v558 = vsel %vm404, %v553, %v555
    %v559 = vsel %vm404, %v555, %v557
    %v563 = vadd.f32 %v541, %v553
    %v564 = vadd.f32 %v542, %v558
    %v565 = vadd.f32 %v543, %v559
    %s566 = sld [smem:[#allocation4 + $0x2b]]
    %v567 = vstv %s566
    %v568 = vmul.f32 %v567, %v364
    %v569 = vmul.f32 %v567, %v365
    %v570 = vmul.f32 %v567, %v366
    %574 = vrot.lane.b32.xlu0 %v568, 32
    %v575 = vpop.permute.xlu0 %574
    %576 = vrot.lane.b32.xlu0 %v569, 32
    %v577 = vpop.permute.xlu0 %576
    %578 = vrot.lane.b32.xlu0 %v570, 32
    %v579 = vpop.permute.xlu0 %578
    %v580 = vsel %vm427, %v575, %v577
    %v581 = vsel %vm427, %v577, %v579
    %v585 = vadd.f32 %v563, %v575
    %v586 = vadd.f32 %v564, %v580
    %v587 = vadd.f32 %v565, %v581
    %591 = vrot.lane.b32.xlu0 %v585, 50
    %v592 = vpop.permute.xlu0 %591
    %593 = vrot.lane.b32.xlu0 %v586, 50
    %v594 = vpop.permute.xlu0 %593
    %595 = vrot.lane.b32.xlu0 %v587, 50
    %v596 = vpop.permute.xlu0 %595
    %vm597 = vcmask 408576
    %v598 = vsel %vm597, %v592, %v594
    %v599 = vsel %vm597, %v594, %v596
    %v602 = vsel %vm247, %v598, 0.0
    %v603 = vsel %vm248, %v599, 0.0
    %v604 = vadd.f32 %v449, %v602
    %v605 = vadd.f32 %v450, %v603
    %s606 = sld [smem:[#allocation4 + $0x2]]
    %v607 = vstv %s606
    %v608 = vmul.f32 %v607, %v287
    %v609 = vmul.f32 %v607, %v288
    %v610 = vmul.f32 %v607, %v289
    %s611 = sld [smem:[#allocation4 + $0x9]]
    %v612 = vstv %s611
    %v613 = vmul.f32 %v612, %v287
    %v614 = vmul.f32 %v612, %v288
    %v615 = vmul.f32 %v612, %v289
    %619 = vrot.lane.b32.xlu0 %v613, 112
    %v620 = vpop.permute.xlu0 %619
    %621 = vrot.lane.b32.xlu0 %v614, 112
    %v622 = vpop.permute.xlu0 %621
    %623 = vrot.lane.b32.xlu0 %v615, 112
    %v624 = vpop.permute.xlu0 %623
    %v625 = vsel %vm309, %v620, %v622
    %v626 = vsel %vm309, %v622, %v624
    %v630 = vadd.f32 %v608, %v625
    %v631 = vadd.f32 %v609, %v626
    %v632 = vadd.f32 %v610, %v624
    %s633 = sld [smem:[#allocation4 + $0x10]]
    %v634 = vstv %s633
    %v635 = vmul.f32 %v634, %v287
    %v636 = vmul.f32 %v634, %v288
    %v637 = vmul.f32 %v634, %v289
    %641 = vrot.lane.b32.xlu0 %v635, 96
    %v642 = vpop.permute.xlu0 %641
    %643 = vrot.lane.b32.xlu0 %v636, 96
    %v644 = vpop.permute.xlu0 %643
    %645 = vrot.lane.b32.xlu0 %v637, 96
    %v646 = vpop.permute.xlu0 %645
    %v647 = vsel %vm332, %v642, %v644
    %v648 = vsel %vm332, %v644, %v646
    %v652 = vadd.f32 %v630, %v647
    %v653 = vadd.f32 %v631, %v648
    %v654 = vadd.f32 %v632, %v646
    %s655 = sld [smem:[#allocation4 + $0x17]]
    %v656 = vstv %s655
    %v657 = vmul.f32 %v656, %v287
    %v658 = vmul.f32 %v656, %v288
    %v659 = vmul.f32 %v656, %v289
    %663 = vrot.lane.b32.xlu0 %v657, 80
    %v664 = vpop.permute.xlu0 %663
    %665 = vrot.lane.b32.xlu0 %v658, 80
    %v666 = vpop.permute.xlu0 %665
    %667 = vrot.lane.b32.xlu0 %v659, 80
    %v668 = vpop.permute.xlu0 %667
    %v669 = vsel %vm355, %v664, %v666
    %v670 = vsel %vm355, %v666, %v668
    %v674 = vadd.f32 %v652, %v669
    %v675 = vadd.f32 %v653, %v670
    %v676 = vadd.f32 %v654, %v668
    %s677 = sld [smem:[#allocation4 + $0x1e]]
    %v678 = vstv %s677
    %v679 = vmul.f32 %v678, %v364
    %v680 = vmul.f32 %v678, %v365
    %v681 = vmul.f32 %v678, %v366
    %685 = vrot.lane.b32.xlu0 %v679, 64
    %v686 = vpop.permute.xlu0 %685
    %687 = vrot.lane.b32.xlu0 %v680, 64
    %v688 = vpop.permute.xlu0 %687
    %689 = vrot.lane.b32.xlu0 %v681, 64
    %v690 = vpop.permute.xlu0 %689
    %v691 = vsel %vm381, %v686, %v688
    %v692 = vsel %vm381, %v688, %v690
    %v696 = vadd.f32 %v674, %v686
    %v697 = vadd.f32 %v675, %v691
    %v698 = vadd.f32 %v676, %v692
    %s699 = sld [smem:[#allocation4 + $0x25]]
    %v700 = vstv %s699
    %v701 = vmul.f32 %v700, %v364
    %v702 = vmul.f32 %v700, %v365
    %v703 = vmul.f32 %v700, %v366
    %707 = vrot.lane.b32.xlu0 %v701, 48
    %v708 = vpop.permute.xlu0 %707
    %709 = vrot.lane.b32.xlu0 %v702, 48
    %v710 = vpop.permute.xlu0 %709
    %711 = vrot.lane.b32.xlu0 %v703, 48
    %v712 = vpop.permute.xlu0 %711
    %v713 = vsel %vm404, %v708, %v710
    %v714 = vsel %vm404, %v710, %v712
    %v718 = vadd.f32 %v696, %v708
    %v719 = vadd.f32 %v697, %v713
    %v720 = vadd.f32 %v698, %v714
    %s721 = sld [smem:[#allocation4 + $0x2c]]
    %v722 = vstv %s721
    %v723 = vmul.f32 %v722, %v364
    %v724 = vmul.f32 %v722, %v365
    %v725 = vmul.f32 %v722, %v366
    %729 = vrot.lane.b32.xlu0 %v723, 32
    %v730 = vpop.permute.xlu0 %729
    %731 = vrot.lane.b32.xlu0 %v724, 32
    %v732 = vpop.permute.xlu0 %731
    %733 = vrot.lane.b32.xlu0 %v725, 32
    %v734 = vpop.permute.xlu0 %733
    %v735 = vsel %vm427, %v730, %v732
    %v736 = vsel %vm427, %v732, %v734
    %v740 = vadd.f32 %v718, %v730
    %v741 = vadd.f32 %v719, %v735
    %v742 = vadd.f32 %v720, %v736
    %746 = vrot.lane.b32.xlu0 %v740, 49
    %v747 = vpop.permute.xlu0 %746
    %748 = vrot.lane.b32.xlu0 %v741, 49
    %v749 = vpop.permute.xlu0 %748
    %750 = vrot.lane.b32.xlu0 %v742, 49
    %v751 = vpop.permute.xlu0 %750
    %vm752 = vcmask 400384
    %v753 = vsel %vm752, %v747, %v749
    %v754 = vsel %vm752, %v749, %v751
    %v757 = vsel %vm255, %v753, 0.0
    %v758 = vsel %vm256, %v754, 0.0
    %v759 = vadd.f32 %v604, %v757
    %v760 = vadd.f32 %v605, %v758
    %s761 = sld [smem:[#allocation4 + $0x3]]
    %v762 = vstv %s761
    %v763 = vmul.f32 %v762, %v287
    %v764 = vmul.f32 %v762, %v288
    %v765 = vmul.f32 %v762, %v289
    %s766 = sld [smem:[#allocation4 + $0xa]]
    %v767 = vstv %s766
    %v768 = vmul.f32 %v767, %v287
    %v769 = vmul.f32 %v767, %v288
    %v770 = vmul.f32 %v767, %v289
    %774 = vrot.lane.b32.xlu0 %v768, 112
    %v775 = vpop.permute.xlu0 %774
    %776 = vrot.lane.b32.xlu0 %v769, 112
    %v777 = vpop.permute.xlu0 %776
    %778 = vrot.lane.b32.xlu0 %v770, 112
    %v779 = vpop.permute.xlu0 %778
    %v780 = vsel %vm309, %v775, %v777
    %v781 = vsel %vm309, %v777, %v779
    %v785 = vadd.f32 %v763, %v780
    %v786 = vadd.f32 %v764, %v781
    %v787 = vadd.f32 %v765, %v779
    %s788 = sld [smem:[#allocation4 + $0x11]]
    %v789 = vstv %s788
    %v790 = vmul.f32 %v789, %v287
    %v791 = vmul.f32 %v789, %v288
    %v792 = vmul.f32 %v789, %v289
    %796 = vrot.lane.b32.xlu0 %v790, 96
    %v797 = vpop.permute.xlu0 %796
    %798 = vrot.lane.b32.xlu0 %v791, 96
    %v799 = vpop.permute.xlu0 %798
    %800 = vrot.lane.b32.xlu0 %v792, 96
    %v801 = vpop.permute.xlu0 %800
    %v802 = vsel %vm332, %v797, %v799
    %v803 = vsel %vm332, %v799, %v801
    %v807 = vadd.f32 %v785, %v802
    %v808 = vadd.f32 %v786, %v803
    %v809 = vadd.f32 %v787, %v801
    %s810 = sld [smem:[#allocation4 + $0x18]]
    %v811 = vstv %s810
    %v812 = vmul.f32 %v811, %v288
    %v813 = vmul.f32 %v811, %v289
    %816 = vrot.lane.b32.xlu0 %v812, 80
    %v817 = vpop.permute.xlu0 %816
    %818 = vrot.lane.b32.xlu0 %v813, 80
    %v819 = vpop.permute.xlu0 %818
    %v820 = vsel %vm355, %v817, %v819
    %v824 = vadd.f32 %v807, %v817
    %v825 = vadd.f32 %v808, %v820
    %v826 = vadd.f32 %v809, %v819
    %s827 = sld [smem:[#allocation4 + $0x1f]]
    %v828 = vstv %s827
    %v829 = vmul.f32 %v828, %v364
    %v830 = vmul.f32 %v828, %v365
    %v831 = vmul.f32 %v828, %v366
    %835 = vrot.lane.b32.xlu0 %v829, 64
    %v836 = vpop.permute.xlu0 %835
    %837 = vrot.lane.b32.xlu0 %v830, 64
    %v838 = vpop.permute.xlu0 %837
    %839 = vrot.lane.b32.xlu0 %v831, 64
    %v840 = vpop.permute.xlu0 %839
    %v841 = vsel %vm381, %v836, %v838
    %v842 = vsel %vm381, %v838, %v840
    %v846 = vadd.f32 %v824, %v836
    %v847 = vadd.f32 %v825, %v841
    %v848 = vadd.f32 %v826, %v842
    %s849 = sld [smem:[#allocation4 + $0x26]]
    %v850 = vstv %s849
    %v851 = vmul.f32 %v850, %v364
    %v852 = vmul.f32 %v850, %v365
    %v853 = vmul.f32 %v850, %v366
    %857 = vrot.lane.b32.xlu0 %v851, 48
    %v858 = vpop.permute.xlu0 %857
    %859 = vrot.lane.b32.xlu0 %v852, 48
    %v860 = vpop.permute.xlu0 %859
    %861 = vrot.lane.b32.xlu0 %v853, 48
    %v862 = vpop.permute.xlu0 %861
    %v863 = vsel %vm404, %v858, %v860
    %v864 = vsel %vm404, %v860, %v862
    %v868 = vadd.f32 %v846, %v858
    %v869 = vadd.f32 %v847, %v863
    %v870 = vadd.f32 %v848, %v864
    %s871 = sld [smem:[#allocation4 + $0x2d]]
    %v872 = vstv %s871
    %v873 = vmul.f32 %v872, %v364
    %v874 = vmul.f32 %v872, %v365
    %v875 = vmul.f32 %v872, %v366
    %879 = vrot.lane.b32.xlu0 %v873, 32
    %v880 = vpop.permute.xlu0 %879
    %881 = vrot.lane.b32.xlu0 %v874, 32
    %v882 = vpop.permute.xlu0 %881
    %883 = vrot.lane.b32.xlu0 %v875, 32
    %v884 = vpop.permute.xlu0 %883
    %v885 = vsel %vm427, %v880, %v882
    %v886 = vsel %vm427, %v882, %v884
    %v890 = vadd.f32 %v868, %v880
    %v891 = vadd.f32 %v869, %v885
    %v892 = vadd.f32 %v870, %v886
    %896 = vrot.lane.b32.xlu0 %v890, 48
    %v897 = vpop.permute.xlu0 %896
    %898 = vrot.lane.b32.xlu0 %v891, 48
    %v899 = vpop.permute.xlu0 %898
    %900 = vrot.lane.b32.xlu0 %v892, 48
    %v901 = vpop.permute.xlu0 %900
    %v902 = vsel %vm404, %v897, %v899
    %v903 = vsel %vm404, %v899, %v901
    %v906 = vsel %vm261, %v902, 0.0
    %v907 = vsel %vm262, %v903, 0.0
    %v908 = vadd.f32 %v759, %v906
    %v909 = vadd.f32 %v760, %v907
    %s910 = sld [smem:[#allocation4 + $0x4]]
    %v911 = vstv %s910
    %v912 = vmul.f32 %v911, %v287
    %v913 = vmul.f32 %v911, %v288
    %v914 = vmul.f32 %v911, %v289
    %s915 = sld [smem:[#allocation4 + $0xb]]
    %v916 = vstv %s915
    %v917 = vmul.f32 %v916, %v287
    %v918 = vmul.f32 %v916, %v288
    %v919 = vmul.f32 %v916, %v289
    %923 = vrot.lane.b32.xlu0 %v917, 112
    %v924 = vpop.permute.xlu0 %923
    %925 = vrot.lane.b32.xlu0 %v918, 112
    %v926 = vpop.permute.xlu0 %925
    %927 = vrot.lane.b32.xlu0 %v919, 112
    %v928 = vpop.permute.xlu0 %927
    %v929 = vsel %vm309, %v924, %v926
    %v930 = vsel %vm309, %v926, %v928
    %v934 = vadd.f32 %v912, %v929
    %v935 = vadd.f32 %v913, %v930
    %v936 = vadd.f32 %v914, %v928
    %s937 = sld [smem:[#allocation4 + $0x12]]
    %v938 = vstv %s937
    %v939 = vmul.f32 %v938, %v287
    %v940 = vmul.f32 %v938, %v288
    %v941 = vmul.f32 %v938, %v289
    %945 = vrot.lane.b32.xlu0 %v939, 96
    %v946 = vpop.permute.xlu0 %945
    %947 = vrot.lane.b32.xlu0 %v940, 96
    %v948 = vpop.permute.xlu0 %947
    %949 = vrot.lane.b32.xlu0 %v941, 96
    %v950 = vpop.permute.xlu0 %949
    %v951 = vsel %vm332, %v946, %v948
    %v952 = vsel %vm332, %v948, %v950
    %v956 = vadd.f32 %v934, %v951
    %v957 = vadd.f32 %v935, %v952
    %v958 = vadd.f32 %v936, %v950
    %s959 = sld [smem:[#allocation4 + $0x19]]
    %v960 = vstv %s959
    %v961 = vmul.f32 %v960, %v364
    %v962 = vmul.f32 %v960, %v365
    %v963 = vmul.f32 %v960, %v366
    %967 = vrot.lane.b32.xlu0 %v961, 80
    %v968 = vpop.permute.xlu0 %967
    %969 = vrot.lane.b32.xlu0 %v962, 80
    %v970 = vpop.permute.xlu0 %969
    %971 = vrot.lane.b32.xlu0 %v963, 80
    %v972 = vpop.permute.xlu0 %971
    %v973 = vsel %vm355, %v968, %v970
    %v974 = vsel %vm355, %v970, %v972
    %v978 = vadd.f32 %v956, %v968
    %v979 = vadd.f32 %v957, %v973
    %v980 = vadd.f32 %v958, %v974
    %s981 = sld [smem:[#allocation4 + $0x20]]
    %v982 = vstv %s981
    %v983 = vmul.f32 %v982, %v364
    %v984 = vmul.f32 %v982, %v365
    %v985 = vmul.f32 %v982, %v366
    %989 = vrot.lane.b32.xlu0 %v983, 64
    %v990 = vpop.permute.xlu0 %989
    %991 = vrot.lane.b32.xlu0 %v984, 64
    %v992 = vpop.permute.xlu0 %991
    %993 = vrot.lane.b32.xlu0 %v985, 64
    %v994 = vpop.permute.xlu0 %993
    %v995 = vsel %vm381, %v990, %v992
    %v996 = vsel %vm381, %v992, %v994
    %v1000 = vadd.f32 %v978, %v990
    %v1001 = vadd.f32 %v979, %v995
    %v1002 = vadd.f32 %v980, %v996
    %s1003 = sld [smem:[#allocation4 + $0x27]]
    %v1004 = vstv %s1003
    %v1005 = vmul.f32 %v1004, %v364
    %v1006 = vmul.f32 %v1004, %v365
    %v1007 = vmul.f32 %v1004, %v366
    %1011 = vrot.lane.b32.xlu0 %v1005, 48
    %v1012 = vpop.permute.xlu0 %1011
    %1013 = vrot.lane.b32.xlu0 %v1006, 48
    %v1014 = vpop.permute.xlu0 %1013
    %1015 = vrot.lane.b32.xlu0 %v1007, 48
    %v1016 = vpop.permute.xlu0 %1015
    %v1017 = vsel %vm404, %v1012, %v1014
    %v1018 = vsel %vm404, %v1014, %v1016
    %v1022 = vadd.f32 %v1000, %v1012
    %v1023 = vadd.f32 %v1001, %v1017
    %v1024 = vadd.f32 %v1002, %v1018
    %s1025 = sld [smem:[#allocation4 + $0x2e]]
    %v1026 = vstv %s1025
    %v1027 = vmul.f32 %v1026, %v364
    %v1028 = vmul.f32 %v1026, %v365
    %v1029 = vmul.f32 %v1026, %v366
    %1033 = vrot.lane.b32.xlu0 %v1027, 32
    %v1034 = vpop.permute.xlu0 %1033
    %1035 = vrot.lane.b32.xlu0 %v1028, 32
    %v1036 = vpop.permute.xlu0 %1035
    %1037 = vrot.lane.b32.xlu0 %v1029, 32
    %v1038 = vpop.permute.xlu0 %1037
    %v1039 = vsel %vm427, %v1034, %v1036
    %v1040 = vsel %vm427, %v1036, %v1038
    %v1044 = vadd.f32 %v1022, %v1034
    %v1045 = vadd.f32 %v1023, %v1039
    %v1046 = vadd.f32 %v1024, %v1040
    %1050 = vrot.lane.b32.xlu0 %v1044, 47
    %v1051 = vpop.permute.xlu0 %1050
    %1052 = vrot.lane.b32.xlu0 %v1045, 47
    %v1053 = vpop.permute.xlu0 %1052
    %1054 = vrot.lane.b32.xlu0 %v1046, 47
    %v1055 = vpop.permute.xlu0 %1054
    %vm1056 = vcmask 384000
    %v1057 = vsel %vm1056, %v1051, %v1053
    %v1058 = vsel %vm1056, %v1053, %v1055
    %v1061 = vsel %vm269, %v1057, 0.0
    %v1062 = vsel %vm270, %v1058, 0.0
    %v1063 = vadd.f32 %v908, %v1061
    %v1064 = vadd.f32 %v909, %v1062
    %s1065 = sld [smem:[#allocation4 + $0x5]]
    %v1066 = vstv %s1065
    %v1067 = vmul.f32 %v1066, %v287
    %v1068 = vmul.f32 %v1066, %v288
    %v1069 = vmul.f32 %v1066, %v289
    %s1070 = sld [smem:[#allocation4 + $0xc]]
    %v1071 = vstv %s1070
    %v1072 = vmul.f32 %v1071, %v287
    %v1073 = vmul.f32 %v1071, %v288
    %v1074 = vmul.f32 %v1071, %v289
    %1078 = vrot.lane.b32.xlu0 %v1072, 112
    %v1079 = vpop.permute.xlu0 %1078
    %1080 = vrot.lane.b32.xlu0 %v1073, 112
    %v1081 = vpop.permute.xlu0 %1080
    %1082 = vrot.lane.b32.xlu0 %v1074, 112
    %v1083 = vpop.permute.xlu0 %1082
    %v1084 = vsel %vm309, %v1079, %v1081
    %v1085 = vsel %vm309, %v1081, %v1083
    %v1089 = vadd.f32 %v1067, %v1084
    %v1090 = vadd.f32 %v1068, %v1085
    %v1091 = vadd.f32 %v1069, %v1083
    %s1092 = sld [smem:[#allocation4 + $0x13]]
    %v1093 = vstv %s1092
    %v1094 = vmul.f32 %v1093, %v287
    %v1095 = vmul.f32 %v1093, %v288
    %v1096 = vmul.f32 %v1093, %v289
    %1100 = vrot.lane.b32.xlu0 %v1094, 96
    %v1101 = vpop.permute.xlu0 %1100
    %1102 = vrot.lane.b32.xlu0 %v1095, 96
    %v1103 = vpop.permute.xlu0 %1102
    %1104 = vrot.lane.b32.xlu0 %v1096, 96
    %v1105 = vpop.permute.xlu0 %1104
    %v1106 = vsel %vm332, %v1101, %v1103
    %v1107 = vsel %vm332, %v1103, %v1105
    %v1111 = vadd.f32 %v1089, %v1106
    %v1112 = vadd.f32 %v1090, %v1107
    %v1113 = vadd.f32 %v1091, %v1105
    %s1114 = sld [smem:[#allocation4 + $0x1a]]
    %v1115 = vstv %s1114
    %v1116 = vmul.f32 %v1115, %v364
    %v1117 = vmul.f32 %v1115, %v365
    %v1118 = vmul.f32 %v1115, %v366
    %1122 = vrot.lane.b32.xlu0 %v1116, 80
    %v1123 = vpop.permute.xlu0 %1122
    %1124 = vrot.lane.b32.xlu0 %v1117, 80
    %v1125 = vpop.permute.xlu0 %1124
    %1126 = vrot.lane.b32.xlu0 %v1118, 80
    %v1127 = vpop.permute.xlu0 %1126
    %v1128 = vsel %vm355, %v1123, %v1125
    %v1129 = vsel %vm355, %v1125, %v1127
    %v1133 = vadd.f32 %v1111, %v1123
    %v1134 = vadd.f32 %v1112, %v1128
    %v1135 = vadd.f32 %v1113, %v1129
    %s1136 = sld [smem:[#allocation4 + $0x21]]
    %v1137 = vstv %s1136
    %v1138 = vmul.f32 %v1137, %v364
    %v1139 = vmul.f32 %v1137, %v365
    %v1140 = vmul.f32 %v1137, %v366
    %1144 = vrot.lane.b32.xlu0 %v1138, 64
    %v1145 = vpop.permute.xlu0 %1144
    %1146 = vrot.lane.b32.xlu0 %v1139, 64
    %v1147 = vpop.permute.xlu0 %1146
    %1148 = vrot.lane.b32.xlu0 %v1140, 64
    %v1149 = vpop.permute.xlu0 %1148
    %v1150 = vsel %vm381, %v1145, %v1147
    %v1151 = vsel %vm381, %v1147, %v1149
    %v1155 = vadd.f32 %v1133, %v1145
    %v1156 = vadd.f32 %v1134, %v1150
    %v1157 = vadd.f32 %v1135, %v1151
    %s1158 = sld [smem:[#allocation4 + $0x28]]
    %v1159 = vstv %s1158
    %v1160 = vmul.f32 %v1159, %v364
    %v1161 = vmul.f32 %v1159, %v365
    %v1162 = vmul.f32 %v1159, %v366
    %1166 = vrot.lane.b32.xlu0 %v1160, 48
    %v1167 = vpop.permute.xlu0 %1166
    %1168 = vrot.lane.b32.xlu0 %v1161, 48
    %v1169 = vpop.permute.xlu0 %1168
    %1170 = vrot.lane.b32.xlu0 %v1162, 48
    %v1171 = vpop.permute.xlu0 %1170
    %v1172 = vsel %vm404, %v1167, %v1169
    %v1173 = vsel %vm404, %v1169, %v1171
    %v1177 = vadd.f32 %v1155, %v1167
    %v1178 = vadd.f32 %v1156, %v1172
    %v1179 = vadd.f32 %v1157, %v1173
    %s1180 = sld [smem:[#allocation4 + $0x2f]]
    %v1181 = vstv %s1180
    %v1182 = vmul.f32 %v1181, %v364
    %v1183 = vmul.f32 %v1181, %v365
    %v1184 = vmul.f32 %v1181, %v366
    %1188 = vrot.lane.b32.xlu0 %v1182, 32
    %v1189 = vpop.permute.xlu0 %1188
    %1190 = vrot.lane.b32.xlu0 %v1183, 32
    %v1191 = vpop.permute.xlu0 %1190
    %1192 = vrot.lane.b32.xlu0 %v1184, 32
    %v1193 = vpop.permute.xlu0 %1192
    %v1194 = vsel %vm427, %v1189, %v1191
    %v1195 = vsel %vm427, %v1191, %v1193
    %v1199 = vadd.f32 %v1177, %v1189
    %v1200 = vadd.f32 %v1178, %v1194
    %v1201 = vadd.f32 %v1179, %v1195
    %1205 = vrot.lane.b32.xlu0 %v1199, 46
    %v1206 = vpop.permute.xlu0 %1205
    %1207 = vrot.lane.b32.xlu0 %v1200, 46
    %v1208 = vpop.permute.xlu0 %1207
    %1209 = vrot.lane.b32.xlu0 %v1201, 46
    %v1210 = vpop.permute.xlu0 %1209
    %vm1211 = vcmask 375808
    %v1212 = vsel %vm1211, %v1206, %v1208
    %v1213 = vsel %vm1211, %v1208, %v1210
    %v1216 = vsel %vm277, %v1212, 0.0
    %v1217 = vsel %vm278, %v1213, 0.0
    %v1218 = vadd.f32 %v1063, %v1216
    %v1219 = vadd.f32 %v1064, %v1217
    %s1220 = sld [smem:[#allocation4 + $0x6]]
    %v1221 = vstv %s1220
    %v1222 = vmul.f32 %v1221, %v287
    %v1223 = vmul.f32 %v1221, %v288
    %v1224 = vmul.f32 %v1221, %v289
    %s1225 = sld [smem:[#allocation4 + $0xd]]
    %v1226 = vstv %s1225
    %v1227 = vmul.f32 %v1226, %v287
    %v1228 = vmul.f32 %v1226, %v288
    %v1229 = vmul.f32 %v1226, %v289
    %1233 = vrot.lane.b32.xlu0 %v1227, 112
    %v1234 = vpop.permute.xlu0 %1233
    %1235 = vrot.lane.b32.xlu0 %v1228, 112
    %v1236 = vpop.permute.xlu0 %1235
    %1237 = vrot.lane.b32.xlu0 %v1229, 112
    %v1238 = vpop.permute.xlu0 %1237
    %v1239 = vsel %vm309, %v1234, %v1236
    %v1240 = vsel %vm309, %v1236, %v1238
    %v1244 = vadd.f32 %v1222, %v1239
    %v1245 = vadd.f32 %v1223, %v1240
    %v1246 = vadd.f32 %v1224, %v1238
    %s1247 = sld [smem:[#allocation4 + $0x14]]
    %v1248 = vstv %s1247
    %v1249 = vmul.f32 %v1248, %v287
    %v1250 = vmul.f32 %v1248, %v288
    %v1251 = vmul.f32 %v1248, %v289
    %1255 = vrot.lane.b32.xlu0 %v1249, 96
    %v1256 = vpop.permute.xlu0 %1255
    %1257 = vrot.lane.b32.xlu0 %v1250, 96
    %v1258 = vpop.permute.xlu0 %1257
    %1259 = vrot.lane.b32.xlu0 %v1251, 96
    %v1260 = vpop.permute.xlu0 %1259
    %v1261 = vsel %vm332, %v1256, %v1258
    %v1262 = vsel %vm332, %v1258, %v1260
    %v1266 = vadd.f32 %v1244, %v1261
    %v1267 = vadd.f32 %v1245, %v1262
    %v1268 = vadd.f32 %v1246, %v1260
    %s1269 = sld [smem:[#allocation4 + $0x1b]]
    %v1270 = vstv %s1269
    %v1271 = vmul.f32 %v1270, %v364
    %v1272 = vmul.f32 %v1270, %v365
    %v1273 = vmul.f32 %v1270, %v366
    %1277 = vrot.lane.b32.xlu0 %v1271, 80
    %v1278 = vpop.permute.xlu0 %1277
    %1279 = vrot.lane.b32.xlu0 %v1272, 80
    %v1280 = vpop.permute.xlu0 %1279
    %1281 = vrot.lane.b32.xlu0 %v1273, 80
    %v1282 = vpop.permute.xlu0 %1281
    %v1283 = vsel %vm355, %v1278, %v1280
    %v1284 = vsel %vm355, %v1280, %v1282
    %v1288 = vadd.f32 %v1266, %v1278
    %v1289 = vadd.f32 %v1267, %v1283
    %v1290 = vadd.f32 %v1268, %v1284
    %s1291 = sld [smem:[#allocation4 + $0x22]]
    %v1292 = vstv %s1291
    %v1293 = vmul.f32 %v1292, %v364
    %v1294 = vmul.f32 %v1292, %v365
    %v1295 = vmul.f32 %v1292, %v366
    %1299 = vrot.lane.b32.xlu0 %v1293, 64
    %v1300 = vpop.permute.xlu0 %1299
    %1301 = vrot.lane.b32.xlu0 %v1294, 64
    %v1302 = vpop.permute.xlu0 %1301
    %1303 = vrot.lane.b32.xlu0 %v1295, 64
    %v1304 = vpop.permute.xlu0 %1303
    %v1305 = vsel %vm381, %v1300, %v1302
    %v1306 = vsel %vm381, %v1302, %v1304
    %v1310 = vadd.f32 %v1288, %v1300
    %v1311 = vadd.f32 %v1289, %v1305
    %v1312 = vadd.f32 %v1290, %v1306
    %s1313 = sld [smem:[#allocation4 + $0x29]]
    %v1314 = vstv %s1313
    %v1315 = vmul.f32 %v1314, %v364
    %v1316 = vmul.f32 %v1314, %v365
    %v1317 = vmul.f32 %v1314, %v366
    %1321 = vrot.lane.b32.xlu0 %v1315, 48
    %v1322 = vpop.permute.xlu0 %1321
    %1323 = vrot.lane.b32.xlu0 %v1316, 48
    %v1324 = vpop.permute.xlu0 %1323
    %1325 = vrot.lane.b32.xlu0 %v1317, 48
    %v1326 = vpop.permute.xlu0 %1325
    %v1327 = vsel %vm404, %v1322, %v1324
    %v1328 = vsel %vm404, %v1324, %v1326
    %v1332 = vadd.f32 %v1310, %v1322
    %v1333 = vadd.f32 %v1311, %v1327
    %v1334 = vadd.f32 %v1312, %v1328
    %s1335 = sld [smem:[#allocation4 + $0x30]]
    %v1336 = vstv %s1335
    %v1337 = vmul.f32 %v1336, %v364
    %v1338 = vmul.f32 %v1336, %v365
    %v1339 = vmul.f32 %v1336, %v366
    %1343 = vrot.lane.b32.xlu0 %v1337, 32
    %v1344 = vpop.permute.xlu0 %1343
    %1345 = vrot.lane.b32.xlu0 %v1338, 32
    %v1346 = vpop.permute.xlu0 %1345
    %1347 = vrot.lane.b32.xlu0 %v1339, 32
    %v1348 = vpop.permute.xlu0 %1347
    %v1349 = vsel %vm427, %v1344, %v1346
    %v1350 = vsel %vm427, %v1346, %v1348
    %v1354 = vadd.f32 %v1332, %v1344
    %v1355 = vadd.f32 %v1333, %v1349
    %v1356 = vadd.f32 %v1334, %v1350
    %1360 = vrot.lane.b32.xlu0 %v1354, 45
    %v1361 = vpop.permute.xlu0 %1360
    %1362 = vrot.lane.b32.xlu0 %v1355, 45
    %v1363 = vpop.permute.xlu0 %1362
    %1364 = vrot.lane.b32.xlu0 %v1356, 45
    %v1365 = vpop.permute.xlu0 %1364
    %vm1366 = vcmask 367616
    %v1367 = vsel %vm1366, %v1361, %v1363
    %v1368 = vsel %vm1366, %v1363, %v1365
    %v1371 = vsel %vm285, %v1367, 0.0
    %v1372 = vsel %vm286, %v1368, 0.0
    %v1373 = vadd.f32 %v1218, %v1371
    %v1374 = vadd.f32 %v1219, %v1372
    %v1375 = vld [vmem:[#allocation2 + $0x20] sm:$0xff]
    %v1376 = vld [vmem:[#allocation2 + $0x28] sm:$0xff]
    %v1377 = vld [vmem:[#allocation2 + $0x30] sm:$0xff]
    %s1378 = sld [smem:[#allocation4 + $0x31]]
    %v1379 = vstv %s1378
    %v1380 = vmul.f32 %v1379, %v1375
    %v1381 = vmul.f32 %v1379, %v1376
    %v1382 = vmul.f32 %v1379, %v1377
    %s1383 = sld [smem:[#allocation4 + $0x38]]
    %v1384 = vstv %s1383
    %v1385 = vmul.f32 %v1384, %v1375
    %v1386 = vmul.f32 %v1384, %v1376
    %v1387 = vmul.f32 %v1384, %v1377
    %1391 = vrot.lane.b32.xlu0 %v1385, 112
    %v1392 = vpop.permute.xlu0 %1391
    %1393 = vrot.lane.b32.xlu0 %v1386, 112
    %v1394 = vpop.permute.xlu0 %1393
    %1395 = vrot.lane.b32.xlu0 %v1387, 112
    %v1396 = vpop.permute.xlu0 %1395
    %v1397 = vsel %vm309, %v1392, %v1394
    %v1398 = vsel %vm309, %v1394, %v1396
    %v1402 = vadd.f32 %v1380, %v1397
    %v1403 = vadd.f32 %v1381, %v1398
    %v1404 = vadd.f32 %v1382, %v1396
    %s1405 = sld [smem:[#allocation4 + $0x3f]]
    %v1406 = vstv %s1405
    %v1407 = vmul.f32 %v1406, %v1375
    %v1408 = vmul.f32 %v1406, %v1376
    %v1409 = vmul.f32 %v1406, %v1377
    %1413 = vrot.lane.b32.xlu0 %v1407, 96
    %v1414 = vpop.permute.xlu0 %1413
    %1415 = vrot.lane.b32.xlu0 %v1408, 96
    %v1416 = vpop.permute.xlu0 %1415
    %1417 = vrot.lane.b32.xlu0 %v1409, 96
    %v1418 = vpop.permute.xlu0 %1417
    %v1419 = vsel %vm332, %v1414, %v1416
    %v1420 = vsel %vm332, %v1416, %v1418
    %v1424 = vadd.f32 %v1402, %v1419
    %v1425 = vadd.f32 %v1403, %v1420
    %v1426 = vadd.f32 %v1404, %v1418
    %s1427 = sld [smem:[#allocation4 + $0x46]]
    %v1428 = vstv %s1427
    %v1429 = vmul.f32 %v1428, %v1375
    %v1430 = vmul.f32 %v1428, %v1376
    %v1431 = vmul.f32 %v1428, %v1377
    %1435 = vrot.lane.b32.xlu0 %v1429, 80
    %v1436 = vpop.permute.xlu0 %1435
    %1437 = vrot.lane.b32.xlu0 %v1430, 80
    %v1438 = vpop.permute.xlu0 %1437
    %1439 = vrot.lane.b32.xlu0 %v1431, 80
    %v1440 = vpop.permute.xlu0 %1439
    %v1441 = vsel %vm355, %v1436, %v1438
    %v1442 = vsel %vm355, %v1438, %v1440
    %v1446 = vadd.f32 %v1424, %v1441
    %v1447 = vadd.f32 %v1425, %v1442
    %v1448 = vadd.f32 %v1426, %v1440
    %v1449 = vld [vmem:[#allocation2 + $0x28] sm:$0xff]
    %v1450 = vld [vmem:[#allocation2 + $0x30] sm:$0xff]
    %v1451 = vld [vmem:[#allocation2 + $0x38] sm:$0xff]
    %s1452 = sld [smem:[#allocation4 + $0x4d]]
    %v1453 = vstv %s1452
    %v1454 = vmul.f32 %v1453, %v1449
    %v1455 = vmul.f32 %v1453, %v1450
    %v1456 = vmul.f32 %v1453, %v1451
    %1460 = vrot.lane.b32.xlu0 %v1454, 64
    %v1461 = vpop.permute.xlu0 %1460
    %1462 = vrot.lane.b32.xlu0 %v1455, 64
    %v1463 = vpop.permute.xlu0 %1462
    %1464 = vrot.lane.b32.xlu0 %v1456, 64
    %v1465 = vpop.permute.xlu0 %1464
    %v1466 = vsel %vm381, %v1461, %v1463
    %v1467 = vsel %vm381, %v1463, %v1465
    %v1471 = vadd.f32 %v1446, %v1461
    %v1472 = vadd.f32 %v1447, %v1466
    %v1473 = vadd.f32 %v1448, %v1467
    %s1474 = sld [smem:[#allocation4 + $0x54]]
    %v1475 = vstv %s1474
    %v1476 = vmul.f32 %v1475, %v1449
    %v1477 = vmul.f32 %v1475, %v1450
    %v1478 = vmul.f32 %v1475, %v1451
    %1482 = vrot.lane.b32.xlu0 %v1476, 48
    %v1483 = vpop.permute.xlu0 %1482
    %1484 = vrot.lane.b32.xlu0 %v1477, 48
    %v1485 = vpop.permute.xlu0 %1484
    %1486 = vrot.lane.b32.xlu0 %v1478, 48
    %v1487 = vpop.permute.xlu0 %1486
    %v1488 = vsel %vm404, %v1483, %v1485
    %v1489 = vsel %vm404, %v1485, %v1487
    %v1493 = vadd.f32 %v1471, %v1483
    %v1494 = vadd.f32 %v1472, %v1488
    %v1495 = vadd.f32 %v1473, %v1489
    %s1496 = sld [smem:[#allocation4 + $0x5b]]
    %v1497 = vstv %s1496
    %v1498 = vmul.f32 %v1497, %v1449
    %v1499 = vmul.f32 %v1497, %v1450
    %v1500 = vmul.f32 %v1497, %v1451
    %1504 = vrot.lane.b32.xlu0 %v1498, 32
    %v1505 = vpop.permute.xlu0 %1504
    %1506 = vrot.lane.b32.xlu0 %v1499, 32
    %v1507 = vpop.permute.xlu0 %1506
    %1508 = vrot.lane.b32.xlu0 %v1500, 32
    %v1509 = vpop.permute.xlu0 %1508
    %v1510 = vsel %vm427, %v1505, %v1507
    %v1511 = vsel %vm427, %v1507, %v1509
    %v1515 = vadd.f32 %v1493, %v1505
    %v1516 = vadd.f32 %v1494, %v1510
    %v1517 = vadd.f32 %v1495, %v1511
    %1521 = vrot.lane.b32.xlu0 %v1515, 51
    %v1522 = vpop.permute.xlu0 %1521
    %1523 = vrot.lane.b32.xlu0 %v1516, 51
    %v1524 = vpop.permute.xlu0 %1523
    %1525 = vrot.lane.b32.xlu0 %v1517, 51
    %v1526 = vpop.permute.xlu0 %1525
    %v1527 = vsel %vm45, %v1522, %v1524
    %v1528 = vsel %vm45, %v1524, %v1526
    %v1531 = vsel %vm239, %v1527, 0.0
    %v1532 = vsel %vm240, %v1528, 0.0
    %s1533 = sld [smem:[#allocation4 + $0x32]]
    %v1534 = vstv %s1533
    %v1535 = vmul.f32 %v1534, %v1375
    %v1536 = vmul.f32 %v1534, %v1376
    %v1537 = vmul.f32 %v1534, %v1377
    %s1538 = sld [smem:[#allocation4 + $0x39]]
    %v1539 = vstv %s1538
    %v1540 = vmul.f32 %v1539, %v1375
    %v1541 = vmul.f32 %v1539, %v1376
    %v1542 = vmul.f32 %v1539, %v1377
    %1546 = vrot.lane.b32.xlu0 %v1540, 112
    %v1547 = vpop.permute.xlu0 %1546
    %1548 = vrot.lane.b32.xlu0 %v1541, 112
    %v1549 = vpop.permute.xlu0 %1548
    %1550 = vrot.lane.b32.xlu0 %v1542, 112
    %v1551 = vpop.permute.xlu0 %1550
    %v1552 = vsel %vm309, %v1547, %v1549
    %v1553 = vsel %vm309, %v1549, %v1551
    %v1557 = vadd.f32 %v1535, %v1552
    %v1558 = vadd.f32 %v1536, %v1553
    %v1559 = vadd.f32 %v1537, %v1551
    %s1560 = sld [smem:[#allocation4 + $0x40]]
    %v1561 = vstv %s1560
    %v1562 = vmul.f32 %v1561, %v1375
    %v1563 = vmul.f32 %v1561, %v1376
    %v1564 = vmul.f32 %v1561, %v1377
    %1568 = vrot.lane.b32.xlu0 %v1562, 96
    %v1569 = vpop.permute.xlu0 %1568
    %1570 = vrot.lane.b32.xlu0 %v1563, 96
    %v1571 = vpop.permute.xlu0 %1570
    %1572 = vrot.lane.b32.xlu0 %v1564, 96
    %v1573 = vpop.permute.xlu0 %1572
    %v1574 = vsel %vm332, %v1569, %v1571
    %v1575 = vsel %vm332, %v1571, %v1573
    %v1579 = vadd.f32 %v1557, %v1574
    %v1580 = vadd.f32 %v1558, %v1575
    %v1581 = vadd.f32 %v1559, %v1573
    %s1582 = sld [smem:[#allocation4 + $0x47]]
    %v1583 = vstv %s1582
    %v1584 = vmul.f32 %v1583, %v1375
    %v1585 = vmul.f32 %v1583, %v1376
    %v1586 = vmul.f32 %v1583, %v1377
    %1590 = vrot.lane.b32.xlu0 %v1584, 80
    %v1591 = vpop.permute.xlu0 %1590
    %1592 = vrot.lane.b32.xlu0 %v1585, 80
    %v1593 = vpop.permute.xlu0 %1592
    %1594 = vrot.lane.b32.xlu0 %v1586, 80
    %v1595 = vpop.permute.xlu0 %1594
    %v1596 = vsel %vm355, %v1591, %v1593
    %v1597 = vsel %vm355, %v1593, %v1595
    %v1601 = vadd.f32 %v1579, %v1596
    %v1602 = vadd.f32 %v1580, %v1597
    %v1603 = vadd.f32 %v1581, %v1595
    %s1604 = sld [smem:[#allocation4 + $0x4e]]
    %v1605 = vstv %s1604
    %v1606 = vmul.f32 %v1605, %v1449
    %v1607 = vmul.f32 %v1605, %v1450
    %v1608 = vmul.f32 %v1605, %v1451
    %1612 = vrot.lane.b32.xlu0 %v1606, 64
    %v1613 = vpop.permute.xlu0 %1612
    %1614 = vrot.lane.b32.xlu0 %v1607, 64
    %v1615 = vpop.permute.xlu0 %1614
    %1616 = vrot.lane.b32.xlu0 %v1608, 64
    %v1617 = vpop.permute.xlu0 %1616
    %v1618 = vsel %vm381, %v1613, %v1615
    %v1619 = vsel %vm381, %v1615, %v1617
    %v1623 = vadd.f32 %v1601, %v1613
    %v1624 = vadd.f32 %v1602, %v1618
    %v1625 = vadd.f32 %v1603, %v1619
    %s1626 = sld [smem:[#allocation4 + $0x55]]
    %v1627 = vstv %s1626
    %v1628 = vmul.f32 %v1627, %v1449
    %v1629 = vmul.f32 %v1627, %v1450
    %v1630 = vmul.f32 %v1627, %v1451
    %1634 = vrot.lane.b32.xlu0 %v1628, 48
    %v1635 = vpop.permute.xlu0 %1634
    %1636 = vrot.lane.b32.xlu0 %v1629, 48
    %v1637 = vpop.permute.xlu0 %1636
    %1638 = vrot.lane.b32.xlu0 %v1630, 48
    %v1639 = vpop.permute.xlu0 %1638
    %v1640 = vsel %vm404, %v1635, %v1637
    %v1641 = vsel %vm404, %v1637, %v1639
    %v1645 = vadd.f32 %v1623, %v1635
    %v1646 = vadd.f32 %v1624, %v1640
    %v1647 = vadd.f32 %v1625, %v1641
    %s1648 = sld [smem:[#allocation4 + $0x5c]]
    %v1649 = vstv %s1648
    %v1650 = vmul.f32 %v1649, %v1449
    %v1651 = vmul.f32 %v1649, %v1450
    %v1652 = vmul.f32 %v1649, %v1451
    %1656 = vrot.lane.b32.xlu0 %v1650, 32
    %v1657 = vpop.permute.xlu0 %1656
    %1658 = vrot.lane.b32.xlu0 %v1651, 32
    %v1659 = vpop.permute.xlu0 %1658
    %1660 = vrot.lane.b32.xlu0 %v1652, 32
    %v1661 = vpop.permute.xlu0 %1660
    %v1662 = vsel %vm427, %v1657, %v1659
    %v1663 = vsel %vm427, %v1659, %v1661
    %v1667 = vadd.f32 %v1645, %v1657
    %v1668 = vadd.f32 %v1646, %v1662
    %v1669 = vadd.f32 %v1647, %v1663
    %1673 = vrot.lane.b32.xlu0 %v1667, 50
    %v1674 = vpop.permute.xlu0 %1673
    %1675 = vrot.lane.b32.xlu0 %v1668, 50
    %v1676 = vpop.permute.xlu0 %1675
    %1677 = vrot.lane.b32.xlu0 %v1669, 50
    %v1678 = vpop.permute.xlu0 %1677
    %v1679 = vsel %vm597, %v1674, %v1676
    %v1680 = vsel %vm597, %v1676, %v1678
    %v1683 = vsel %vm247, %v1679, 0.0
    %v1684 = vsel %vm248, %v1680, 0.0
    %v1685 = vadd.f32 %v1531, %v1683
    %v1686 = vadd.f32 %v1532, %v1684
    %s1687 = sld [smem:[#allocation4 + $0x33]]
    %v1688 = vstv %s1687
    %v1689 = vmul.f32 %v1688, %v1375
    %v1690 = vmul.f32 %v1688, %v1376
    %v1691 = vmul.f32 %v1688, %v1377
    %s1692 = sld [smem:[#allocation4 + $0x3a]]
    %v1693 = vstv %s1692
    %v1694 = vmul.f32 %v1693, %v1375
    %v1695 = vmul.f32 %v1693, %v1376
    %v1696 = vmul.f32 %v1693, %v1377
    %1700 = vrot.lane.b32.xlu0 %v1694, 112
    %v1701 = vpop.permute.xlu0 %1700
    %1702 = vrot.lane.b32.xlu0 %v1695, 112
    %v1703 = vpop.permute.xlu0 %1702
    %1704 = vrot.lane.b32.xlu0 %v1696, 112
    %v1705 = vpop.permute.xlu0 %1704
    %v1706 = vsel %vm309, %v1701, %v1703
    %v1707 = vsel %vm309, %v1703, %v1705
    %v1711 = vadd.f32 %v1689, %v1706
    %v1712 = vadd.f32 %v1690, %v1707
    %v1713 = vadd.f32 %v1691, %v1705
    %s1714 = sld [smem:[#allocation4 + $0x41]]
    %v1715 = vstv %s1714
    %v1716 = vmul.f32 %v1715, %v1375
    %v1717 = vmul.f32 %v1715, %v1376
    %v1718 = vmul.f32 %v1715, %v1377
    %1722 = vrot.lane.b32.xlu0 %v1716, 96
    %v1723 = vpop.permute.xlu0 %1722
    %1724 = vrot.lane.b32.xlu0 %v1717, 96
    %v1725 = vpop.permute.xlu0 %1724
    %1726 = vrot.lane.b32.xlu0 %v1718, 96
    %v1727 = vpop.permute.xlu0 %1726
    %v1728 = vsel %vm332, %v1723, %v1725
    %v1729 = vsel %vm332, %v1725, %v1727
    %v1733 = vadd.f32 %v1711, %v1728
    %v1734 = vadd.f32 %v1712, %v1729
    %v1735 = vadd.f32 %v1713, %v1727
    %s1736 = sld [smem:[#allocation4 + $0x48]]
    %v1737 = vstv %s1736
    %v1738 = vmul.f32 %v1737, %v1375
    %v1739 = vmul.f32 %v1737, %v1376
    %v1740 = vmul.f32 %v1737, %v1377
    %1744 = vrot.lane.b32.xlu0 %v1738, 80
    %v1745 = vpop.permute.xlu0 %1744
    %1746 = vrot.lane.b32.xlu0 %v1739, 80
    %v1747 = vpop.permute.xlu0 %1746
    %1748 = vrot.lane.b32.xlu0 %v1740, 80
    %v1749 = vpop.permute.xlu0 %1748
    %v1750 = vsel %vm355, %v1745, %v1747
    %v1751 = vsel %vm355, %v1747, %v1749
    %v1755 = vadd.f32 %v1733, %v1750
    %v1756 = vadd.f32 %v1734, %v1751
    %v1757 = vadd.f32 %v1735, %v1749
    %s1758 = sld [smem:[#allocation4 + $0x4f]]
    %v1759 = vstv %s1758
    %v1760 = vmul.f32 %v1759, %v1449
    %v1761 = vmul.f32 %v1759, %v1450
    %v1762 = vmul.f32 %v1759, %v1451
    %1766 = vrot.lane.b32.xlu0 %v1760, 64
    %v1767 = vpop.permute.xlu0 %1766
    %1768 = vrot.lane.b32.xlu0 %v1761, 64
    %v1769 = vpop.permute.xlu0 %1768
    %1770 = vrot.lane.b32.xlu0 %v1762, 64
    %v1771 = vpop.permute.xlu0 %1770
    %v1772 = vsel %vm381, %v1767, %v1769
    %v1773 = vsel %vm381, %v1769, %v1771
    %v1777 = vadd.f32 %v1755, %v1767
    %v1778 = vadd.f32 %v1756, %v1772
    %v1779 = vadd.f32 %v1757, %v1773
    %s1780 = sld [smem:[#allocation4 + $0x56]]
    %v1781 = vstv %s1780
    %v1782 = vmul.f32 %v1781, %v1449
    %v1783 = vmul.f32 %v1781, %v1450
    %v1784 = vmul.f32 %v1781, %v1451
    %1788 = vrot.lane.b32.xlu0 %v1782, 48
    %v1789 = vpop.permute.xlu0 %1788
    %1790 = vrot.lane.b32.xlu0 %v1783, 48
    %v1791 = vpop.permute.xlu0 %1790
    %1792 = vrot.lane.b32.xlu0 %v1784, 48
    %v1793 = vpop.permute.xlu0 %1792
    %v1794 = vsel %vm404, %v1789, %v1791
    %v1795 = vsel %vm404, %v1791, %v1793
    %v1799 = vadd.f32 %v1777, %v1789
    %v1800 = vadd.f32 %v1778, %v1794
    %v1801 = vadd.f32 %v1779, %v1795
    %s1802 = sld [smem:[#allocation4 + $0x5d]]
    %v1803 = vstv %s1802
    %v1804 = vmul.f32 %v1803, %v1449
    %v1805 = vmul.f32 %v1803, %v1450
    %v1806 = vmul.f32 %v1803, %v1451
    %1810 = vrot.lane.b32.xlu0 %v1804, 32
    %v1811 = vpop.permute.xlu0 %1810
    %1812 = vrot.lane.b32.xlu0 %v1805, 32
    %v1813 = vpop.permute.xlu0 %1812
    %1814 = vrot.lane.b32.xlu0 %v1806, 32
    %v1815 = vpop.permute.xlu0 %1814
    %v1816 = vsel %vm427, %v1811, %v1813
    %v1817 = vsel %vm427, %v1813, %v1815
    %v1821 = vadd.f32 %v1799, %v1811
    %v1822 = vadd.f32 %v1800, %v1816
    %v1823 = vadd.f32 %v1801, %v1817
    %1827 = vrot.lane.b32.xlu0 %v1821, 49
    %v1828 = vpop.permute.xlu0 %1827
    %1829 = vrot.lane.b32.xlu0 %v1822, 49
    %v1830 = vpop.permute.xlu0 %1829
    %1831 = vrot.lane.b32.xlu0 %v1823, 49
    %v1832 = vpop.permute.xlu0 %1831
    %v1833 = vsel %vm752, %v1828, %v1830
    %v1834 = vsel %vm752, %v1830, %v1832
    %v1837 = vsel %vm255, %v1833, 0.0
    %v1838 = vsel %vm256, %v1834, 0.0
    %v1839 = vadd.f32 %v1685, %v1837
    %v1840 = vadd.f32 %v1686, %v1838
    %s1841 = sld [smem:[#allocation4 + $0x34]]
    %v1842 = vstv %s1841
    %v1843 = vmul.f32 %v1842, %v1375
    %v1844 = vmul.f32 %v1842, %v1376
    %v1845 = vmul.f32 %v1842, %v1377
    %s1846 = sld [smem:[#allocation4 + $0x3b]]
    %v1847 = vstv %s1846
    %v1848 = vmul.f32 %v1847, %v1375
    %v1849 = vmul.f32 %v1847, %v1376
    %v1850 = vmul.f32 %v1847, %v1377
    %1854 = vrot.lane.b32.xlu0 %v1848, 112
    %v1855 = vpop.permute.xlu0 %1854
    %1856 = vrot.lane.b32.xlu0 %v1849, 112
    %v1857 = vpop.permute.xlu0 %1856
    %1858 = vrot.lane.b32.xlu0 %v1850, 112
    %v1859 = vpop.permute.xlu0 %1858
    %v1860 = vsel %vm309, %v1855, %v1857
    %v1861 = vsel %vm309, %v1857, %v1859
    %v1865 = vadd.f32 %v1843, %v1860
    %v1866 = vadd.f32 %v1844, %v1861
    %v1867 = vadd.f32 %v1845, %v1859
    %s1868 = sld [smem:[#allocation4 + $0x42]]
    %v1869 = vstv %s1868
    %v1870 = vmul.f32 %v1869, %v1375
    %v1871 = vmul.f32 %v1869, %v1376
    %v1872 = vmul.f32 %v1869, %v1377
    %1876 = vrot.lane.b32.xlu0 %v1870, 96
    %v1877 = vpop.permute.xlu0 %1876
    %1878 = vrot.lane.b32.xlu0 %v1871, 96
    %v1879 = vpop.permute.xlu0 %1878
    %1880 = vrot.lane.b32.xlu0 %v1872, 96
    %v1881 = vpop.permute.xlu0 %1880
    %v1882 = vsel %vm332, %v1877, %v1879
    %v1883 = vsel %vm332, %v1879, %v1881
    %v1887 = vadd.f32 %v1865, %v1882
    %v1888 = vadd.f32 %v1866, %v1883
    %v1889 = vadd.f32 %v1867, %v1881
    %s1890 = sld [smem:[#allocation4 + $0x49]]
    %v1891 = vstv %s1890
    %v1892 = vmul.f32 %v1891, %v1376
    %v1893 = vmul.f32 %v1891, %v1377
    %1896 = vrot.lane.b32.xlu0 %v1892, 80
    %v1897 = vpop.permute.xlu0 %1896
    %1898 = vrot.lane.b32.xlu0 %v1893, 80
    %v1899 = vpop.permute.xlu0 %1898
    %v1900 = vsel %vm355, %v1897, %v1899
    %v1904 = vadd.f32 %v1887, %v1897
    %v1905 = vadd.f32 %v1888, %v1900
    %v1906 = vadd.f32 %v1889, %v1899
    %s1907 = sld [smem:[#allocation4 + $0x50]]
    %v1908 = vstv %s1907
    %v1909 = vmul.f32 %v1908, %v1449
    %v1910 = vmul.f32 %v1908, %v1450
    %v1911 = vmul.f32 %v1908, %v1451
    %1915 = vrot.lane.b32.xlu0 %v1909, 64
    %v1916 = vpop.permute.xlu0 %1915
    %1917 = vrot.lane.b32.xlu0 %v1910, 64
    %v1918 = vpop.permute.xlu0 %1917
    %1919 = vrot.lane.b32.xlu0 %v1911, 64
    %v1920 = vpop.permute.xlu0 %1919
    %v1921 = vsel %vm381, %v1916, %v1918
    %v1922 = vsel %vm381, %v1918, %v1920
    %v1926 = vadd.f32 %v1904, %v1916
    %v1927 = vadd.f32 %v1905, %v1921
    %v1928 = vadd.f32 %v1906, %v1922
    %s1929 = sld [smem:[#allocation4 + $0x57]]
    %v1930 = vstv %s1929
    %v1931 = vmul.f32 %v1930, %v1449
    %v1932 = vmul.f32 %v1930, %v1450
    %v1933 = vmul.f32 %v1930, %v1451
    %1937 = vrot.lane.b32.xlu0 %v1931, 48
    %v1938 = vpop.permute.xlu0 %1937
    %1939 = vrot.lane.b32.xlu0 %v1932, 48
    %v1940 = vpop.permute.xlu0 %1939
    %1941 = vrot.lane.b32.xlu0 %v1933, 48
    %v1942 = vpop.permute.xlu0 %1941
    %v1943 = vsel %vm404, %v1938, %v1940
    %v1944 = vsel %vm404, %v1940, %v1942
    %v1948 = vadd.f32 %v1926, %v1938
    %v1949 = vadd.f32 %v1927, %v1943
    %v1950 = vadd.f32 %v1928, %v1944
    %s1951 = sld [smem:[#allocation4 + $0x5e]]
    %v1952 = vstv %s1951
    %v1953 = vmul.f32 %v1952, %v1449
    %v1954 = vmul.f32 %v1952, %v1450
    %v1955 = vmul.f32 %v1952, %v1451
    %1959 = vrot.lane.b32.xlu0 %v1953, 32
    %v1960 = vpop.permute.xlu0 %1959
    %1961 = vrot.lane.b32.xlu0 %v1954, 32
    %v1962 = vpop.permute.xlu0 %1961
    %1963 = vrot.lane.b32.xlu0 %v1955, 32
    %v1964 = vpop.permute.xlu0 %1963
    %v1965 = vsel %vm427, %v1960, %v1962
    %v1966 = vsel %vm427, %v1962, %v1964
    %v1970 = vadd.f32 %v1948, %v1960
    %v1971 = vadd.f32 %v1949, %v1965
    %v1972 = vadd.f32 %v1950, %v1966
    %1976 = vrot.lane.b32.xlu0 %v1970, 48
    %v1977 = vpop.permute.xlu0 %1976
    %1978 = vrot.lane.b32.xlu0 %v1971, 48
    %v1979 = vpop.permute.xlu0 %1978
    %1980 = vrot.lane.b32.xlu0 %v1972, 48
    %v1981 = vpop.permute.xlu0 %1980
    %v1982 = vsel %vm404, %v1977, %v1979
    %v1983 = vsel %vm404, %v1979, %v1981
    %v1986 = vsel %vm261, %v1982, 0.0
    %v1987 = vsel %vm262, %v1983, 0.0
    %v1988 = vadd.f32 %v1839, %v1986
    %v1989 = vadd.f32 %v1840, %v1987
    %s1990 = sld [smem:[#allocation4 + $0x35]]
    %v1991 = vstv %s1990
    %v1992 = vmul.f32 %v1991, %v1375
    %v1993 = vmul.f32 %v1991, %v1376
    %v1994 = vmul.f32 %v1991, %v1377
    %s1995 = sld [smem:[#allocation4 + $0x3c]]
    %v1996 = vstv %s1995
    %v1997 = vmul.f32 %v1996, %v1375
    %v1998 = vmul.f32 %v1996, %v1376
    %v1999 = vmul.f32 %v1996, %v1377
    %2003 = vrot.lane.b32.xlu0 %v1997, 112
    %v2004 = vpop.permute.xlu0 %2003
    %2005 = vrot.lane.b32.xlu0 %v1998, 112
    %v2006 = vpop.permute.xlu0 %2005
    %2007 = vrot.lane.b32.xlu0 %v1999, 112
    %v2008 = vpop.permute.xlu0 %2007
    %v2009 = vsel %vm309, %v2004, %v2006
    %v2010 = vsel %vm309, %v2006, %v2008
    %v2014 = vadd.f32 %v1992, %v2009
    %v2015 = vadd.f32 %v1993, %v2010
    %v2016 = vadd.f32 %v1994, %v2008
    %s2017 = sld [smem:[#allocation4 + $0x43]]
    %v2018 = vstv %s2017
    %v2019 = vmul.f32 %v2018, %v1375
    %v2020 = vmul.f32 %v2018, %v1376
    %v2021 = vmul.f32 %v2018, %v1377
    %2025 = vrot.lane.b32.xlu0 %v2019, 96
    %v2026 = vpop.permute.xlu0 %2025
    %2027 = vrot.lane.b32.xlu0 %v2020, 96
    %v2028 = vpop.permute.xlu0 %2027
    %2029 = vrot.lane.b32.xlu0 %v2021, 96
    %v2030 = vpop.permute.xlu0 %2029
    %v2031 = vsel %vm332, %v2026, %v2028
    %v2032 = vsel %vm332, %v2028, %v2030
    %v2036 = vadd.f32 %v2014, %v2031
    %v2037 = vadd.f32 %v2015, %v2032
    %v2038 = vadd.f32 %v2016, %v2030
    %s2039 = sld [smem:[#allocation4 + $0x4a]]
    %v2040 = vstv %s2039
    %v2041 = vmul.f32 %v2040, %v1449
    %v2042 = vmul.f32 %v2040, %v1450
    %v2043 = vmul.f32 %v2040, %v1451
    %2047 = vrot.lane.b32.xlu0 %v2041, 80
    %v2048 = vpop.permute.xlu0 %2047
    %2049 = vrot.lane.b32.xlu0 %v2042, 80
    %v2050 = vpop.permute.xlu0 %2049
    %2051 = vrot.lane.b32.xlu0 %v2043, 80
    %v2052 = vpop.permute.xlu0 %2051
    %v2053 = vsel %vm355, %v2048, %v2050
    %v2054 = vsel %vm355, %v2050, %v2052
    %v2058 = vadd.f32 %v2036, %v2048
    %v2059 = vadd.f32 %v2037, %v2053
    %v2060 = vadd.f32 %v2038, %v2054
    %s2061 = sld [smem:[#allocation4 + $0x51]]
    %v2062 = vstv %s2061
    %v2063 = vmul.f32 %v2062, %v1449
    %v2064 = vmul.f32 %v2062, %v1450
    %v2065 = vmul.f32 %v2062, %v1451
    %2069 = vrot.lane.b32.xlu0 %v2063, 64
    %v2070 = vpop.permute.xlu0 %2069
    %2071 = vrot.lane.b32.xlu0 %v2064, 64
    %v2072 = vpop.permute.xlu0 %2071
    %2073 = vrot.lane.b32.xlu0 %v2065, 64
    %v2074 = vpop.permute.xlu0 %2073
    %v2075 = vsel %vm381, %v2070, %v2072
    %v2076 = vsel %vm381, %v2072, %v2074
    %v2080 = vadd.f32 %v2058, %v2070
    %v2081 = vadd.f32 %v2059, %v2075
    %v2082 = vadd.f32 %v2060, %v2076
    %s2083 = sld [smem:[#allocation4 + $0x58]]
    %v2084 = vstv %s2083
    %v2085 = vmul.f32 %v2084, %v1449
    %v2086 = vmul.f32 %v2084, %v1450
    %v2087 = vmul.f32 %v2084, %v1451
    %2091 = vrot.lane.b32.xlu0 %v2085, 48
    %v2092 = vpop.permute.xlu0 %2091
    %2093 = vrot.lane.b32.xlu0 %v2086, 48
    %v2094 = vpop.permute.xlu0 %2093
    %2095 = vrot.lane.b32.xlu0 %v2087, 48
    %v2096 = vpop.permute.xlu0 %2095
    %v2097 = vsel %vm404, %v2092, %v2094
    %v2098 = vsel %vm404, %v2094, %v2096
    %v2102 = vadd.f32 %v2080, %v2092
    %v2103 = vadd.f32 %v2081, %v2097
    %v2104 = vadd.f32 %v2082, %v2098
    %s2105 = sld [smem:[#allocation4 + $0x5f]]
    %v2106 = vstv %s2105
    %v2107 = vmul.f32 %v2106, %v1449
    %v2108 = vmul.f32 %v2106, %v1450
    %v2109 = vmul.f32 %v2106, %v1451
    %2113 = vrot.lane.b32.xlu0 %v2107, 32
    %v2114 = vpop.permute.xlu0 %2113
    %2115 = vrot.lane.b32.xlu0 %v2108, 32
    %v2116 = vpop.permute.xlu0 %2115
    %2117 = vrot.lane.b32.xlu0 %v2109, 32
    %v2118 = vpop.permute.xlu0 %2117
    %v2119 = vsel %vm427, %v2114, %v2116
    %v2120 = vsel %vm427, %v2116, %v2118
    %v2124 = vadd.f32 %v2102, %v2114
    %v2125 = vadd.f32 %v2103, %v2119
    %v2126 = vadd.f32 %v2104, %v2120
    %2130 = vrot.lane.b32.xlu0 %v2124, 47
    %v2131 = vpop.permute.xlu0 %2130
    %2132 = vrot.lane.b32.xlu0 %v2125, 47
    %v2133 = vpop.permute.xlu0 %2132
    %2134 = vrot.lane.b32.xlu0 %v2126, 47
    %v2135 = vpop.permute.xlu0 %2134
    %v2136 = vsel %vm1056, %v2131, %v2133
    %v2137 = vsel %vm1056, %v2133, %v2135
    %v2140 = vsel %vm269, %v2136, 0.0
    %v2141 = vsel %vm270, %v2137, 0.0
    %v2142 = vadd.f32 %v1988, %v2140
    %v2143 = vadd.f32 %v1989, %v2141
    %s2144 = sld [smem:[#allocation4 + $0x36]]
    %v2145 = vstv %s2144
    %v2146 = vmul.f32 %v2145, %v1375
    %v2147 = vmul.f32 %v2145, %v1376
    %v2148 = vmul.f32 %v2145, %v1377
    %s2149 = sld [smem:[#allocation4 + $0x3d]]
    %v2150 = vstv %s2149
    %v2151 = vmul.f32 %v2150, %v1375
    %v2152 = vmul.f32 %v2150, %v1376
    %v2153 = vmul.f32 %v2150, %v1377
    %2157 = vrot.lane.b32.xlu0 %v2151, 112
    %v2158 = vpop.permute.xlu0 %2157
    %2159 = vrot.lane.b32.xlu0 %v2152, 112
    %v2160 = vpop.permute.xlu0 %2159
    %2161 = vrot.lane.b32.xlu0 %v2153, 112
    %v2162 = vpop.permute.xlu0 %2161
    %v2163 = vsel %vm309, %v2158, %v2160
    %v2164 = vsel %vm309, %v2160, %v2162
    %v2168 = vadd.f32 %v2146, %v2163
    %v2169 = vadd.f32 %v2147, %v2164
    %v2170 = vadd.f32 %v2148, %v2162
    %s2171 = sld [smem:[#allocation4 + $0x44]]
    %v2172 = vstv %s2171
    %v2173 = vmul.f32 %v2172, %v1375
    %v2174 = vmul.f32 %v2172, %v1376
    %v2175 = vmul.f32 %v2172, %v1377
    %2179 = vrot.lane.b32.xlu0 %v2173, 96
    %v2180 = vpop.permute.xlu0 %2179
    %2181 = vrot.lane.b32.xlu0 %v2174, 96
    %v2182 = vpop.permute.xlu0 %2181
    %2183 = vrot.lane.b32.xlu0 %v2175, 96
    %v2184 = vpop.permute.xlu0 %2183
    %v2185 = vsel %vm332, %v2180, %v2182
    %v2186 = vsel %vm332, %v2182, %v2184
    %v2190 = vadd.f32 %v2168, %v2185
    %v2191 = vadd.f32 %v2169, %v2186
    %v2192 = vadd.f32 %v2170, %v2184
    %s2193 = sld [smem:[#allocation4 + $0x4b]]
    %v2194 = vstv %s2193
    %v2195 = vmul.f32 %v2194, %v1449
    %v2196 = vmul.f32 %v2194, %v1450
    %v2197 = vmul.f32 %v2194, %v1451
    %2201 = vrot.lane.b32.xlu0 %v2195, 80
    %v2202 = vpop.permute.xlu0 %2201
    %2203 = vrot.lane.b32.xlu0 %v2196, 80
    %v2204 = vpop.permute.xlu0 %2203
    %2205 = vrot.lane.b32.xlu0 %v2197, 80
    %v2206 = vpop.permute.xlu0 %2205
    %v2207 = vsel %vm355, %v2202, %v2204
    %v2208 = vsel %vm355, %v2204, %v2206
    %v2212 = vadd.f32 %v2190, %v2202
    %v2213 = vadd.f32 %v2191, %v2207
    %v2214 = vadd.f32 %v2192, %v2208
    %s2215 = sld [smem:[#allocation4 + $0x52]]
    %v2216 = vstv %s2215
    %v2217 = vmul.f32 %v2216, %v1449
    %v2218 = vmul.f32 %v2216, %v1450
    %v2219 = vmul.f32 %v2216, %v1451
    %2223 = vrot.lane.b32.xlu0 %v2217, 64
    %v2224 = vpop.permute.xlu0 %2223
    %2225 = vrot.lane.b32.xlu0 %v2218, 64
    %v2226 = vpop.permute.xlu0 %2225
    %2227 = vrot.lane.b32.xlu0 %v2219, 64
    %v2228 = vpop.permute.xlu0 %2227
    %v2229 = vsel %vm381, %v2224, %v2226
    %v2230 = vsel %vm381, %v2226, %v2228
    %v2234 = vadd.f32 %v2212, %v2224
    %v2235 = vadd.f32 %v2213, %v2229
    %v2236 = vadd.f32 %v2214, %v2230
    %s2237 = sld [smem:[#allocation4 + $0x59]]
    %v2238 = vstv %s2237
    %v2239 = vmul.f32 %v2238, %v1449
    %v2240 = vmul.f32 %v2238, %v1450
    %v2241 = vmul.f32 %v2238, %v1451
    %2245 = vrot.lane.b32.xlu0 %v2239, 48
    %v2246 = vpop.permute.xlu0 %2245
    %2247 = vrot.lane.b32.xlu0 %v2240, 48
    %v2248 = vpop.permute.xlu0 %2247
    %2249 = vrot.lane.b32.xlu0 %v2241, 48
    %v2250 = vpop.permute.xlu0 %2249
    %v2251 = vsel %vm404, %v2246, %v2248
    %v2252 = vsel %vm404, %v2248, %v2250
    %v2256 = vadd.f32 %v2234, %v2246
    %v2257 = vadd.f32 %v2235, %v2251
    %v2258 = vadd.f32 %v2236, %v2252
    %s2259 = sld [smem:[#allocation4 + $0x60]]
    %v2260 = vstv %s2259
    %v2261 = vmul.f32 %v2260, %v1449
    %v2262 = vmul.f32 %v2260, %v1450
    %v2263 = vmul.f32 %v2260, %v1451
    %2267 = vrot.lane.b32.xlu0 %v2261, 32
    %v2268 = vpop.permute.xlu0 %2267
    %2269 = vrot.lane.b32.xlu0 %v2262, 32
    %v2270 = vpop.permute.xlu0 %2269
    %2271 = vrot.lane.b32.xlu0 %v2263, 32
    %v2272 = vpop.permute.xlu0 %2271
    %v2273 = vsel %vm427, %v2268, %v2270
    %v2274 = vsel %vm427, %v2270, %v2272
    %v2278 = vadd.f32 %v2256, %v2268
    %v2279 = vadd.f32 %v2257, %v2273
    %v2280 = vadd.f32 %v2258, %v2274
    %2284 = vrot.lane.b32.xlu0 %v2278, 46
    %v2285 = vpop.permute.xlu0 %2284
    %2286 = vrot.lane.b32.xlu0 %v2279, 46
    %v2287 = vpop.permute.xlu0 %2286
    %2288 = vrot.lane.b32.xlu0 %v2280, 46
    %v2289 = vpop.permute.xlu0 %2288
    %v2290 = vsel %vm1211, %v2285, %v2287
    %v2291 = vsel %vm1211, %v2287, %v2289
    %v2294 = vsel %vm277, %v2290, 0.0
    %v2295 = vsel %vm278, %v2291, 0.0
    %v2296 = vadd.f32 %v2142, %v2294
    %v2297 = vadd.f32 %v2143, %v2295
    %s2298 = sld [smem:[#allocation4 + $0x37]]
    %v2299 = vstv %s2298
    %v2300 = vmul.f32 %v2299, %v1375
    %v2301 = vmul.f32 %v2299, %v1376
    %v2302 = vmul.f32 %v2299, %v1377
    %s2303 = sld [smem:[#allocation4 + $0x3e]]
    %v2304 = vstv %s2303
    %v2305 = vmul.f32 %v2304, %v1375
    %v2306 = vmul.f32 %v2304, %v1376
    %v2307 = vmul.f32 %v2304, %v1377
    %2311 = vrot.lane.b32.xlu0 %v2305, 112
    %v2312 = vpop.permute.xlu0 %2311
    %2313 = vrot.lane.b32.xlu0 %v2306, 112
    %v2314 = vpop.permute.xlu0 %2313
    %2315 = vrot.lane.b32.xlu0 %v2307, 112
    %v2316 = vpop.permute.xlu0 %2315
    %v2317 = vsel %vm309, %v2312, %v2314
    %v2318 = vsel %vm309, %v2314, %v2316
    %v2322 = vadd.f32 %v2300, %v2317
    %v2323 = vadd.f32 %v2301, %v2318
    %v2324 = vadd.f32 %v2302, %v2316
    %s2325 = sld [smem:[#allocation4 + $0x45]]
    %v2326 = vstv %s2325
    %v2327 = vmul.f32 %v2326, %v1375
    %v2328 = vmul.f32 %v2326, %v1376
    %v2329 = vmul.f32 %v2326, %v1377
    %2333 = vrot.lane.b32.xlu0 %v2327, 96
    %v2334 = vpop.permute.xlu0 %2333
    %2335 = vrot.lane.b32.xlu0 %v2328, 96
    %v2336 = vpop.permute.xlu0 %2335
    %2337 = vrot.lane.b32.xlu0 %v2329, 96
    %v2338 = vpop.permute.xlu0 %2337
    %v2339 = vsel %vm332, %v2334, %v2336
    %v2340 = vsel %vm332, %v2336, %v2338
    %v2344 = vadd.f32 %v2322, %v2339
    %v2345 = vadd.f32 %v2323, %v2340
    %v2346 = vadd.f32 %v2324, %v2338
    %s2347 = sld [smem:[#allocation4 + $0x4c]]
    %v2348 = vstv %s2347
    %v2349 = vmul.f32 %v2348, %v1449
    %v2350 = vmul.f32 %v2348, %v1450
    %v2351 = vmul.f32 %v2348, %v1451
    %2355 = vrot.lane.b32.xlu0 %v2349, 80
    %v2356 = vpop.permute.xlu0 %2355
    %2357 = vrot.lane.b32.xlu0 %v2350, 80
    %v2358 = vpop.permute.xlu0 %2357
    %2359 = vrot.lane.b32.xlu0 %v2351, 80
    %v2360 = vpop.permute.xlu0 %2359
    %v2361 = vsel %vm355, %v2356, %v2358
    %v2362 = vsel %vm355, %v2358, %v2360
    %v2366 = vadd.f32 %v2344, %v2356
    %v2367 = vadd.f32 %v2345, %v2361
    %v2368 = vadd.f32 %v2346, %v2362
    %s2369 = sld [smem:[#allocation4 + $0x53]]
    %v2370 = vstv %s2369
    %v2371 = vmul.f32 %v2370, %v1449
    %v2372 = vmul.f32 %v2370, %v1450
    %v2373 = vmul.f32 %v2370, %v1451
    %2377 = vrot.lane.b32.xlu0 %v2371, 64
    %v2378 = vpop.permute.xlu0 %2377
    %2379 = vrot.lane.b32.xlu0 %v2372, 64
    %v2380 = vpop.permute.xlu0 %2379
    %2381 = vrot.lane.b32.xlu0 %v2373, 64
    %v2382 = vpop.permute.xlu0 %2381
    %v2383 = vsel %vm381, %v2378, %v2380
    %v2384 = vsel %vm381, %v2380, %v2382
    %v2388 = vadd.f32 %v2366, %v2378
    %v2389 = vadd.f32 %v2367, %v2383
    %v2390 = vadd.f32 %v2368, %v2384
    %s2391 = sld [smem:[#allocation4 + $0x5a]]
    %v2392 = vstv %s2391
    %v2393 = vmul.f32 %v2392, %v1449
    %v2394 = vmul.f32 %v2392, %v1450
    %v2395 = vmul.f32 %v2392, %v1451
    %2399 = vrot.lane.b32.xlu0 %v2393, 48
    %v2400 = vpop.permute.xlu0 %2399
    %2401 = vrot.lane.b32.xlu0 %v2394, 48
    %v2402 = vpop.permute.xlu0 %2401
    %2403 = vrot.lane.b32.xlu0 %v2395, 48
    %v2404 = vpop.permute.xlu0 %2403
    %v2405 = vsel %vm404, %v2400, %v2402
    %v2406 = vsel %vm404, %v2402, %v2404
    %v2410 = vadd.f32 %v2388, %v2400
    %v2411 = vadd.f32 %v2389, %v2405
    %v2412 = vadd.f32 %v2390, %v2406
    %s2413 = sld [smem:[#allocation4 + $0x61]]
    %v2414 = vstv %s2413
    %v2415 = vmul.f32 %v2414, %v1449
    %v2416 = vmul.f32 %v2414, %v1450
    %v2417 = vmul.f32 %v2414, %v1451
    %2421 = vrot.lane.b32.xlu0 %v2415, 32
    %v2422 = vpop.permute.xlu0 %2421
    %2423 = vrot.lane.b32.xlu0 %v2416, 32
    %v2424 = vpop.permute.xlu0 %2423
    %2425 = vrot.lane.b32.xlu0 %v2417, 32
    %v2426 = vpop.permute.xlu0 %2425
    %v2427 = vsel %vm427, %v2422, %v2424
    %v2428 = vsel %vm427, %v2424, %v2426
    %v2432 = vadd.f32 %v2410, %v2422
    %v2433 = vadd.f32 %v2411, %v2427
    %v2434 = vadd.f32 %v2412, %v2428
    %2438 = vrot.lane.b32.xlu0 %v2432, 45
    %v2439 = vpop.permute.xlu0 %2438
    %2440 = vrot.lane.b32.xlu0 %v2433, 45
    %v2441 = vpop.permute.xlu0 %2440
    %2442 = vrot.lane.b32.xlu0 %v2434, 45
    %v2443 = vpop.permute.xlu0 %2442
    %v2444 = vsel %vm1366, %v2439, %v2441
    %v2445 = vsel %vm1366, %v2441, %v2443
    %v2448 = vsel %vm285, %v2444, 0.0
    %v2449 = vsel %vm286, %v2445, 0.0
    %v2450 = vadd.f32 %v2296, %v2448
    %v2451 = vadd.f32 %v2297, %v2449
    %v2452 = vadd.f32 %v1373, %v2450
    %v2453 = vadd.f32 %v1374, %v2451
    %s2454 = sld [smem:[#allocation3]]
    %v2455 = vstv %s2454
    %v2456 = vadd.f32 %v2452, %v2455
    %v2457 = vadd.f32 %v2453, %v2455
    %v2458 = vxor.u32 %v2456, 2147483648
    %v2459 = vxor.u32 %v2457, 2147483648
    %v2460 = vmul.f32 %v2458, 1.442695
    %v2461 = vpow.pop %v2460
    %v2462 = vmul.f32 %v2459, 1.442695
    %v2463 = vpow.pop %v2462
    %v2464 = vadd.f32 %v2461, 1.0
    %v2465 = vadd.f32 %v2463, 1.0
    %v2466 = vrcp.pop %v2464
    %v2467 = vmul.f32 1.0, %v2466
    %v2468 = vrcp.pop %v2465
    %v2469 = vmul.f32 1.0, %v2468
    %v2470 = vlaneseq
    %v2471 = vshrl.u32 %v2470, 7
    %v2472 = vsub.s32 0, %v2471
    %v2473 = vrot.slane %v2467, %v2472
    %v2474 = vlaneseq
    %v2475 = vshrl.u32 %v2474, 7
    %v2476 = vsub.s32 0, %v2475
    %v2477 = vrot.slane %v2469, %v2476
    %v2478 = vld [vmem:[#allocation8] sm:$0xff]
    %v2481 = vcombine.low %v2473, %v2477
    %v2483 = vmul.f32 %v2478, %v2481
    %2484 = vst [vmem:[#allocation9] sm:$0xff] %v2483
    %v2485 = vlaneseq
    %v2486 = vshrl.u32 %v2485, 7
    %v2487 = vsub.s32 1, %v2486
    %v2488 = vrot.slane %v2467, %v2487
    %v2489 = vlaneseq
    %v2490 = vshrl.u32 %v2489, 7
    %v2491 = vsub.s32 1, %v2490
    %v2492 = vrot.slane %v2469, %v2491
    %v2493 = vld [vmem:[%s129] sm:$0xff]
    %v2496 = vcombine.low %v2488, %v2492
    %v2498 = vmul.f32 %v2493, %v2496
    %s2499 = scalar_lea.vmem [#allocation9], 8
    %2500 = vst [vmem:[%s2499] sm:$0xff] %v2498
    // Predicated region
    $region22: #{tpu_custom_call.1} parent=1 // pred_check
      _
    $region23: #{tpu_custom_call.1} parent=1 // pred_check_branch
      %2502 = sbr.rel (0) target = $region25
    $region24: #{tpu_custom_call.1} parent=1 // pred_region
      %s2504 = ssub.s32 256, 256
      %2505 = vsyncadd [#allocation6], %s2504
      %s2506 = sshll.u32 [#allocation9], 4
      %s2507 = int_to_ptr.vmem [resolvable:$true] %s2506
      %2512 = dma.vmem_to_hbm [thread:$0]  %s2507, 256, %s3, [#allocation6], 128, 128, 8
    $region25: #{tpu_custom_call.1} parent=1 // pred_fallthru
      _
    // Predicated region
    $region26: #{tpu_custom_call.1} parent=1 // pred_check
      _
    $region27: #{tpu_custom_call.1} parent=1 // pred_check_branch
      %2514 = sbr.rel (0) target = $region29
    $region28: #{tpu_custom_call.1} parent=1 // pred_region
      %2515 = dma.done [#allocation6], 256
    $region29: #{tpu_custom_call.1} parent=1 // pred_fallthru
      _
    %2516 = vsyncpa [#allocation5], 1
    %2517 = vsyncpa [#allocation6], 1
    %2518 = vsyncpa [#allocation7], 1

</llo_original>
